<compile_context>
chip_gen: v7x
topology: tpu7x:2x2x1
jax: 0.10.0
libtpu: 0.0.40
codegen_flags: <defaults>
</compile_context>

<pallas_src>
import functools

import numpy as np
import jax
import jax.numpy as jnp
from jax import lax
from jax.experimental import pallas as pl
from jax.experimental.pallas import tpu as pltpu

# ----------------------------- configuration -------------------------------
HIDDEN = 32
NUM_HEADS = 4
NUM_LAYERS = 2
SEQ = 8
BATCH = 6
VOCAB_TOKEN = 16
VOCAB_ENT = 8
VOCAB_REL = 8
VOCAB = VOCAB_TOKEN + VOCAB_ENT + VOCAB_REL   # token + ent + rel
TYPE_VOCAB = 2
LN_EPS = 1e-12

_VMEM = pl.BlockSpec(memory_space=pltpu.MemorySpace.VMEM)


# ------------------------------ kernel helpers ------------------------------
def _layer_norm(x, g, b):
    mu = jnp.mean(x, axis=-1, keepdims=True)
    var = jnp.mean((x - mu) ** 2, axis=-1, keepdims=True)
    return (x - mu) * lax.rsqrt(var + LN_EPS) * g + b


def _gelu(x):
    # TODO(synk): BERT uses the erf-based GELU; tanh approximation used here
    # for a Mosaic-friendly EUP lowering (small systematic difference).
    return 0.5 * x * (1.0 + jnp.tanh(0.7978845608028654 * (x + 0.044715 * x * x * x)))


def _bf16(x):
    # MXU operands in bf16, accumulation stays f32 via preferred_element_type.
    return x.astype(jnp.bfloat16)


# ------------------------------- fused kernel -------------------------------
def _kgbert_triplecls_kernel(
        d32_ref,      # (BS + NH*BS + 2, H) f32 : emb | head-expansion mask | emb-LN g | b
        d48_ref,      # (NH*BS + 3*BP, BS) f32 : tiled attn mask | sel one-hots | labels
        wenc_ref,     # (L, H, 8H)  bf16 : [Wq*scale | Wk | Wv | Wo | Wi] per layer
        wo2_ref,      # (L, 4H, H)  bf16 : FFN output weight per layer
        pvec_ref,     # (L, 8, 4H)  f32  : bqkv / bo / ln1 g,b / bi / bo2 / ln2 g,b
        whead_ref,    # (H+1, 4)    f32  : [W[:H] | W[H:]] stacked on lanes, bias in row H
        out_ref,      # (1, 2)      f32  : [loss, acc]
        *, num_layers, num_heads, batch, seq, bp):
    H = wenc_ref.shape[1]
    BS = batch * seq
    HB = num_heads * BS

    # ---- unpack the data slabs (all sublane-aligned slices) ----
    emb = d32_ref[0:BS, :]                       # (BS, H)
    emask = d32_ref[BS:BS + HB, :]               # (HB, H) 0/1 head-expansion mask
    ln_g = d32_ref[BS + HB:BS + HB + 1, :]       # (1, H)
    ln_b = d32_ref[BS + HB + 1:BS + HB + 2, :]   # (1, H)

    mask_t = d48_ref[0:HB, :]                    # (HB, BS) additive mask, head-tiled
    sel = d48_ref[HB:HB + 2 * bp, :]             # (2*BP, BS) cls/task one-hot rows
    lab = d48_ref[HB + 2 * bp:HB + 3 * bp, 0:1]  # (BP, 1) labels, -1 padding

    x = _layer_norm(emb, ln_g, ln_b)             # (BS, H) f32

    for l in range(num_layers):                  # static unroll (L=2)
        wl = wenc_ref[l]                         # (H, 8H) bf16
        w_qkv = wl[:, 0:3 * H]
        w_o = wl[:, 3 * H:4 * H]
        w_i = wl[:, 4 * H:8 * H]
        w_o2 = wo2_ref[l]                        # (4H, H) bf16
        pv = pvec_ref[l]                         # (8, 4H) f32
        b_qkv = pv[0:1, 0:3 * H]
        b_o = pv[1:2, 0:H]
        g1 = pv[2:3, 0:H]
        b1 = pv[3:4, 0:H]
        b_i = pv[4:5, 0:4 * H]
        b_o2 = pv[5:6, 0:H]
        g2 = pv[6:7, 0:H]
        b2 = pv[7:8, 0:H]

        # ---- fused Q/K/V projection (1/sqrt(hd) folded into the Q part) ----
        qkv = jnp.dot(_bf16(x), w_qkv, preferred_element_type=jnp.float32) + b_qkv
        q = qkv[:, 0:H]
        k = qkv[:, H:2 * H]
        v = qkv[:, 2 * H:3 * H]

        # ---- all-head scores with ONE matmul: heads stacked on sublanes ----
        # Row block h of q_bd keeps only head h's lanes, so q_bd @ k^T gives
        # Q_h @ K_h^T in row block h.  Softmax is a plain last-axis reduce.
        q_bd = jnp.concatenate([q] * num_heads, axis=0) * emask        # (HB, H)
        s = lax.dot_general(_bf16(q_bd), _bf16(k), (((1,), (1,)), ((), ())),
                            preferred_element_type=jnp.float32) + mask_t
        s = s - jnp.max(s, axis=-1, keepdims=True)
        p = jnp.exp(s)
        p = p * pl.reciprocal(jnp.sum(p, axis=-1, keepdims=True), approx=True)

        # ---- all-head context with ONE matmul; block-diag extract is VPU ----
        ctx_s = jnp.dot(_bf16(p), _bf16(v), preferred_element_type=jnp.float32)
        ctx_s = ctx_s * emask                    # keep only P_h @ V_h per block
        ctx = ctx_s[0:BS, :]
        for h in range(1, num_heads):
            ctx = ctx + ctx_s[h * BS:(h + 1) * BS, :]                  # (BS, H)

        attn = jnp.dot(_bf16(ctx), w_o, preferred_element_type=jnp.float32) + b_o
        x = _layer_norm(x + attn, g1, b1)

        # ---- feed forward ----
        mid = _gelu(jnp.dot(_bf16(x), w_i, preferred_element_type=jnp.float32) + b_i)
        ffn = jnp.dot(_bf16(mid), w_o2, preferred_element_type=jnp.float32) + b_o2
        x = _layer_norm(x + ffn, g2, b2)

    # ---- triplecls head: 2 matmuls total (f32 for parity on the gather) ----
    pooled = jnp.dot(sel, x, preferred_element_type=jnp.float32)       # (2*BP, H)
    wst = whead_ref[0:H, :]                                            # (H, 4)
    tb = whead_ref[H:H + 1, 0:2]                                       # (1, 2)
    lg4 = jnp.dot(pooled, wst, preferred_element_type=jnp.float32)     # (2*BP, 4)
    # concat([cls, task]) @ W == cls @ W[:H] + task @ W[H:]
    logits = lg4[0:bp, 0:2] + lg4[bp:2 * bp, 2:4] + tb                 # (BP, 2)

    m = jnp.max(logits, axis=-1, keepdims=True)
    lse = m + jnp.log(jnp.sum(jnp.exp(logits - m), axis=-1, keepdims=True))
    logp = logits - lse                                                # log-softmax

    # ---- NLL over label==1 / label==0 subsets + accuracy ----
    lab_f = lab                                  # (BP,1); padding rows are -1
    pos = (lab_f == 1.0).astype(jnp.float32)
    neg = (lab_f == 0.0).astype(jnp.float32)
    picked = jnp.where(lab_f == 1.0, logp[:, 1:2], logp[:, 0:1])       # log p[label]
    # TODO(synk): an empty pos/neg subset yields nan in PyTorch; guarded with max(n, 1).
    n_pos = jnp.maximum(jnp.sum(pos, keepdims=True), 1.0)
    n_neg = jnp.maximum(jnp.sum(neg, keepdims=True), 1.0)
    loss = 0.5 * (-(jnp.sum(picked * pos, keepdims=True) / n_pos)
                  - (jnp.sum(picked * neg, keepdims=True) / n_neg))    # (1,1)

    pred = jnp.where(logp[:, 1:2] > logp[:, 0:1], 1.0, 0.0)            # argmax over 2
    correct = (pred == lab_f).astype(jnp.float32)                      # padding never matches
    acc = jnp.sum(correct, keepdims=True) * (1.0 / float(batch))       # (1,1)

    out_ref[0:1, 0:1] = loss
    out_ref[0:1, 1:2] = acc


# ------------------------------ parameter init ------------------------------
def init_params(key):
    ks = iter(jax.random.split(key, 64))

    def nrm(shape, scale=0.02):
        return jax.random.normal(next(ks), shape, jnp.float32) * scale

    H = HIDDEN
    hd = H // NUM_HEADS
    qk_scale = 1.0 / float(np.sqrt(hd))

    wenc, wo2, pvec = [], [], []
    for _ in range(NUM_LAYERS):
        wq = nrm((H, H)) * qk_scale          # 1/sqrt(head_dim) folded into Wq
        wk = nrm((H, H))
        wv = nrm((H, H))
        wo = nrm((H, H))
        wi = nrm((H, 4 * H))
        wenc.append(jnp.concatenate([wq, wk, wv, wo, wi], axis=1))     # (H, 8H)
        wo2.append(nrm((4 * H, H)))

        pv = np.zeros((8, 4 * H), np.float32)
        pv[0, 0:H] = np.asarray(nrm((H,))) * qk_scale   # bq (scaled like Wq)
        pv[0, H:3 * H] = np.asarray(nrm((2 * H,)))      # bk, bv
        pv[1, 0:H] = np.asarray(nrm((H,)))              # bo
        pv[2, 0:H] = 1.0                                # ln1 gamma
        pv[3, 0:H] = 0.0                                # ln1 beta
        pv[4, 0:4 * H] = np.asarray(nrm((4 * H,)))      # bi
        pv[5, 0:H] = np.asarray(nrm((H,)))              # bo2
        pv[6, 0:H] = 1.0                                # ln2 gamma
        pv[7, 0:H] = 0.0                                # ln2 beta
        pvec.append(jnp.asarray(pv))

    # triplecls head: CLS_based_calssifier(2H, 2); the two H-row halves of W
    # are stacked on lanes so the kernel needs a single (H, 4) matmul operand.
    triple_w = nrm((2 * H, 2))
    triple_b = nrm((2,))
    whead = np.zeros((H + 1, 4), np.float32)
    whead[0:H, 0:2] = np.asarray(triple_w[0:H])
    whead[0:H, 2:4] = np.asarray(triple_w[H:2 * H])
    whead[H, 0:2] = np.asarray(triple_b)

    return dict(
        word_emb=nrm((VOCAB, H)),
        pos_emb=nrm((SEQ, H)),
        type_emb=nrm((TYPE_VOCAB, H)),
        emb_ln_g=jnp.ones((1, H), jnp.float32),
        emb_ln_b=jnp.zeros((1, H), jnp.float32),
        wenc=jnp.stack(wenc).astype(jnp.bfloat16),      # (L, H, 8H)
        wo2=jnp.stack(wo2).astype(jnp.bfloat16),        # (L, 4H, H)
        pvec=jnp.stack(pvec),                           # (L, 8, 4H) f32
        whead=jnp.asarray(whead),                       # (H+1, 4) f32
    )


# ------------------------------ forward wrapper ------------------------------
def kgbert_down_triplecls_forward(params, input_ids, attention_mask, token_type_ids,
                                  label, task_index):
    """KGBert_down_tirplecls.forward: encoder -> triplecls NLL loss + accuracy."""
    B, S = input_ids.shape
    H = HIDDEN
    NH = NUM_HEADS
    hd = H // NH
    BS = B * S
    HB = NH * BS
    BP = ((B + 7) // 8) * 8          # batch padded to a sublane multiple for the head

    # --- XLA glue: embedding gathers, mask / one-hot / slab construction ---
    emb = (params["word_emb"][input_ids]
           + params["pos_emb"][None, :, :]
           + params["type_emb"][token_type_ids]).reshape(BS, H)

    key_mask = (1.0 - attention_mask.astype(jnp.float32)) * -1e9        # (B, S)
    ex = jnp.arange(BS) // S
    add_mask = jnp.where(ex[:, None] == ex[None, :],                    # block-diagonal
                         key_mask.reshape(1, BS), -1e9)                 # (BS, BS)
    mask_t = jnp.tile(add_mask, (NH, 1))                                # (HB, BS)

    # 0/1 head-expansion mask: row block h keeps only head h's lanes.
    emask = (jnp.arange(HB)[:, None] // BS
             == jnp.arange(H)[None, :] // hd).astype(jnp.float32)       # (HB, H)

    rows = jnp.arange(B)
    cls_sel = jax.nn.one_hot(rows * S, BS, dtype=jnp.float32)            # (B, BS)
    task_sel = jax.nn.one_hot(rows * S + task_index, BS, dtype=jnp.float32)
    sel = (jnp.zeros((2 * BP, BS), jnp.float32)
           .at[0:B].set(cls_sel).at[BP:BP + B].set(task_sel))            # (2*BP, BS)

    lab48 = jnp.full((BP, BS), -1.0, jnp.float32).at[0:B, 0].set(
        label.astype(jnp.float32))                                       # labels in col 0

    data32 = jnp.concatenate(
        [emb, emask, params["emb_ln_g"], params["emb_ln_b"]], axis=0)    # (BS+HB+2, H)
    data48 = jnp.concatenate([mask_t, sel, lab48], axis=0)               # (HB+3*BP, BS)

    kernel = functools.partial(_kgbert_triplecls_kernel,
                               num_layers=NUM_LAYERS, num_heads=NH,
                               batch=B, seq=S, bp=BP)
    out = pl.pallas_call(
        kernel,
        out_shape=jax.ShapeDtypeStruct((1, 2), jnp.float32),
        in_specs=[_VMEM] * 6,
        out_specs=_VMEM,
    )(data32, data48, params["wenc"], params["wo2"], params["pvec"], params["whead"])
    return out[0, 0], out[0, 1]


# ----------------------------------- main -----------------------------------
if __name__ == "__main__":
    key = jax.random.PRNGKey(0)
    pkey, dkey = jax.random.split(key)
    params = init_params(pkey)

    input_ids = jax.random.randint(jax.random.fold_in(dkey, 0), (BATCH, SEQ), 0, VOCAB)
    token_type_ids = jax.random.randint(jax.random.fold_in(dkey, 1), (BATCH, SEQ), 0, TYPE_VOCAB)
    attention_mask = jnp.ones((BATCH, SEQ), jnp.float32)
    attention_mask = attention_mask.at[1, -2:].set(0.0).at[4, -1].set(0.0)
    label = jnp.array([1, 0, 1, 1, 0, 0], jnp.int32)          # binary triple labels
    task_index = jnp.array([3, 5, 2, 4, 1, 6], jnp.int32)     # per-example [SEP]-like position

    fwd = jax.jit(kgbert_down_triplecls_forward)
    loss, acc = fwd(params, input_ids, attention_mask, token_type_ids, label, task_index)
    jax.block_until_ready((loss, acc))
    assert np.isfinite(float(loss)) and np.isfinite(float(acc))
    print("KERNEL_OK")
</pallas_src>

<mosaic_0001>
module attributes {stable_mosaic.version = 11 : i64} {
  func.func @_kgbert_triplecls_kernel(%arg0: memref<242x32xf32, #tpu.memory_space<vmem>>, %arg1: memref<216x48xf32, #tpu.memory_space<vmem>>, %arg2: memref<2x32x256xbf16, #tpu.memory_space<vmem>>, %arg3: memref<2x128x32xbf16, #tpu.memory_space<vmem>>, %arg4: memref<2x8x128xf32, #tpu.memory_space<vmem>>, %arg5: memref<33x4xf32, #tpu.memory_space<vmem>>, %arg6: memref<1x2xf32, #tpu.memory_space<vmem>>) attributes {dimension_semantics = [], scalar_prefetch = 0 : i64, scratch_operands = 0 : i64, tpu.core_type = #tpu.core_type<tc>} {
    %c0 = arith.constant 0 : index
    %c0_0 = arith.constant 0 : index
    %0 = vector.load %arg0[%c0, %c0_0] : memref<242x32xf32, #tpu.memory_space<vmem>>, vector<48x32xf32>
    %c48 = arith.constant 48 : index
    %c0_1 = arith.constant 0 : index
    %1 = vector.load %arg0[%c48, %c0_1] : memref<242x32xf32, #tpu.memory_space<vmem>>, vector<192x32xf32>
    %c240 = arith.constant 240 : index
    %c0_2 = arith.constant 0 : index
    %2 = vector.load %arg0[%c240, %c0_2] : memref<242x32xf32, #tpu.memory_space<vmem>>, vector<1x32xf32>
    %c241 = arith.constant 241 : index
    %c0_3 = arith.constant 0 : index
    %3 = vector.load %arg0[%c241, %c0_3] : memref<242x32xf32, #tpu.memory_space<vmem>>, vector<1x32xf32>
    %c0_4 = arith.constant 0 : index
    %c0_5 = arith.constant 0 : index
    %4 = vector.load %arg1[%c0_4, %c0_5] : memref<216x48xf32, #tpu.memory_space<vmem>>, vector<192x48xf32>
    %c192 = arith.constant 192 : index
    %c0_6 = arith.constant 0 : index
    %5 = vector.load %arg1[%c192, %c0_6] : memref<216x48xf32, #tpu.memory_space<vmem>>, vector<16x48xf32>
    %c208 = arith.constant 208 : index
    %c0_7 = arith.constant 0 : index
    %6 = vector.load %arg1[%c208, %c0_7] : memref<216x48xf32, #tpu.memory_space<vmem>>, vector<8x1xf32>
    %cst = arith.constant dense<0.000000e+00> : vector<48xf32>
    %7 = vector.multi_reduction <add>, %0, %cst [1] : vector<48x32xf32> to vector<48xf32>
    %8 = vector.shape_cast %7 : vector<48xf32> to vector<48x1xf32>
    %cst_8 = arith.constant 3.200000e+01 : f32
    %9 = vector.broadcast %cst_8 : f32 to vector<48x1xf32>
    %10 = arith.divf %8, %9 : vector<48x1xf32>
    %11 = vector.broadcast %10 : vector<48x1xf32> to vector<48x32xf32>
    %12 = arith.subf %0, %11 : vector<48x32xf32>
    %13 = arith.mulf %12, %12 : vector<48x32xf32>
    %cst_9 = arith.constant dense<0.000000e+00> : vector<48xf32>
    %14 = vector.multi_reduction <add>, %13, %cst_9 [1] : vector<48x32xf32> to vector<48xf32>
    %15 = vector.shape_cast %14 : vector<48xf32> to vector<48x1xf32>
    %cst_10 = arith.constant 3.200000e+01 : f32
    %16 = vector.broadcast %cst_10 : f32 to vector<48x1xf32>
    %17 = arith.divf %15, %16 : vector<48x1xf32>
    %18 = vector.broadcast %10 : vector<48x1xf32> to vector<48x32xf32>
    %19 = arith.subf %0, %18 : vector<48x32xf32>
    %cst_11 = arith.constant 9.99999996E-13 : f32
    %20 = vector.broadcast %cst_11 : f32 to vector<48x1xf32>
    %21 = arith.addf %17, %20 : vector<48x1xf32>
    %22 = math.rsqrt %21 : vector<48x1xf32>
    %23 = vector.broadcast %22 : vector<48x1xf32> to vector<48x32xf32>
    %24 = arith.mulf %19, %23 : vector<48x32xf32>
    %25 = vector.broadcast %2 : vector<1x32xf32> to vector<48x32xf32>
    %26 = arith.mulf %24, %25 : vector<48x32xf32>
    %27 = vector.broadcast %3 : vector<1x32xf32> to vector<48x32xf32>
    %28 = arith.addf %26, %27 : vector<48x32xf32>
    %c0_12 = arith.constant 0 : index
    %c0_13 = arith.constant 0 : index
    %c0_14 = arith.constant 0 : index
    %29 = vector.load %arg2[%c0_12, %c0_13, %c0_14] : memref<2x32x256xbf16, #tpu.memory_space<vmem>>, vector<1x32x256xbf16>
    %30 = vector.shape_cast %29 : vector<1x32x256xbf16> to vector<32x256xbf16>
    %31 = vector.extract_strided_slice %30 {offsets = [0, 0], sizes = [32, 96], strides = [1, 1]} : vector<32x256xbf16> to vector<32x96xbf16>
    %32 = vector.extract_strided_slice %30 {offsets = [0, 96], sizes = [32, 32], strides = [1, 1]} : vector<32x256xbf16> to vector<32x32xbf16>
    %33 = vector.extract_strided_slice %30 {offsets = [0, 128], sizes = [32, 128], strides = [1, 1]} : vector<32x256xbf16> to vector<32x128xbf16>
    %c0_15 = arith.constant 0 : index
    %c0_16 = arith.constant 0 : index
    %c0_17 = arith.constant 0 : index
    %34 = vector.load %arg3[%c0_15, %c0_16, %c0_17] : memref<2x128x32xbf16, #tpu.memory_space<vmem>>, vector<1x128x32xbf16>
    %35 = vector.shape_cast %34 : vector<1x128x32xbf16> to vector<128x32xbf16>
    %c0_18 = arith.constant 0 : index
    %c0_19 = arith.constant 0 : index
    %c0_20 = arith.constant 0 : index
    %36 = vector.load %arg4[%c0_18, %c0_19, %c0_20] : memref<2x8x128xf32, #tpu.memory_space<vmem>>, vector<1x8x128xf32>
    %37 = vector.shape_cast %36 : vector<1x8x128xf32> to vector<8x128xf32>
    %38 = vector.extract_strided_slice %37 {offsets = [0, 0], sizes = [1, 96], strides = [1, 1]} : vector<8x128xf32> to vector<1x96xf32>
    %39 = vector.extract_strided_slice %37 {offsets = [1, 0], sizes = [1, 32], strides = [1, 1]} : vector<8x128xf32> to vector<1x32xf32>
    %40 = vector.extract_strided_slice %37 {offsets = [2, 0], sizes = [1, 32], strides = [1, 1]} : vector<8x128xf32> to vector<1x32xf32>
    %41 = vector.extract_strided_slice %37 {offsets = [3, 0], sizes = [1, 32], strides = [1, 1]} : vector<8x128xf32> to vector<1x32xf32>
    %42 = vector.extract_strided_slice %37 {offsets = [4, 0], sizes = [1, 128], strides = [1, 1]} : vector<8x128xf32> to vector<1x128xf32>
    %43 = vector.extract_strided_slice %37 {offsets = [5, 0], sizes = [1, 32], strides = [1, 1]} : vector<8x128xf32> to vector<1x32xf32>
    %44 = vector.extract_strided_slice %37 {offsets = [6, 0], sizes = [1, 32], strides = [1, 1]} : vector<8x128xf32> to vector<1x32xf32>
    %45 = vector.extract_strided_slice %37 {offsets = [7, 0], sizes = [1, 32], strides = [1, 1]} : vector<8x128xf32> to vector<1x32xf32>
    %46 = arith.truncf %28 : vector<48x32xf32> to vector<48x32xbf16>
    %cst_21 = arith.constant dense<0.000000e+00> : vector<48x96xf32>
    %47 = tpu.matmul %46, %31, %cst_21 {dimension_numbers = #tpu.dot_dimension_numbers<[1], [0], [0], [1], [0, 0, 1, 1], [], []>} : vector<48x32xbf16>, vector<32x96xbf16>, vector<48x96xf32> -> vector<48x96xf32>
    %48 = vector.broadcast %38 : vector<1x96xf32> to vector<48x96xf32>
    %49 = arith.addf %47, %48 : vector<48x96xf32>
    %50 = vector.extract_strided_slice %49 {offsets = [0, 0], sizes = [48, 32], strides = [1, 1]} : vector<48x96xf32> to vector<48x32xf32>
    %51 = vector.extract_strided_slice %49 {offsets = [0, 32], sizes = [48, 32], strides = [1, 1]} : vector<48x96xf32> to vector<48x32xf32>
    %52 = vector.extract_strided_slice %49 {offsets = [0, 64], sizes = [48, 32], strides = [1, 1]} : vector<48x96xf32> to vector<48x32xf32>
    %53 = tpu.concatenate %50, %50, %50, %50 in 0 : vector<48x32xf32>, vector<48x32xf32>, vector<48x32xf32>, vector<48x32xf32> -> vector<192x32xf32>
    %54 = arith.mulf %53, %1 : vector<192x32xf32>
    %55 = arith.truncf %54 : vector<192x32xf32> to vector<192x32xbf16>
    %56 = arith.truncf %51 : vector<48x32xf32> to vector<48x32xbf16>
    %cst_22 = arith.constant dense<0.000000e+00> : vector<192x48xf32>
    %57 = tpu.matmul %55, %56, %cst_22 {dimension_numbers = #tpu.dot_dimension_numbers<[1], [1], [0], [0], [0, 0, 1, 0], [], []>} : vector<192x32xbf16>, vector<48x32xbf16>, vector<192x48xf32> -> vector<192x48xf32>
    %58 = arith.addf %57, %4 : vector<192x48xf32>
    %cst_23 = arith.constant dense<0xFF800000> : vector<192xf32>
    %59 = vector.multi_reduction <maximumf>, %58, %cst_23 [1] : vector<192x48xf32> to vector<192xf32>
    %60 = vector.shape_cast %59 : vector<192xf32> to vector<192x1xf32>
    %61 = vector.broadcast %60 : vector<192x1xf32> to vector<192x48xf32>
    %62 = arith.subf %58, %61 : vector<192x48xf32>
    %63 = math.exp %62 : vector<192x48xf32>
    %cst_24 = arith.constant dense<0.000000e+00> : vector<192xf32>
    %64 = vector.multi_reduction <add>, %63, %cst_24 [1] : vector<192x48xf32> to vector<192xf32>
    %65 = vector.shape_cast %64 : vector<192xf32> to vector<192x1xf32>
    %66 = tpu.reciprocal %65 {approx = true} : vector<192x1xf32> -> vector<192x1xf32>
    %67 = vector.broadcast %66 : vector<192x1xf32> to vector<192x48xf32>
    %68 = arith.mulf %63, %67 : vector<192x48xf32>
    %69 = arith.truncf %68 : vector<192x48xf32> to vector<192x48xbf16>
    %70 = arith.truncf %52 : vector<48x32xf32> to vector<48x32xbf16>
    %cst_25 = arith.constant dense<0.000000e+00> : vector<192x32xf32>
    %71 = tpu.matmul %69, %70, %cst_25 {dimension_numbers = #tpu.dot_dimension_numbers<[1], [0], [0], [1], [0, 0, 1, 1], [], []>} : vector<192x48xbf16>, vector<48x32xbf16>, vector<192x32xf32> -> vector<192x32xf32>
    %72 = arith.mulf %71, %1 : vector<192x32xf32>
    %73 = vector.extract_strided_slice %72 {offsets = [0, 0], sizes = [48, 32], strides = [1, 1]} : vector<192x32xf32> to vector<48x32xf32>
    %74 = vector.extract_strided_slice %72 {offsets = [48, 0], sizes = [48, 32], strides = [1, 1]} : vector<192x32xf32> to vector<48x32xf32>
    %75 = arith.addf %73, %74 : vector<48x32xf32>
    %76 = vector.extract_strided_slice %72 {offsets = [96, 0], sizes = [48, 32], strides = [1, 1]} : vector<192x32xf32> to vector<48x32xf32>
    %77 = arith.addf %75, %76 : vector<48x32xf32>
    %78 = vector.extract_strided_slice %72 {offsets = [144, 0], sizes = [48, 32], strides = [1, 1]} : vector<192x32xf32> to vector<48x32xf32>
    %79 = arith.addf %77, %78 : vector<48x32xf32>
    %80 = arith.truncf %79 : vector<48x32xf32> to vector<48x32xbf16>
    %cst_26 = arith.constant dense<0.000000e+00> : vector<48x32xf32>
    %81 = tpu.matmul %80, %32, %cst_26 {dimension_numbers = #tpu.dot_dimension_numbers<[1], [0], [0], [1], [0, 0, 1, 1], [], []>} : vector<48x32xbf16>, vector<32x32xbf16>, vector<48x32xf32> -> vector<48x32xf32>
    %82 = vector.broadcast %39 : vector<1x32xf32> to vector<48x32xf32>
    %83 = arith.addf %81, %82 : vector<48x32xf32>
    %84 = arith.addf %28, %83 : vector<48x32xf32>
    %cst_27 = arith.constant dense<0.000000e+00> : vector<48xf32>
    %85 = vector.multi_reduction <add>, %84, %cst_27 [1] : vector<48x32xf32> to vector<48xf32>
    %86 = vector.shape_cast %85 : vector<48xf32> to vector<48x1xf32>
    %cst_28 = arith.constant 3.200000e+01 : f32
    %87 = vector.broadcast %cst_28 : f32 to vector<48x1xf32>
    %88 = arith.divf %86, %87 : vector<48x1xf32>
    %89 = vector.broadcast %88 : vector<48x1xf32> to vector<48x32xf32>
    %90 = arith.subf %84, %89 : vector<48x32xf32>
    %91 = arith.mulf %90, %90 : vector<48x32xf32>
    %cst_29 = arith.constant dense<0.000000e+00> : vector<48xf32>
    %92 = vector.multi_reduction <add>, %91, %cst_29 [1] : vector<48x32xf32> to vector<48xf32>
    %93 = vector.shape_cast %92 : vector<48xf32> to vector<48x1xf32>
    %cst_30 = arith.constant 3.200000e+01 : f32
    %94 = vector.broadcast %cst_30 : f32 to vector<48x1xf32>
    %95 = arith.divf %93, %94 : vector<48x1xf32>
    %96 = vector.broadcast %88 : vector<48x1xf32> to vector<48x32xf32>
    %97 = arith.subf %84, %96 : vector<48x32xf32>
    %cst_31 = arith.constant 9.99999996E-13 : f32
    %98 = vector.broadcast %cst_31 : f32 to vector<48x1xf32>
    %99 = arith.addf %95, %98 : vector<48x1xf32>
    %100 = math.rsqrt %99 : vector<48x1xf32>
    %101 = vector.broadcast %100 : vector<48x1xf32> to vector<48x32xf32>
    %102 = arith.mulf %97, %101 : vector<48x32xf32>
    %103 = vector.broadcast %40 : vector<1x32xf32> to vector<48x32xf32>
    %104 = arith.mulf %102, %103 : vector<48x32xf32>
    %105 = vector.broadcast %41 : vector<1x32xf32> to vector<48x32xf32>
    %106 = arith.addf %104, %105 : vector<48x32xf32>
    %107 = arith.truncf %106 : vector<48x32xf32> to vector<48x32xbf16>
    %cst_32 = arith.constant dense<0.000000e+00> : vector<48x128xf32>
    %108 = tpu.matmul %107, %33, %cst_32 {dimension_numbers = #tpu.dot_dimension_numbers<[1], [0], [0], [1], [0, 0, 1, 1], [], []>} : vector<48x32xbf16>, vector<32x128xbf16>, vector<48x128xf32> -> vector<48x128xf32>
    %109 = vector.broadcast %42 : vector<1x128xf32> to vector<48x128xf32>
    %110 = arith.addf %108, %109 : vector<48x128xf32>
    %cst_33 = arith.constant 5.000000e-01 : f32
    %111 = vector.broadcast %cst_33 : f32 to vector<48x128xf32>
    %112 = arith.mulf %111, %110 : vector<48x128xf32>
    %cst_34 = arith.constant 4.471500e-02 : f32
    %113 = vector.broadcast %cst_34 : f32 to vector<48x128xf32>
    %114 = arith.mulf %113, %110 : vector<48x128xf32>
    %115 = arith.mulf %114, %110 : vector<48x128xf32>
    %116 = arith.mulf %115, %110 : vector<48x128xf32>
    %117 = arith.addf %110, %116 : vector<48x128xf32>
    %cst_35 = arith.constant 0.797884583 : f32
    %118 = vector.broadcast %cst_35 : f32 to vector<48x128xf32>
    %119 = arith.mulf %118, %117 : vector<48x128xf32>
    %120 = math.tanh %119 : vector<48x128xf32>
    %cst_36 = arith.constant 1.000000e+00 : f32
    %121 = vector.broadcast %cst_36 : f32 to vector<48x128xf32>
    %122 = arith.addf %121, %120 : vector<48x128xf32>
    %123 = arith.mulf %112, %122 : vector<48x128xf32>
    %124 = arith.truncf %123 : vector<48x128xf32> to vector<48x128xbf16>
    %cst_37 = arith.constant dense<0.000000e+00> : vector<48x32xf32>
    %125 = tpu.matmul %124, %35, %cst_37 {dimension_numbers = #tpu.dot_dimension_numbers<[1], [0], [0], [1], [0, 0, 1, 1], [], []>} : vector<48x128xbf16>, vector<128x32xbf16>, vector<48x32xf32> -> vector<48x32xf32>
    %126 = vector.broadcast %43 : vector<1x32xf32> to vector<48x32xf32>
    %127 = arith.addf %125, %126 : vector<48x32xf32>
    %128 = arith.addf %106, %127 : vector<48x32xf32>
    %cst_38 = arith.constant dense<0.000000e+00> : vector<48xf32>
    %129 = vector.multi_reduction <add>, %128, %cst_38 [1] : vector<48x32xf32> to vector<48xf32>
    %130 = vector.shape_cast %129 : vector<48xf32> to vector<48x1xf32>
    %cst_39 = arith.constant 3.200000e+01 : f32
    %131 = vector.broadcast %cst_39 : f32 to vector<48x1xf32>
    %132 = arith.divf %130, %131 : vector<48x1xf32>
    %133 = vector.broadcast %132 : vector<48x1xf32> to vector<48x32xf32>
    %134 = arith.subf %128, %133 : vector<48x32xf32>
    %135 = arith.mulf %134, %134 : vector<48x32xf32>
    %cst_40 = arith.constant dense<0.000000e+00> : vector<48xf32>
    %136 = vector.multi_reduction <add>, %135, %cst_40 [1] : vector<48x32xf32> to vector<48xf32>
    %137 = vector.shape_cast %136 : vector<48xf32> to vector<48x1xf32>
    %cst_41 = arith.constant 3.200000e+01 : f32
    %138 = vector.broadcast %cst_41 : f32 to vector<48x1xf32>
    %139 = arith.divf %137, %138 : vector<48x1xf32>
    %140 = vector.broadcast %132 : vector<48x1xf32> to vector<48x32xf32>
    %141 = arith.subf %128, %140 : vector<48x32xf32>
    %cst_42 = arith.constant 9.99999996E-13 : f32
    %142 = vector.broadcast %cst_42 : f32 to vector<48x1xf32>
    %143 = arith.addf %139, %142 : vector<48x1xf32>
    %144 = math.rsqrt %143 : vector<48x1xf32>
    %145 = vector.broadcast %144 : vector<48x1xf32> to vector<48x32xf32>
    %146 = arith.mulf %141, %145 : vector<48x32xf32>
    %147 = vector.broadcast %44 : vector<1x32xf32> to vector<48x32xf32>
    %148 = arith.mulf %146, %147 : vector<48x32xf32>
    %149 = vector.broadcast %45 : vector<1x32xf32> to vector<48x32xf32>
    %150 = arith.addf %148, %149 : vector<48x32xf32>
    %c1 = arith.constant 1 : index
    %c0_43 = arith.constant 0 : index
    %c0_44 = arith.constant 0 : index
    %151 = vector.load %arg2[%c1, %c0_43, %c0_44] : memref<2x32x256xbf16, #tpu.memory_space<vmem>>, vector<1x32x256xbf16>
    %152 = vector.shape_cast %151 : vector<1x32x256xbf16> to vector<32x256xbf16>
    %153 = vector.extract_strided_slice %152 {offsets = [0, 0], sizes = [32, 96], strides = [1, 1]} : vector<32x256xbf16> to vector<32x96xbf16>
    %154 = vector.extract_strided_slice %152 {offsets = [0, 96], sizes = [32, 32], strides = [1, 1]} : vector<32x256xbf16> to vector<32x32xbf16>
    %155 = vector.extract_strided_slice %152 {offsets = [0, 128], sizes = [32, 128], strides = [1, 1]} : vector<32x256xbf16> to vector<32x128xbf16>
    %c1_45 = arith.constant 1 : index
    %c0_46 = arith.constant 0 : index
    %c0_47 = arith.constant 0 : index
    %156 = vector.load %arg3[%c1_45, %c0_46, %c0_47] : memref<2x128x32xbf16, #tpu.memory_space<vmem>>, vector<1x128x32xbf16>
    %157 = vector.shape_cast %156 : vector<1x128x32xbf16> to vector<128x32xbf16>
    %c1_48 = arith.constant 1 : index
    %c0_49 = arith.constant 0 : index
    %c0_50 = arith.constant 0 : index
    %158 = vector.load %arg4[%c1_48, %c0_49, %c0_50] : memref<2x8x128xf32, #tpu.memory_space<vmem>>, vector<1x8x128xf32>
    %159 = vector.shape_cast %158 : vector<1x8x128xf32> to vector<8x128xf32>
    %160 = vector.extract_strided_slice %159 {offsets = [0, 0], sizes = [1, 96], strides = [1, 1]} : vector<8x128xf32> to vector<1x96xf32>
    %161 = vector.extract_strided_slice %159 {offsets = [1, 0], sizes = [1, 32], strides = [1, 1]} : vector<8x128xf32> to vector<1x32xf32>
    %162 = vector.extract_strided_slice %159 {offsets = [2, 0], sizes = [1, 32], strides = [1, 1]} : vector<8x128xf32> to vector<1x32xf32>
    %163 = vector.extract_strided_slice %159 {offsets = [3, 0], sizes = [1, 32], strides = [1, 1]} : vector<8x128xf32> to vector<1x32xf32>
    %164 = vector.extract_strided_slice %159 {offsets = [4, 0], sizes = [1, 128], strides = [1, 1]} : vector<8x128xf32> to vector<1x128xf32>
    %165 = vector.extract_strided_slice %159 {offsets = [5, 0], sizes = [1, 32], strides = [1, 1]} : vector<8x128xf32> to vector<1x32xf32>
    %166 = vector.extract_strided_slice %159 {offsets = [6, 0], sizes = [1, 32], strides = [1, 1]} : vector<8x128xf32> to vector<1x32xf32>
    %167 = vector.extract_strided_slice %159 {offsets = [7, 0], sizes = [1, 32], strides = [1, 1]} : vector<8x128xf32> to vector<1x32xf32>
    %168 = arith.truncf %150 : vector<48x32xf32> to vector<48x32xbf16>
    %cst_51 = arith.constant dense<0.000000e+00> : vector<48x96xf32>
    %169 = tpu.matmul %168, %153, %cst_51 {dimension_numbers = #tpu.dot_dimension_numbers<[1], [0], [0], [1], [0, 0, 1, 1], [], []>} : vector<48x32xbf16>, vector<32x96xbf16>, vector<48x96xf32> -> vector<48x96xf32>
    %170 = vector.broadcast %160 : vector<1x96xf32> to vector<48x96xf32>
    %171 = arith.addf %169, %170 : vector<48x96xf32>
    %172 = vector.extract_strided_slice %171 {offsets = [0, 0], sizes = [48, 32], strides = [1, 1]} : vector<48x96xf32> to vector<48x32xf32>
    %173 = vector.extract_strided_slice %171 {offsets = [0, 32], sizes = [48, 32], strides = [1, 1]} : vector<48x96xf32> to vector<48x32xf32>
    %174 = vector.extract_strided_slice %171 {offsets = [0, 64], sizes = [48, 32], strides = [1, 1]} : vector<48x96xf32> to vector<48x32xf32>
    %175 = tpu.concatenate %172, %172, %172, %172 in 0 : vector<48x32xf32>, vector<48x32xf32>, vector<48x32xf32>, vector<48x32xf32> -> vector<192x32xf32>
    %176 = arith.mulf %175, %1 : vector<192x32xf32>
    %177 = arith.truncf %176 : vector<192x32xf32> to vector<192x32xbf16>
    %178 = arith.truncf %173 : vector<48x32xf32> to vector<48x32xbf16>
    %cst_52 = arith.constant dense<0.000000e+00> : vector<192x48xf32>
    %179 = tpu.matmul %177, %178, %cst_52 {dimension_numbers = #tpu.dot_dimension_numbers<[1], [1], [0], [0], [0, 0, 1, 0], [], []>} : vector<192x32xbf16>, vector<48x32xbf16>, vector<192x48xf32> -> vector<192x48xf32>
    %180 = arith.addf %179, %4 : vector<192x48xf32>
    %cst_53 = arith.constant dense<0xFF800000> : vector<192xf32>
    %181 = vector.multi_reduction <maximumf>, %180, %cst_53 [1] : vector<192x48xf32> to vector<192xf32>
    %182 = vector.shape_cast %181 : vector<192xf32> to vector<192x1xf32>
    %183 = vector.broadcast %182 : vector<192x1xf32> to vector<192x48xf32>
    %184 = arith.subf %180, %183 : vector<192x48xf32>
    %185 = math.exp %184 : vector<192x48xf32>
    %cst_54 = arith.constant dense<0.000000e+00> : vector<192xf32>
    %186 = vector.multi_reduction <add>, %185, %cst_54 [1] : vector<192x48xf32> to vector<192xf32>
    %187 = vector.shape_cast %186 : vector<192xf32> to vector<192x1xf32>
    %188 = tpu.reciprocal %187 {approx = true} : vector<192x1xf32> -> vector<192x1xf32>
    %189 = vector.broadcast %188 : vector<192x1xf32> to vector<192x48xf32>
    %190 = arith.mulf %185, %189 : vector<192x48xf32>
    %191 = arith.truncf %190 : vector<192x48xf32> to vector<192x48xbf16>
    %192 = arith.truncf %174 : vector<48x32xf32> to vector<48x32xbf16>
    %cst_55 = arith.constant dense<0.000000e+00> : vector<192x32xf32>
    %193 = tpu.matmul %191, %192, %cst_55 {dimension_numbers = #tpu.dot_dimension_numbers<[1], [0], [0], [1], [0, 0, 1, 1], [], []>} : vector<192x48xbf16>, vector<48x32xbf16>, vector<192x32xf32> -> vector<192x32xf32>
    %194 = arith.mulf %193, %1 : vector<192x32xf32>
    %195 = vector.extract_strided_slice %194 {offsets = [0, 0], sizes = [48, 32], strides = [1, 1]} : vector<192x32xf32> to vector<48x32xf32>
    %196 = vector.extract_strided_slice %194 {offsets = [48, 0], sizes = [48, 32], strides = [1, 1]} : vector<192x32xf32> to vector<48x32xf32>
    %197 = arith.addf %195, %196 : vector<48x32xf32>
    %198 = vector.extract_strided_slice %194 {offsets = [96, 0], sizes = [48, 32], strides = [1, 1]} : vector<192x32xf32> to vector<48x32xf32>
    %199 = arith.addf %197, %198 : vector<48x32xf32>
    %200 = vector.extract_strided_slice %194 {offsets = [144, 0], sizes = [48, 32], strides = [1, 1]} : vector<192x32xf32> to vector<48x32xf32>
    %201 = arith.addf %199, %200 : vector<48x32xf32>
    %202 = arith.truncf %201 : vector<48x32xf32> to vector<48x32xbf16>
    %cst_56 = arith.constant dense<0.000000e+00> : vector<48x32xf32>
    %203 = tpu.matmul %202, %154, %cst_56 {dimension_numbers = #tpu.dot_dimension_numbers<[1], [0], [0], [1], [0, 0, 1, 1], [], []>} : vector<48x32xbf16>, vector<32x32xbf16>, vector<48x32xf32> -> vector<48x32xf32>
    %204 = vector.broadcast %161 : vector<1x32xf32> to vector<48x32xf32>
    %205 = arith.addf %203, %204 : vector<48x32xf32>
    %206 = arith.addf %150, %205 : vector<48x32xf32>
    %cst_57 = arith.constant dense<0.000000e+00> : vector<48xf32>
    %207 = vector.multi_reduction <add>, %206, %cst_57 [1] : vector<48x32xf32> to vector<48xf32>
    %208 = vector.shape_cast %207 : vector<48xf32> to vector<48x1xf32>
    %cst_58 = arith.constant 3.200000e+01 : f32
    %209 = vector.broadcast %cst_58 : f32 to vector<48x1xf32>
    %210 = arith.divf %208, %209 : vector<48x1xf32>
    %211 = vector.broadcast %210 : vector<48x1xf32> to vector<48x32xf32>
    %212 = arith.subf %206, %211 : vector<48x32xf32>
    %213 = arith.mulf %212, %212 : vector<48x32xf32>
    %cst_59 = arith.constant dense<0.000000e+00> : vector<48xf32>
    %214 = vector.multi_reduction <add>, %213, %cst_59 [1] : vector<48x32xf32> to vector<48xf32>
    %215 = vector.shape_cast %214 : vector<48xf32> to vector<48x1xf32>
    %cst_60 = arith.constant 3.200000e+01 : f32
    %216 = vector.broadcast %cst_60 : f32 to vector<48x1xf32>
    %217 = arith.divf %215, %216 : vector<48x1xf32>
    %218 = vector.broadcast %210 : vector<48x1xf32> to vector<48x32xf32>
    %219 = arith.subf %206, %218 : vector<48x32xf32>
    %cst_61 = arith.constant 9.99999996E-13 : f32
    %220 = vector.broadcast %cst_61 : f32 to vector<48x1xf32>
    %221 = arith.addf %217, %220 : vector<48x1xf32>
    %222 = math.rsqrt %221 : vector<48x1xf32>
    %223 = vector.broadcast %222 : vector<48x1xf32> to vector<48x32xf32>
    %224 = arith.mulf %219, %223 : vector<48x32xf32>
    %225 = vector.broadcast %162 : vector<1x32xf32> to vector<48x32xf32>
    %226 = arith.mulf %224, %225 : vector<48x32xf32>
    %227 = vector.broadcast %163 : vector<1x32xf32> to vector<48x32xf32>
    %228 = arith.addf %226, %227 : vector<48x32xf32>
    %229 = arith.truncf %228 : vector<48x32xf32> to vector<48x32xbf16>
    %cst_62 = arith.constant dense<0.000000e+00> : vector<48x128xf32>
    %230 = tpu.matmul %229, %155, %cst_62 {dimension_numbers = #tpu.dot_dimension_numbers<[1], [0], [0], [1], [0, 0, 1, 1], [], []>} : vector<48x32xbf16>, vector<32x128xbf16>, vector<48x128xf32> -> vector<48x128xf32>
    %231 = vector.broadcast %164 : vector<1x128xf32> to vector<48x128xf32>
    %232 = arith.addf %230, %231 : vector<48x128xf32>
    %cst_63 = arith.constant 5.000000e-01 : f32
    %233 = vector.broadcast %cst_63 : f32 to vector<48x128xf32>
    %234 = arith.mulf %233, %232 : vector<48x128xf32>
    %cst_64 = arith.constant 4.471500e-02 : f32
    %235 = vector.broadcast %cst_64 : f32 to vector<48x128xf32>
    %236 = arith.mulf %235, %232 : vector<48x128xf32>
    %237 = arith.mulf %236, %232 : vector<48x128xf32>
    %238 = arith.mulf %237, %232 : vector<48x128xf32>
    %239 = arith.addf %232, %238 : vector<48x128xf32>
    %cst_65 = arith.constant 0.797884583 : f32
    %240 = vector.broadcast %cst_65 : f32 to vector<48x128xf32>
    %241 = arith.mulf %240, %239 : vector<48x128xf32>
    %242 = math.tanh %241 : vector<48x128xf32>
    %cst_66 = arith.constant 1.000000e+00 : f32
    %243 = vector.broadcast %cst_66 : f32 to vector<48x128xf32>
    %244 = arith.addf %243, %242 : vector<48x128xf32>
    %245 = arith.mulf %234, %244 : vector<48x128xf32>
    %246 = arith.truncf %245 : vector<48x128xf32> to vector<48x128xbf16>
    %cst_67 = arith.constant dense<0.000000e+00> : vector<48x32xf32>
    %247 = tpu.matmul %246, %157, %cst_67 {dimension_numbers = #tpu.dot_dimension_numbers<[1], [0], [0], [1], [0, 0, 1, 1], [], []>} : vector<48x128xbf16>, vector<128x32xbf16>, vector<48x32xf32> -> vector<48x32xf32>
    %248 = vector.broadcast %165 : vector<1x32xf32> to vector<48x32xf32>
    %249 = arith.addf %247, %248 : vector<48x32xf32>
    %250 = arith.addf %228, %249 : vector<48x32xf32>
    %cst_68 = arith.constant dense<0.000000e+00> : vector<48xf32>
    %251 = vector.multi_reduction <add>, %250, %cst_68 [1] : vector<48x32xf32> to vector<48xf32>
    %252 = vector.shape_cast %251 : vector<48xf32> to vector<48x1xf32>
    %cst_69 = arith.constant 3.200000e+01 : f32
    %253 = vector.broadcast %cst_69 : f32 to vector<48x1xf32>
    %254 = arith.divf %252, %253 : vector<48x1xf32>
    %255 = vector.broadcast %254 : vector<48x1xf32> to vector<48x32xf32>
    %256 = arith.subf %250, %255 : vector<48x32xf32>
    %257 = arith.mulf %256, %256 : vector<48x32xf32>
    %cst_70 = arith.constant dense<0.000000e+00> : vector<48xf32>
    %258 = vector.multi_reduction <add>, %257, %cst_70 [1] : vector<48x32xf32> to vector<48xf32>
    %259 = vector.shape_cast %258 : vector<48xf32> to vector<48x1xf32>
    %cst_71 = arith.constant 3.200000e+01 : f32
    %260 = vector.broadcast %cst_71 : f32 to vector<48x1xf32>
    %261 = arith.divf %259, %260 : vector<48x1xf32>
    %262 = vector.broadcast %254 : vector<48x1xf32> to vector<48x32xf32>
    %263 = arith.subf %250, %262 : vector<48x32xf32>
    %cst_72 = arith.constant 9.99999996E-13 : f32
    %264 = vector.broadcast %cst_72 : f32 to vector<48x1xf32>
    %265 = arith.addf %261, %264 : vector<48x1xf32>
    %266 = math.rsqrt %265 : vector<48x1xf32>
    %267 = vector.broadcast %266 : vector<48x1xf32> to vector<48x32xf32>
    %268 = arith.mulf %263, %267 : vector<48x32xf32>
    %269 = vector.broadcast %166 : vector<1x32xf32> to vector<48x32xf32>
    %270 = arith.mulf %268, %269 : vector<48x32xf32>
    %271 = vector.broadcast %167 : vector<1x32xf32> to vector<48x32xf32>
    %272 = arith.addf %270, %271 : vector<48x32xf32>
    %cst_73 = arith.constant dense<0.000000e+00> : vector<16x32xf32>
    %273 = tpu.matmul %5, %272, %cst_73 {dimension_numbers = #tpu.dot_dimension_numbers<[1], [0], [0], [1], [0, 0, 1, 1], [], []>} : vector<16x48xf32>, vector<48x32xf32>, vector<16x32xf32> -> vector<16x32xf32>
    %c0_74 = arith.constant 0 : index
    %c0_75 = arith.constant 0 : index
    %274 = vector.load %arg5[%c0_74, %c0_75] : memref<33x4xf32, #tpu.memory_space<vmem>>, vector<32x4xf32>
    %c32 = arith.constant 32 : index
    %c0_76 = arith.constant 0 : index
    %275 = vector.load %arg5[%c32, %c0_76] : memref<33x4xf32, #tpu.memory_space<vmem>>, vector<1x2xf32>
    %cst_77 = arith.constant dense<0.000000e+00> : vector<16x4xf32>
    %276 = tpu.matmul %273, %274, %cst_77 {dimension_numbers = #tpu.dot_dimension_numbers<[1], [0], [0], [1], [0, 0, 1, 1], [], []>} : vector<16x32xf32>, vector<32x4xf32>, vector<16x4xf32> -> vector<16x4xf32>
    %277 = vector.extract_strided_slice %276 {offsets = [0, 0], sizes = [8, 2], strides = [1, 1]} : vector<16x4xf32> to vector<8x2xf32>
    %278 = vector.extract_strided_slice %276 {offsets = [8, 2], sizes = [8, 2], strides = [1, 1]} : vector<16x4xf32> to vector<8x2xf32>
    %279 = arith.addf %277, %278 : vector<8x2xf32>
    %280 = vector.broadcast %275 : vector<1x2xf32> to vector<8x2xf32>
    %281 = arith.addf %279, %280 : vector<8x2xf32>
    %cst_78 = arith.constant dense<0xFF800000> : vector<8xf32>
    %282 = vector.multi_reduction <maximumf>, %281, %cst_78 [1] : vector<8x2xf32> to vector<8xf32>
    %283 = vector.shape_cast %282 : vector<8xf32> to vector<8x1xf32>
    %284 = vector.broadcast %283 : vector<8x1xf32> to vector<8x2xf32>
    %285 = arith.subf %281, %284 : vector<8x2xf32>
    %286 = math.exp %285 : vector<8x2xf32>
    %cst_79 = arith.constant dense<0.000000e+00> : vector<8xf32>
    %287 = vector.multi_reduction <add>, %286, %cst_79 [1] : vector<8x2xf32> to vector<8xf32>
    %288 = vector.shape_cast %287 : vector<8xf32> to vector<8x1xf32>
    %289 = math.log %288 : vector<8x1xf32>
    %290 = arith.addf %283, %289 : vector<8x1xf32>
    %291 = vector.broadcast %290 : vector<8x1xf32> to vector<8x2xf32>
    %292 = arith.subf %281, %291 : vector<8x2xf32>
    %cst_80 = arith.constant 1.000000e+00 : f32
    %293 = vector.broadcast %cst_80 : f32 to vector<8x1xf32>
    %294 = arith.cmpf oeq, %6, %293 : vector<8x1xf32>
    %295 = arith.extui %294 : vector<8x1xi1> to vector<8x1xi32>
    %296 = arith.sitofp %295 : vector<8x1xi32> to vector<8x1xf32>
    %cst_81 = arith.constant 0.000000e+00 : f32
    %297 = vector.broadcast %cst_81 : f32 to vector<8x1xf32>
    %298 = arith.cmpf oeq, %6, %297 : vector<8x1xf32>
    %299 = arith.extui %298 : vector<8x1xi1> to vector<8x1xi32>
    %300 = arith.sitofp %299 : vector<8x1xi32> to vector<8x1xf32>
    %cst_82 = arith.constant 1.000000e+00 : f32
    %301 = vector.broadcast %cst_82 : f32 to vector<8x1xf32>
    %302 = arith.cmpf oeq, %6, %301 : vector<8x1xf32>
    %303 = vector.extract_strided_slice %292 {offsets = [0, 1], sizes = [8, 1], strides = [1, 1]} : vector<8x2xf32> to vector<8x1xf32>
    %304 = vector.extract_strided_slice %292 {offsets = [0, 0], sizes = [8, 1], strides = [1, 1]} : vector<8x2xf32> to vector<8x1xf32>
    %305 = arith.select %302, %303, %304 : vector<8x1xi1>, vector<8x1xf32>
    %306 = vector.shape_cast %296 : vector<8x1xf32> to vector<1x8x1xf32>
    %cst_83 = arith.constant dense<0.000000e+00> : vector<1xf32>
    %307 = vector.multi_reduction <add>, %306, %cst_83 [1, 2] : vector<1x8x1xf32> to vector<1xf32>
    %308 = vector.shape_cast %307 : vector<1xf32> to vector<1x1x1xf32>
    %309 = vector.extract %308[0, 0, 0] : f32 from vector<1x1x1xf32>
    %310 = vector.broadcast %309 : f32 to vector<1x1xf32>
    %cst_84 = arith.constant 1.000000e+00 : f32
    %311 = vector.broadcast %cst_84 : f32 to vector<1x1xf32>
    %312 = arith.maximumf %310, %311 : vector<1x1xf32>
    %313 = vector.shape_cast %300 : vector<8x1xf32> to vector<1x8x1xf32>
    %cst_85 = arith.constant dense<0.000000e+00> : vector<1xf32>
    %314 = vector.multi_reduction <add>, %313, %cst_85 [1, 2] : vector<1x8x1xf32> to vector<1xf32>
    %315 = vector.shape_cast %314 : vector<1xf32> to vector<1x1x1xf32>
    %316 = vector.extract %315[0, 0, 0] : f32 from vector<1x1x1xf32>
    %317 = vector.broadcast %316 : f32 to vector<1x1xf32>
    %cst_86 = arith.constant 1.000000e+00 : f32
    %318 = vector.broadcast %cst_86 : f32 to vector<1x1xf32>
    %319 = arith.maximumf %317, %318 : vector<1x1xf32>
    %320 = arith.mulf %305, %296 : vector<8x1xf32>
    %321 = vector.shape_cast %320 : vector<8x1xf32> to vector<1x8x1xf32>
    %cst_87 = arith.constant dense<0.000000e+00> : vector<1xf32>
    %322 = vector.multi_reduction <add>, %321, %cst_87 [1, 2] : vector<1x8x1xf32> to vector<1xf32>
    %323 = vector.shape_cast %322 : vector<1xf32> to vector<1x1x1xf32>
    %324 = vector.extract %323[0, 0, 0] : f32 from vector<1x1x1xf32>
    %325 = vector.broadcast %324 : f32 to vector<1x1xf32>
    %326 = arith.divf %325, %312 : vector<1x1xf32>
    %cst_88 = arith.constant 0.000000e+00 : f32
    %327 = vector.broadcast %cst_88 : f32 to vector<1x1xf32>
    %328 = arith.subf %327, %326 : vector<1x1xf32>
    %329 = arith.mulf %305, %300 : vector<8x1xf32>
    %330 = vector.shape_cast %329 : vector<8x1xf32> to vector<1x8x1xf32>
    %cst_89 = arith.constant dense<0.000000e+00> : vector<1xf32>
    %331 = vector.multi_reduction <add>, %330, %cst_89 [1, 2] : vector<1x8x1xf32> to vector<1xf32>
    %332 = vector.shape_cast %331 : vector<1xf32> to vector<1x1x1xf32>
    %333 = vector.extract %332[0, 0, 0] : f32 from vector<1x1x1xf32>
    %334 = vector.broadcast %333 : f32 to vector<1x1xf32>
    %335 = arith.divf %334, %319 : vector<1x1xf32>
    %336 = arith.subf %328, %335 : vector<1x1xf32>
    %cst_90 = arith.constant 5.000000e-01 : f32
    %337 = vector.broadcast %cst_90 : f32 to vector<1x1xf32>
    %338 = arith.mulf %337, %336 : vector<1x1xf32>
    %339 = vector.extract_strided_slice %292 {offsets = [0, 1], sizes = [8, 1], strides = [1, 1]} : vector<8x2xf32> to vector<8x1xf32>
    %340 = vector.extract_strided_slice %292 {offsets = [0, 0], sizes = [8, 1], strides = [1, 1]} : vector<8x2xf32> to vector<8x1xf32>
    %341 = arith.cmpf ogt, %339, %340 : vector<8x1xf32>
    %cst_91 = arith.constant 1.000000e+00 : f32
    %cst_92 = arith.constant 0.000000e+00 : f32
    %342 = vector.broadcast %cst_91 : f32 to vector<8x1xf32>
    %343 = vector.broadcast %cst_92 : f32 to vector<8x1xf32>
    %344 = arith.select %341, %342, %343 : vector<8x1xi1>, vector<8x1xf32>
    %345 = arith.cmpf oeq, %344, %6 : vector<8x1xf32>
    %346 = arith.extui %345 : vector<8x1xi1> to vector<8x1xi32>
    %347 = arith.sitofp %346 : vector<8x1xi32> to vector<8x1xf32>
    %348 = vector.shape_cast %347 : vector<8x1xf32> to vector<1x8x1xf32>
    %cst_93 = arith.constant dense<0.000000e+00> : vector<1xf32>
    %349 = vector.multi_reduction <add>, %348, %cst_93 [1, 2] : vector<1x8x1xf32> to vector<1xf32>
    %350 = vector.shape_cast %349 : vector<1xf32> to vector<1x1x1xf32>
    %351 = vector.extract %350[0, 0, 0] : f32 from vector<1x1x1xf32>
    %352 = vector.broadcast %351 : f32 to vector<1x1xf32>
    %cst_94 = arith.constant 0.166666672 : f32
    %353 = vector.broadcast %cst_94 : f32 to vector<1x1xf32>
    %354 = arith.mulf %352, %353 : vector<1x1xf32>
    %c0_95 = arith.constant 0 : index
    %c0_96 = arith.constant 0 : index
    %355 = vector.load %arg6[%c0_95, %c0_96] : memref<1x2xf32, #tpu.memory_space<vmem>>, vector<1x1xf32>
    tpu.vector_store %arg6[%c0_95, %c0_96], %338 {strides = array<i32>} : memref<1x2xf32, #tpu.memory_space<vmem>>, vector<1x1xf32>,
    %c0_97 = arith.constant 0 : index
    %c1_98 = arith.constant 1 : index
    %356 = vector.load %arg6[%c0_97, %c1_98] : memref<1x2xf32, #tpu.memory_space<vmem>>, vector<1x1xf32>
    tpu.vector_store %arg6[%c0_97, %c1_98], %354 {strides = array<i32>} : memref<1x2xf32, #tpu.memory_space<vmem>>, vector<1x1xf32>,
    return
  }
}

</mosaic_0001>

<llo_original>
// kernel: tile.9
$region0: #{tile.9}
  %s0 = inlined_call_operand.vmem [shape: f32[4,48,48], index: 0, kind: input, shape index: {}]
  %s1 = inlined_call_operand.vmem [shape: f32[192,48], index: 1, kind: output, shape index: {}]
  $region1: #{tile.9} parent=0
    #allocation0 [shape = 'u8[196608]{0}', space=vmem, size = 0x30000, scoped, tag = 'scoped mem for input reshape']
    %s3 = sshllo.u32 0, 4
    %s4 = smul.addr 4, 47
    %s5 = scalar_lea.vmem %s0, %s4
    %v6 = vld [vmem:[%s5] sm:%s3]
    %s7 = scalar_lea.vmem [#allocation0], 376
    %8 = vst [vmem:[%s7] sm:%s3] %v6
    %s9 = smul.addr 4, 46
    %s10 = scalar_lea.vmem %s0, %s9
    %v11 = vld [vmem:[%s10] sm:%s3]
    %s12 = scalar_lea.vmem [#allocation0], 368
    %13 = vst [vmem:[%s12] sm:%s3] %v11
    %s14 = smul.addr 4, 45
    %s15 = scalar_lea.vmem %s0, %s14
    %v16 = vld [vmem:[%s15] sm:%s3]
    %s17 = scalar_lea.vmem [#allocation0], 360
    %18 = vst [vmem:[%s17] sm:%s3] %v16
    %s19 = smul.addr 4, 44
    %s20 = scalar_lea.vmem %s0, %s19
    %v21 = vld [vmem:[%s20] sm:%s3]
    %s22 = scalar_lea.vmem [#allocation0], 352
    %23 = vst [vmem:[%s22] sm:%s3] %v21
    %s24 = smul.addr 4, 43
    %s25 = scalar_lea.vmem %s0, %s24
    %v26 = vld [vmem:[%s25] sm:%s3]
    %s27 = scalar_lea.vmem [#allocation0], 344
    %28 = vst [vmem:[%s27] sm:%s3] %v26
    %s29 = smul.addr 4, 42
    %s30 = scalar_lea.vmem %s0, %s29
    %v31 = vld [vmem:[%s30] sm:%s3]
    %s32 = scalar_lea.vmem [#allocation0], 336
    %33 = vst [vmem:[%s32] sm:%s3] %v31
    %s34 = smul.addr 4, 41
    %s35 = scalar_lea.vmem %s0, %s34
    %v36 = vld [vmem:[%s35] sm:%s3]
    %s37 = scalar_lea.vmem [#allocation0], 328
    %38 = vst [vmem:[%s37] sm:%s3] %v36
    %s39 = smul.addr 4, 40
    %s40 = scalar_lea.vmem %s0, %s39
    %v41 = vld [vmem:[%s40] sm:%s3]
    %s42 = scalar_lea.vmem [#allocation0], 320
    %43 = vst [vmem:[%s42] sm:%s3] %v41
    %s44 = smul.addr 4, 39
    %s45 = scalar_lea.vmem %s0, %s44
    %v46 = vld [vmem:[%s45] sm:%s3]
    %s47 = scalar_lea.vmem [#allocation0], 312
    %48 = vst [vmem:[%s47] sm:%s3] %v46
    %s49 = smul.addr 4, 38
    %s50 = scalar_lea.vmem %s0, %s49
    %v51 = vld [vmem:[%s50] sm:%s3]
    %s52 = scalar_lea.vmem [#allocation0], 304
    %53 = vst [vmem:[%s52] sm:%s3] %v51
    %s54 = smul.addr 4, 37
    %s55 = scalar_lea.vmem %s0, %s54
    %v56 = vld [vmem:[%s55] sm:%s3]
    %s57 = scalar_lea.vmem [#allocation0], 296
    %58 = vst [vmem:[%s57] sm:%s3] %v56
    %s59 = smul.addr 4, 36
    %s60 = scalar_lea.vmem %s0, %s59
    %v61 = vld [vmem:[%s60] sm:%s3]
    %s62 = scalar_lea.vmem [#allocation0], 288
    %63 = vst [vmem:[%s62] sm:%s3] %v61
    %s64 = smul.addr 4, 35
    %s65 = scalar_lea.vmem %s0, %s64
    %v66 = vld [vmem:[%s65] sm:%s3]
    %s67 = scalar_lea.vmem [#allocation0], 280
    %68 = vst [vmem:[%s67] sm:%s3] %v66
    %s69 = smul.addr 4, 34
    %s70 = scalar_lea.vmem %s0, %s69
    %v71 = vld [vmem:[%s70] sm:%s3]
    %s72 = scalar_lea.vmem [#allocation0], 272
    %73 = vst [vmem:[%s72] sm:%s3] %v71
    %s74 = smul.addr 4, 33
    %s75 = scalar_lea.vmem %s0, %s74
    %v76 = vld [vmem:[%s75] sm:%s3]
    %s77 = scalar_lea.vmem [#allocation0], 264
    %78 = vst [vmem:[%s77] sm:%s3] %v76
    %s79 = smul.addr 4, 32
    %s80 = scalar_lea.vmem %s0, %s79
    %v81 = vld [vmem:[%s80] sm:%s3]
    %s82 = scalar_lea.vmem [#allocation0], 256
    %83 = vst [vmem:[%s82] sm:%s3] %v81
    %s84 = smul.addr 4, 31
    %s85 = scalar_lea.vmem %s0, %s84
    %v86 = vld [vmem:[%s85] sm:%s3]
    %s87 = scalar_lea.vmem [#allocation0], 248
    %88 = vst [vmem:[%s87] sm:%s3] %v86
    %s89 = smul.addr 4, 30
    %s90 = scalar_lea.vmem %s0, %s89
    %v91 = vld [vmem:[%s90] sm:%s3]
    %s92 = scalar_lea.vmem [#allocation0], 240
    %93 = vst [vmem:[%s92] sm:%s3] %v91
    %s94 = smul.addr 4, 29
    %s95 = scalar_lea.vmem %s0, %s94
    %v96 = vld [vmem:[%s95] sm:%s3]
    %s97 = scalar_lea.vmem [#allocation0], 232
    %98 = vst [vmem:[%s97] sm:%s3] %v96
    %s99 = smul.addr 4, 28
    %s100 = scalar_lea.vmem %s0, %s99
    %v101 = vld [vmem:[%s100] sm:%s3]
    %s102 = scalar_lea.vmem [#allocation0], 224
    %103 = vst [vmem:[%s102] sm:%s3] %v101
    %s104 = smul.addr 4, 27
    %s105 = scalar_lea.vmem %s0, %s104
    %v106 = vld [vmem:[%s105] sm:%s3]
    %s107 = scalar_lea.vmem [#allocation0], 216
    %108 = vst [vmem:[%s107] sm:%s3] %v106
    %s109 = smul.addr 4, 26
    %s110 = scalar_lea.vmem %s0, %s109
    %v111 = vld [vmem:[%s110] sm:%s3]
    %s112 = scalar_lea.vmem [#allocation0], 208
    %113 = vst [vmem:[%s112] sm:%s3] %v111
    %s114 = smul.addr 4, 25
    %s115 = scalar_lea.vmem %s0, %s114
    %v116 = vld [vmem:[%s115] sm:%s3]
    %s117 = scalar_lea.vmem [#allocation0], 200
    %118 = vst [vmem:[%s117] sm:%s3] %v116
    %s119 = smul.addr 4, 24
    %s120 = scalar_lea.vmem %s0, %s119
    %v121 = vld [vmem:[%s120] sm:%s3]
    %s122 = scalar_lea.vmem [#allocation0], 192
    %123 = vst [vmem:[%s122] sm:%s3] %v121
    %s124 = smul.addr 4, 23
    %s125 = scalar_lea.vmem %s0, %s124
    %v126 = vld [vmem:[%s125] sm:%s3]
    %s127 = scalar_lea.vmem [#allocation0], 184
    %128 = vst [vmem:[%s127] sm:%s3] %v126
    %s129 = smul.addr 4, 22
    %s130 = scalar_lea.vmem %s0, %s129
    %v131 = vld [vmem:[%s130] sm:%s3]
    %s132 = scalar_lea.vmem [#allocation0], 176
    %133 = vst [vmem:[%s132] sm:%s3] %v131
    %s134 = smul.addr 4, 21
    %s135 = scalar_lea.vmem %s0, %s134
    %v136 = vld [vmem:[%s135] sm:%s3]
    %s137 = scalar_lea.vmem [#allocation0], 168
    %138 = vst [vmem:[%s137] sm:%s3] %v136
    %s139 = smul.addr 4, 20
    %s140 = scalar_lea.vmem %s0, %s139
    %v141 = vld [vmem:[%s140] sm:%s3]
    %s142 = scalar_lea.vmem [#allocation0], 160
    %143 = vst [vmem:[%s142] sm:%s3] %v141
    %s144 = smul.addr 4, 19
    %s145 = scalar_lea.vmem %s0, %s144
    %v146 = vld [vmem:[%s145] sm:%s3]
    %s147 = scalar_lea.vmem [#allocation0], 152
    %148 = vst [vmem:[%s147] sm:%s3] %v146
    %s149 = smul.addr 4, 18
    %s150 = scalar_lea.vmem %s0, %s149
    %v151 = vld [vmem:[%s150] sm:%s3]
    %s152 = scalar_lea.vmem [#allocation0], 144
    %153 = vst [vmem:[%s152] sm:%s3] %v151
    %s154 = smul.addr 4, 17
    %s155 = scalar_lea.vmem %s0, %s154
    %v156 = vld [vmem:[%s155] sm:%s3]
    %s157 = scalar_lea.vmem [#allocation0], 136
    %158 = vst [vmem:[%s157] sm:%s3] %v156
    %s159 = smul.addr 4, 16
    %s160 = scalar_lea.vmem %s0, %s159
    %v161 = vld [vmem:[%s160] sm:%s3]
    %s162 = scalar_lea.vmem [#allocation0], 128
    %163 = vst [vmem:[%s162] sm:%s3] %v161
    %s164 = smul.addr 4, 15
    %s165 = scalar_lea.vmem %s0, %s164
    %v166 = vld [vmem:[%s165] sm:%s3]
    %s167 = scalar_lea.vmem [#allocation0], 120
    %168 = vst [vmem:[%s167] sm:%s3] %v166
    %s169 = smul.addr 4, 14
    %s170 = scalar_lea.vmem %s0, %s169
    %v171 = vld [vmem:[%s170] sm:%s3]
    %s172 = scalar_lea.vmem [#allocation0], 112
    %173 = vst [vmem:[%s172] sm:%s3] %v171
    %s174 = smul.addr 4, 13
    %s175 = scalar_lea.vmem %s0, %s174
    %v176 = vld [vmem:[%s175] sm:%s3]
    %s177 = scalar_lea.vmem [#allocation0], 104
    %178 = vst [vmem:[%s177] sm:%s3] %v176
    %s179 = smul.addr 4, 12
    %s180 = scalar_lea.vmem %s0, %s179
    %v181 = vld [vmem:[%s180] sm:%s3]
    %s182 = scalar_lea.vmem [#allocation0], 96
    %183 = vst [vmem:[%s182] sm:%s3] %v181
    %s184 = smul.addr 4, 11
    %s185 = scalar_lea.vmem %s0, %s184
    %v186 = vld [vmem:[%s185] sm:%s3]
    %s187 = scalar_lea.vmem [#allocation0], 88
    %188 = vst [vmem:[%s187] sm:%s3] %v186
    %s189 = smul.addr 4, 10
    %s190 = scalar_lea.vmem %s0, %s189
    %v191 = vld [vmem:[%s190] sm:%s3]
    %s192 = scalar_lea.vmem [#allocation0], 80
    %193 = vst [vmem:[%s192] sm:%s3] %v191
    %s194 = smul.addr 4, 9
    %s195 = scalar_lea.vmem %s0, %s194
    %v196 = vld [vmem:[%s195] sm:%s3]
    %s197 = scalar_lea.vmem [#allocation0], 72
    %198 = vst [vmem:[%s197] sm:%s3] %v196
    %s199 = smul.addr 4, 8
    %s200 = scalar_lea.vmem %s0, %s199
    %v201 = vld [vmem:[%s200] sm:%s3]
    %s202 = scalar_lea.vmem [#allocation0], 64
    %203 = vst [vmem:[%s202] sm:%s3] %v201
    %s204 = smul.addr 4, 7
    %s205 = scalar_lea.vmem %s0, %s204
    %v206 = vld [vmem:[%s205] sm:%s3]
    %s207 = scalar_lea.vmem [#allocation0], 56
    %208 = vst [vmem:[%s207] sm:%s3] %v206
    %s209 = smul.addr 4, 6
    %s210 = scalar_lea.vmem %s0, %s209
    %v211 = vld [vmem:[%s210] sm:%s3]
    %s212 = scalar_lea.vmem [#allocation0], 48
    %213 = vst [vmem:[%s212] sm:%s3] %v211
    %s214 = smul.addr 4, 5
    %s215 = scalar_lea.vmem %s0, %s214
    %v216 = vld [vmem:[%s215] sm:%s3]
    %s217 = scalar_lea.vmem [#allocation0], 40
    %218 = vst [vmem:[%s217] sm:%s3] %v216
    %s219 = smul.addr 4, 4
    %s220 = scalar_lea.vmem %s0, %s219
    %v221 = vld [vmem:[%s220] sm:%s3]
    %s222 = scalar_lea.vmem [#allocation0], 32
    %223 = vst [vmem:[%s222] sm:%s3] %v221
    %s224 = smul.addr 4, 3
    %s225 = scalar_lea.vmem %s0, %s224
    %v226 = vld [vmem:[%s225] sm:%s3]
    %s227 = scalar_lea.vmem [#allocation0], 24
    %228 = vst [vmem:[%s227] sm:%s3] %v226
    %s229 = smul.addr 4, 2
    %s230 = scalar_lea.vmem %s0, %s229
    %v231 = vld [vmem:[%s230] sm:%s3]
    %s232 = scalar_lea.vmem [#allocation0], 16
    %233 = vst [vmem:[%s232] sm:%s3] %v231
    %s234 = scalar_lea.vmem %s0, 4
    %v235 = vld [vmem:[%s234] sm:%s3]
    %s236 = scalar_lea.vmem [#allocation0], 8
    %237 = vst [vmem:[%s236] sm:%s3] %v235
    %v238 = vld [vmem:[%s0] sm:%s3]
    %239 = vst [vmem:[#allocation0] sm:%s3] %v238
    %v240 = vld [vmem:[#allocation0] ss:$8 sm:$0xf]
    %v241 = vld [vmem:[#allocation0] ss:$8 sm:$0xf0]
    %vm242 = vcmask 1047556
    %v243 = vsel %vm242, %v241, %v240
    %vm244 = vcmask 392192
    %245 = vst.msk [vmem:[%s1] sm:$0xff] %vm244, %v243
    %s246 = scalar_lea.vmem [#allocation0], 64
    %v247 = vld [vmem:[%s246] ss:$8 sm:$0xf]
    %s248 = scalar_lea.vmem [#allocation0], 64
    %v249 = vld [vmem:[%s248] ss:$8 sm:$0xf0]
    %vm250 = vcmask 1047556
    %v251 = vsel %vm250, %v249, %v247
    %vm252 = vcmask 392192
    %s253 = scalar_lea.vmem %s1, 16
    %254 = vst.msk [vmem:[%s253] sm:$0xff] %vm252, %v251
    %s255 = scalar_lea.vmem [#allocation0], 128
    %v256 = vld [vmem:[%s255] ss:$8 sm:$0xf]
    %s257 = scalar_lea.vmem [#allocation0], 128
    %v258 = vld [vmem:[%s257] ss:$8 sm:$0xf0]
    %vm259 = vcmask 1047556
    %v260 = vsel %vm259, %v258, %v256
    %vm261 = vcmask 392192
    %s262 = scalar_lea.vmem %s1, 32
    %263 = vst.msk [vmem:[%s262] sm:$0xff] %vm261, %v260
    %s264 = scalar_lea.vmem [#allocation0], 192
    %v265 = vld [vmem:[%s264] ss:$8 sm:$0xf]
    %s266 = scalar_lea.vmem [#allocation0], 192
    %v267 = vld [vmem:[%s266] ss:$8 sm:$0xf0]
    %vm268 = vcmask 1047556
    %v269 = vsel %vm268, %v267, %v265
    %vm270 = vcmask 392192
    %s271 = scalar_lea.vmem %s1, 48
    %272 = vst.msk [vmem:[%s271] sm:$0xff] %vm270, %v269
    %s273 = scalar_lea.vmem [#allocation0], 256
    %v274 = vld [vmem:[%s273] ss:$8 sm:$0xf]
    %s275 = scalar_lea.vmem [#allocation0], 256
    %v276 = vld [vmem:[%s275] ss:$8 sm:$0xf0]
    %vm277 = vcmask 1047556
    %v278 = vsel %vm277, %v276, %v274
    %vm279 = vcmask 392192
    %s280 = scalar_lea.vmem %s1, 64
    %281 = vst.msk [vmem:[%s280] sm:$0xff] %vm279, %v278
    %s282 = scalar_lea.vmem [#allocation0], 320
    %v283 = vld [vmem:[%s282] ss:$8 sm:$0xf]
    %s284 = scalar_lea.vmem [#allocation0], 320
    %v285 = vld [vmem:[%s284] ss:$8 sm:$0xf0]
    %vm286 = vcmask 1047556
    %v287 = vsel %vm286, %v285, %v283
    %vm288 = vcmask 392192
    %s289 = scalar_lea.vmem %s1, 80
    %290 = vst.msk [vmem:[%s289] sm:$0xff] %vm288, %v287
    %s291 = scalar_lea.vmem [#allocation0], 2
    %v292 = vld [vmem:[%s291] ss:$8 sm:$0xf]
    %s293 = scalar_lea.vmem [#allocation0], 2
    %v294 = vld [vmem:[%s293] ss:$8 sm:$0xf0]
    %vm295 = vcmask 1047556
    %v296 = vsel %vm295, %v294, %v292
    %s297 = scalar_lea.vmem [#allocation0], 2
    %v298 = vld [vmem:[%s297] ss:$8 sm:$0xf]
    %s299 = scalar_lea.vmem [#allocation0], 2
    %v300 = vld [vmem:[%s299] ss:$8 sm:$0xf0]
    %vm301 = vcmask 1047556
    %v302 = vsel %vm301, %v300, %v298
    %vm303 = vcmask 261120
    %v304 = vsel %vm303, %v302, %v296
    %305 = vrot.lane.b32.xlu0 %v304, 96
    %v306 = vpop.permute.xlu0 %305
    %vm307 = vcmask 130048
    %s308 = scalar_lea.vmem %s1, 8
    %309 = vst.msk [vmem:[%s308] sm:$0xff] %vm307, %v306
    %vm310 = vcmask 1048320
    %311 = vst.msk [vmem:[%s1] sm:$0xff] %vm310, %v306
    %s312 = scalar_lea.vmem [#allocation0], 130
    %v313 = vld [vmem:[%s312] ss:$8 sm:$0xf]
    %s314 = scalar_lea.vmem [#allocation0], 130
    %v315 = vld [vmem:[%s314] ss:$8 sm:$0xf0]
    %vm316 = vcmask 1047556
    %v317 = vsel %vm316, %v315, %v313
    %s318 = scalar_lea.vmem [#allocation0], 130
    %v319 = vld [vmem:[%s318] ss:$8 sm:$0xf]
    %s320 = scalar_lea.vmem [#allocation0], 130
    %v321 = vld [vmem:[%s320] ss:$8 sm:$0xf0]
    %vm322 = vcmask 1047556
    %v323 = vsel %vm322, %v321, %v319
    %vm324 = vcmask 261120
    %v325 = vsel %vm324, %v323, %v317
    %326 = vrot.lane.b32.xlu0 %v325, 96
    %v327 = vpop.permute.xlu0 %326
    %vm328 = vcmask 130048
    %s329 = scalar_lea.vmem %s1, 40
    %330 = vst.msk [vmem:[%s329] sm:$0xff] %vm328, %v327
    %vm331 = vcmask 1048320
    %s332 = scalar_lea.vmem %s1, 32
    %333 = vst.msk [vmem:[%s332] sm:$0xff] %vm331, %v327
    %s334 = scalar_lea.vmem [#allocation0], 258
    %v335 = vld [vmem:[%s334] ss:$8 sm:$0xf]
    %s336 = scalar_lea.vmem [#allocation0], 258
    %v337 = vld [vmem:[%s336] ss:$8 sm:$0xf0]
    %vm338 = vcmask 1047556
    %v339 = vsel %vm338, %v337, %v335
    %s340 = scalar_lea.vmem [#allocation0], 258
    %v341 = vld [vmem:[%s340] ss:$8 sm:$0xf]
    %s342 = scalar_lea.vmem [#allocation0], 258
    %v343 = vld [vmem:[%s342] ss:$8 sm:$0xf0]
    %vm344 = vcmask 1047556
    %v345 = vsel %vm344, %v343, %v341
    %vm346 = vcmask 261120
    %v347 = vsel %vm346, %v345, %v339
    %348 = vrot.lane.b32.xlu0 %v347, 96
    %v349 = vpop.permute.xlu0 %348
    %vm350 = vcmask 130048
    %s351 = scalar_lea.vmem %s1, 72
    %352 = vst.msk [vmem:[%s351] sm:$0xff] %vm350, %v349
    %vm353 = vcmask 1048320
    %s354 = scalar_lea.vmem %s1, 64
    %355 = vst.msk [vmem:[%s354] sm:$0xff] %vm353, %v349
    %s356 = scalar_lea.vmem [#allocation0], 66
    %v357 = vld [vmem:[%s356] ss:$8 sm:$0xf]
    %s358 = scalar_lea.vmem [#allocation0], 66
    %v359 = vld [vmem:[%s358] ss:$8 sm:$0xf0]
    %vm360 = vcmask 1047556
    %v361 = vsel %vm360, %v359, %v357
    %s362 = scalar_lea.vmem [#allocation0], 66
    %v363 = vld [vmem:[%s362] ss:$8 sm:$0xf]
    %s364 = scalar_lea.vmem [#allocation0], 66
    %v365 = vld [vmem:[%s364] ss:$8 sm:$0xf0]
    %vm366 = vcmask 1047556
    %v367 = vsel %vm366, %v365, %v363
    %vm368 = vcmask 261120
    %v369 = vsel %vm368, %v367, %v361
    %370 = vrot.lane.b32.xlu0 %v369, 96
    %v371 = vpop.permute.xlu0 %370
    %vm372 = vcmask 130048
    %s373 = scalar_lea.vmem %s1, 24
    %374 = vst.msk [vmem:[%s373] sm:$0xff] %vm372, %v371
    %vm375 = vcmask 1048320
    %s376 = scalar_lea.vmem %s1, 16
    %377 = vst.msk [vmem:[%s376] sm:$0xff] %vm375, %v371
    %s378 = scalar_lea.vmem [#allocation0], 194
    %v379 = vld [vmem:[%s378] ss:$8 sm:$0xf]
    %s380 = scalar_lea.vmem [#allocation0], 194
    %v381 = vld [vmem:[%s380] ss:$8 sm:$0xf0]
    %vm382 = vcmask 1047556
    %v383 = vsel %vm382, %v381, %v379
    %s384 = scalar_lea.vmem [#allocation0], 194
    %v385 = vld [vmem:[%s384] ss:$8 sm:$0xf]
    %s386 = scalar_lea.vmem [#allocation0], 194
    %v387 = vld [vmem:[%s386] ss:$8 sm:$0xf0]
    %vm388 = vcmask 1047556
    %v389 = vsel %vm388, %v387, %v385
    %vm390 = vcmask 261120
    %v391 = vsel %vm390, %v389, %v383
    %392 = vrot.lane.b32.xlu0 %v391, 96
    %v393 = vpop.permute.xlu0 %392
    %vm394 = vcmask 130048
    %s395 = scalar_lea.vmem %s1, 56
    %396 = vst.msk [vmem:[%s395] sm:$0xff] %vm394, %v393
    %vm397 = vcmask 1048320
    %s398 = scalar_lea.vmem %s1, 48
    %399 = vst.msk [vmem:[%s398] sm:$0xff] %vm397, %v393
    %s400 = scalar_lea.vmem [#allocation0], 322
    %v401 = vld [vmem:[%s400] ss:$8 sm:$0xf]
    %s402 = scalar_lea.vmem [#allocation0], 322
    %v403 = vld [vmem:[%s402] ss:$8 sm:$0xf0]
    %vm404 = vcmask 1047556
    %v405 = vsel %vm404, %v403, %v401
    %s406 = scalar_lea.vmem [#allocation0], 322
    %v407 = vld [vmem:[%s406] ss:$8 sm:$0xf]
    %s408 = scalar_lea.vmem [#allocation0], 322
    %v409 = vld [vmem:[%s408] ss:$8 sm:$0xf0]
    %vm410 = vcmask 1047556
    %v411 = vsel %vm410, %v409, %v407
    %vm412 = vcmask 261120
    %v413 = vsel %vm412, %v411, %v405
    %414 = vrot.lane.b32.xlu0 %v413, 96
    %v415 = vpop.permute.xlu0 %414
    %vm416 = vcmask 130048
    %s417 = scalar_lea.vmem %s1, 88
    %418 = vst.msk [vmem:[%s417] sm:$0xff] %vm416, %v415
    %vm419 = vcmask 1048320
    %s420 = scalar_lea.vmem %s1, 80
    %421 = vst.msk [vmem:[%s420] sm:$0xff] %vm419, %v415
    %s422 = scalar_lea.vmem [#allocation0], 1
    %v423 = vld [vmem:[%s422] ss:$8 sm:$0xf]
    %s424 = scalar_lea.vmem [#allocation0], 1
    %v425 = vld [vmem:[%s424] ss:$8 sm:$0xf0]
    %vm426 = vcmask 1047556
    %v427 = vsel %vm426, %v425, %v423
    %428 = vrot.lane.b32.xlu0 %v427, 48
    %v429 = vpop.permute.xlu0 %428
    %vm430 = vcmask 785792
    %431 = vst.msk [vmem:[%s1] sm:$0xff] %vm430, %v429
    %s432 = scalar_lea.vmem [#allocation0], 129
    %v433 = vld [vmem:[%s432] ss:$8 sm:$0xf]
    %s434 = scalar_lea.vmem [#allocation0], 129
    %v435 = vld [vmem:[%s434] ss:$8 sm:$0xf0]
    %vm436 = vcmask 1047556
    %v437 = vsel %vm436, %v435, %v433
    %438 = vrot.lane.b32.xlu0 %v437, 48
    %v439 = vpop.permute.xlu0 %438
    %vm440 = vcmask 785792
    %s441 = scalar_lea.vmem %s1, 32
    %442 = vst.msk [vmem:[%s441] sm:$0xff] %vm440, %v439
    %s443 = scalar_lea.vmem [#allocation0], 257
    %v444 = vld [vmem:[%s443] ss:$8 sm:$0xf]
    %s445 = scalar_lea.vmem [#allocation0], 257
    %v446 = vld [vmem:[%s445] ss:$8 sm:$0xf0]
    %vm447 = vcmask 1047556
    %v448 = vsel %vm447, %v446, %v444
    %449 = vrot.lane.b32.xlu0 %v448, 48
    %v450 = vpop.permute.xlu0 %449
    %vm451 = vcmask 785792
    %s452 = scalar_lea.vmem %s1, 64
    %453 = vst.msk [vmem:[%s452] sm:$0xff] %vm451, %v450
    %s454 = scalar_lea.vmem [#allocation0], 65
    %v455 = vld [vmem:[%s454] ss:$8 sm:$0xf]
    %s456 = scalar_lea.vmem [#allocation0], 65
    %v457 = vld [vmem:[%s456] ss:$8 sm:$0xf0]
    %vm458 = vcmask 1047556
    %v459 = vsel %vm458, %v457, %v455
    %460 = vrot.lane.b32.xlu0 %v459, 48
    %v461 = vpop.permute.xlu0 %460
    %vm462 = vcmask 785792
    %s463 = scalar_lea.vmem %s1, 16
    %464 = vst.msk [vmem:[%s463] sm:$0xff] %vm462, %v461
    %s465 = scalar_lea.vmem [#allocation0], 193
    %v466 = vld [vmem:[%s465] ss:$8 sm:$0xf]
    %s467 = scalar_lea.vmem [#allocation0], 193
    %v468 = vld [vmem:[%s467] ss:$8 sm:$0xf0]
    %vm469 = vcmask 1047556
    %v470 = vsel %vm469, %v468, %v466
    %471 = vrot.lane.b32.xlu0 %v470, 48
    %v472 = vpop.permute.xlu0 %471
    %vm473 = vcmask 785792
    %s474 = scalar_lea.vmem %s1, 48
    %475 = vst.msk [vmem:[%s474] sm:$0xff] %vm473, %v472
    %s476 = scalar_lea.vmem [#allocation0], 321
    %v477 = vld [vmem:[%s476] ss:$8 sm:$0xf]
    %s478 = scalar_lea.vmem [#allocation0], 321
    %v479 = vld [vmem:[%s478] ss:$8 sm:$0xf0]
    %vm480 = vcmask 1047556
    %v481 = vsel %vm480, %v479, %v477
    %482 = vrot.lane.b32.xlu0 %v481, 48
    %v483 = vpop.permute.xlu0 %482
    %vm484 = vcmask 785792
    %s485 = scalar_lea.vmem %s1, 80
    %486 = vst.msk [vmem:[%s485] sm:$0xff] %vm484, %v483
    %s487 = scalar_lea.vmem [#allocation0], 3
    %v488 = vld [vmem:[%s487] ss:$8 sm:$0xf]
    %s489 = scalar_lea.vmem [#allocation0], 3
    %v490 = vld [vmem:[%s489] ss:$8 sm:$0xf0]
    %vm491 = vcmask 1047556
    %v492 = vsel %vm491, %v490, %v488
    %493 = vrot.lane.b32.xlu0 %v492, 16
    %v494 = vpop.permute.xlu0 %493
    %vm495 = vcmask 523392
    %s496 = scalar_lea.vmem %s1, 8
    %497 = vst.msk [vmem:[%s496] sm:$0xff] %vm495, %v494
    %s498 = scalar_lea.vmem [#allocation0], 131
    %v499 = vld [vmem:[%s498] ss:$8 sm:$0xf]
    %s500 = scalar_lea.vmem [#allocation0], 131
    %v501 = vld [vmem:[%s500] ss:$8 sm:$0xf0]
    %vm502 = vcmask 1047556
    %v503 = vsel %vm502, %v501, %v499
    %504 = vrot.lane.b32.xlu0 %v503, 16
    %v505 = vpop.permute.xlu0 %504
    %vm506 = vcmask 523392
    %s507 = scalar_lea.vmem %s1, 40
    %508 = vst.msk [vmem:[%s507] sm:$0xff] %vm506, %v505
    %s509 = scalar_lea.vmem [#allocation0], 259
    %v510 = vld [vmem:[%s509] ss:$8 sm:$0xf]
    %s511 = scalar_lea.vmem [#allocation0], 259
    %v512 = vld [vmem:[%s511] ss:$8 sm:$0xf0]
    %vm513 = vcmask 1047556
    %v514 = vsel %vm513, %v512, %v510
    %515 = vrot.lane.b32.xlu0 %v514, 16
    %v516 = vpop.permute.xlu0 %515
    %vm517 = vcmask 523392
    %s518 = scalar_lea.vmem %s1, 72
    %519 = vst.msk [vmem:[%s518] sm:$0xff] %vm517, %v516
    %s520 = scalar_lea.vmem [#allocation0], 67
    %v521 = vld [vmem:[%s520] ss:$8 sm:$0xf]
    %s522 = scalar_lea.vmem [#allocation0], 67
    %v523 = vld [vmem:[%s522] ss:$8 sm:$0xf0]
    %vm524 = vcmask 1047556
    %v525 = vsel %vm524, %v523, %v521
    %526 = vrot.lane.b32.xlu0 %v525, 16
    %v527 = vpop.permute.xlu0 %526
    %vm528 = vcmask 523392
    %s529 = scalar_lea.vmem %s1, 24
    %530 = vst.msk [vmem:[%s529] sm:$0xff] %vm528, %v527
    %s531 = scalar_lea.vmem [#allocation0], 195
    %v532 = vld [vmem:[%s531] ss:$8 sm:$0xf]
    %s533 = scalar_lea.vmem [#allocation0], 195
    %v534 = vld [vmem:[%s533] ss:$8 sm:$0xf0]
    %vm535 = vcmask 1047556
    %v536 = vsel %vm535, %v534, %v532
    %537 = vrot.lane.b32.xlu0 %v536, 16
    %v538 = vpop.permute.xlu0 %537
    %vm539 = vcmask 523392
    %s540 = scalar_lea.vmem %s1, 56
    %541 = vst.msk [vmem:[%s540] sm:$0xff] %vm539, %v538
    %s542 = scalar_lea.vmem [#allocation0], 323
    %v543 = vld [vmem:[%s542] ss:$8 sm:$0xf]
    %s544 = scalar_lea.vmem [#allocation0], 323
    %v545 = vld [vmem:[%s544] ss:$8 sm:$0xf0]
    %vm546 = vcmask 1047556
    %v547 = vsel %vm546, %v545, %v543
    %548 = vrot.lane.b32.xlu0 %v547, 16
    %v549 = vpop.permute.xlu0 %548
    %vm550 = vcmask 523392
    %s551 = scalar_lea.vmem %s1, 88
    %552 = vst.msk [vmem:[%s551] sm:$0xff] %vm550, %v549

// kernel: kgbert_down_triplecls_forward.1
$region0: #{kgbert_down_triplecls_forward.1}
  #allocation0 [shape = 'u32[]', space=smem, size = 0x4, offset = 0x4, fixed_abs, tag = 'smem constant byte address 0x4 - core index']
  #allocation1 [shape = 'u32[144,128]{1,0:T(1,128)}', space=vmem, size = 0x12000, scoped, tag = 'internal scratch']
  %s0 = inlined_call_operand.vmem [shape: f32[242,32], index: 0, kind: input, shape index: {}]
  %s1 = inlined_call_operand.vmem [shape: f32[216,48], index: 1, kind: input, shape index: {}]
  %s2 = inlined_call_operand.vmem [shape: bf16[2,32,256], index: 2, kind: input, shape index: {}]
  %s3 = inlined_call_operand.vmem [shape: bf16[2,128,32], index: 3, kind: input, shape index: {}]
  %s4 = inlined_call_operand.vmem [shape: f32[2,8,128], index: 4, kind: input, shape index: {}]
  %s5 = inlined_call_operand.vmem [shape: f32[33,4], index: 5, kind: input, shape index: {}]
  %s6 = inlined_call_operand.vmem [shape: f32[1,2], index: 6, kind: output, shape index: {}]
  %s7 = sld [smem:[#allocation0]]
  $region34: #{kgbert_down_triplecls_forward.1} parent=0
    _
  %s9 = ssub.s32 1, %s7
  %s10 = scalar_select 0, %s9, %s7
  // Predicated region
  $region2: #{kgbert_down_triplecls_forward.1} parent=0 // pred_check
    _
  $region3: #{kgbert_down_triplecls_forward.1} parent=0 // pred_check_branch
    %12 = sbr.rel (0) target = $region5
  $region4: #{kgbert_down_triplecls_forward.1} parent=0 // pred_region
    _
  $region5: #{kgbert_down_triplecls_forward.1} parent=0 // pred_fallthru
    _
  // Predicated region
  $region6: #{kgbert_down_triplecls_forward.1} parent=0 // pred_check
    _
  $region7: #{kgbert_down_triplecls_forward.1} parent=0 // pred_check_branch
    %14 = sbr.rel (0) target = $region9
  $region8: #{kgbert_down_triplecls_forward.1} parent=0 // pred_region
    _
  $region9: #{kgbert_down_triplecls_forward.1} parent=0 // pred_fallthru
    _
  // Predicated region
  $region10: #{kgbert_down_triplecls_forward.1} parent=0 // pred_check
    _
  $region11: #{kgbert_down_triplecls_forward.1} parent=0 // pred_check_branch
    %16 = sbr.rel (0) target = $region13
  $region12: #{kgbert_down_triplecls_forward.1} parent=0 // pred_region
    _
  $region13: #{kgbert_down_triplecls_forward.1} parent=0 // pred_fallthru
    _
  // Predicated region
  $region14: #{kgbert_down_triplecls_forward.1} parent=0 // pred_check
    _
  $region15: #{kgbert_down_triplecls_forward.1} parent=0 // pred_check_branch
    %18 = sbr.rel (0) target = $region17
  $region16: #{kgbert_down_triplecls_forward.1} parent=0 // pred_region
    _
  $region17: #{kgbert_down_triplecls_forward.1} parent=0 // pred_fallthru
    _
  // Predicated region
  $region18: #{kgbert_down_triplecls_forward.1} parent=0 // pred_check
    _
  $region19: #{kgbert_down_triplecls_forward.1} parent=0 // pred_check_branch
    %20 = sbr.rel (0) target = $region21
  $region20: #{kgbert_down_triplecls_forward.1} parent=0 // pred_region
    _
  $region21: #{kgbert_down_triplecls_forward.1} parent=0 // pred_fallthru
    _
  // Predicated region
  $region22: #{kgbert_down_triplecls_forward.1} parent=0 // pred_check
    _
  $region23: #{kgbert_down_triplecls_forward.1} parent=0 // pred_check_branch
    %22 = sbr.rel (0) target = $region25
  $region24: #{kgbert_down_triplecls_forward.1} parent=0 // pred_region
    _
  $region25: #{kgbert_down_triplecls_forward.1} parent=0 // pred_fallthru
    _
  %v24 = vld [vmem:[%s0] sm:$0xff]
  %v25 = vld [vmem:[%s0 + $0x8] sm:$0xff]
  %v26 = vld [vmem:[%s0 + $0x10] sm:$0xff]
  %v27 = vld [vmem:[%s0 + $0x18] sm:$0xff]
  %v28 = vld [vmem:[%s0 + $0x20] sm:$0xff]
  %v29 = vld [vmem:[%s0 + $0x28] sm:$0xff]
  %v30 = vld [vmem:[%s0 + $0x30] sm:$0xff]
  %v31 = vld [vmem:[%s0 + $0x38] sm:$0xff]
  %v32 = vld [vmem:[%s0 + $0x40] sm:$0xff]
  %v33 = vld [vmem:[%s0 + $0x48] sm:$0xff]
  %v34 = vld [vmem:[%s0 + $0x50] sm:$0xff]
  %v35 = vld [vmem:[%s0 + $0x58] sm:$0xff]
  %v36 = vld [vmem:[%s0 + $0x60] sm:$0xff]
  %v37 = vld [vmem:[%s0 + $0x68] sm:$0xff]
  %v38 = vld [vmem:[%s0 + $0x70] sm:$0xff]
  %v39 = vld [vmem:[%s0 + $0x78] sm:$0xff]
  %v40 = vld [vmem:[%s0 + $0x80] sm:$0xff]
  %v41 = vld [vmem:[%s0 + $0x88] sm:$0xff]
  %v42 = vld [vmem:[%s0 + $0x90] sm:$0xff]
  %v43 = vld [vmem:[%s0 + $0x98] sm:$0xff]
  %v44 = vld [vmem:[%s0 + $0xa0] sm:$0xff]
  %v45 = vld [vmem:[%s0 + $0xa8] sm:$0xff]
  %v46 = vld [vmem:[%s0 + $0xb0] sm:$0xff]
  %v47 = vld [vmem:[%s0 + $0xb8] sm:$0xff]
  %v48 = vld [vmem:[%s0 + $0xc0] sm:$0xff]
  %v49 = vld [vmem:[%s0 + $0xc8] sm:$0xff]
  %v50 = vld [vmem:[%s0 + $0xd0] sm:$0xff]
  %v51 = vld [vmem:[%s0 + $0xd8] sm:$0xff]
  %v52 = vld [vmem:[%s0 + $0xe0] sm:$0xff]
  %v53 = vld [vmem:[%s0 + $0xe8] sm:$0xff]
  %v54 = vld [vmem:[%s0 + $0xf0] sm:$0x1]
  %v55 = vld [vmem:[%s0 + $0xf1] sm:$0x1]
  %v56 = vld [vmem:[%s1] sm:$0xff]
  %v57 = vld [vmem:[%s1 + $0x8] sm:$0xff]
  %v58 = vld [vmem:[%s1 + $0x10] sm:$0xff]
  %v59 = vld [vmem:[%s1 + $0x18] sm:$0xff]
  %v60 = vld [vmem:[%s1 + $0x20] sm:$0xff]
  %v61 = vld [vmem:[%s1 + $0x28] sm:$0xff]
  %v62 = vld [vmem:[%s1 + $0x30] sm:$0xff]
  %v63 = vld [vmem:[%s1 + $0x38] sm:$0xff]
  %v64 = vld [vmem:[%s1 + $0x40] sm:$0xff]
  %v65 = vld [vmem:[%s1 + $0x48] sm:$0xff]
  %v66 = vld [vmem:[%s1 + $0x50] sm:$0xff]
  %v67 = vld [vmem:[%s1 + $0x58] sm:$0xff]
  %v68 = vld [vmem:[%s1 + $0x60] sm:$0xff]
  %v69 = vld [vmem:[%s1 + $0x68] sm:$0xff]
  %v70 = vld [vmem:[%s1 + $0x70] sm:$0xff]
  %v71 = vld [vmem:[%s1 + $0x78] sm:$0xff]
  %v72 = vld [vmem:[%s1 + $0x80] sm:$0xff]
  %v73 = vld [vmem:[%s1 + $0x88] sm:$0xff]
  %v74 = vld [vmem:[%s1 + $0x90] sm:$0xff]
  %v75 = vld [vmem:[%s1 + $0x98] sm:$0xff]
  %v76 = vld [vmem:[%s1 + $0xa0] sm:$0xff]
  %v77 = vld [vmem:[%s1 + $0xa8] sm:$0xff]
  %v78 = vld [vmem:[%s1 + $0xb0] sm:$0xff]
  %v79 = vld [vmem:[%s1 + $0xb8] sm:$0xff]
  %v80 = vld [vmem:[%s1 + $0xc0] sm:$0xff]
  %v81 = vld [vmem:[%s1 + $0xc8] sm:$0xff]
  %v82 = vld [vmem:[%s1 + $0xd0] sm:$0xff]
  %vm83 = vcmask 261120
  %v84 = vsel %vm83, %v24, 0.0
  %85 = vadd.xlane.f32.xlu0 %v84
  %v86 = vpop.xlane.xlu0 %85
  %v87 = vsel %vm83, %v25, 0.0
  %88 = vadd.xlane.f32.xlu0 %v87
  %v89 = vpop.xlane.xlu0 %88
  %v90 = vsel %vm83, %v26, 0.0
  %91 = vadd.xlane.f32.xlu0 %v90
  %v92 = vpop.xlane.xlu0 %91
  %v93 = vsel %vm83, %v27, 0.0
  %94 = vadd.xlane.f32.xlu0 %v93
  %v95 = vpop.xlane.xlu0 %94
  %v96 = vsel %vm83, %v28, 0.0
  %97 = vadd.xlane.f32.xlu0 %v96
  %v98 = vpop.xlane.xlu0 %97
  %v99 = vsel %vm83, %v29, 0.0
  %100 = vadd.xlane.f32.xlu0 %v99
  %v101 = vpop.xlane.xlu0 %100
  %v102 = vrcp.pop 32.0
  %v103 = vmul.f32 %v86, %v102
  %v104 = vmul.f32 %v89, %v102
  %v105 = vmul.f32 %v92, %v102
  %v106 = vmul.f32 %v95, %v102
  %v107 = vmul.f32 %v98, %v102
  %v108 = vmul.f32 %v101, %v102
  %v109 = vsub.f32 %v24, %v103
  %v110 = vsub.f32 %v25, %v104
  %v111 = vsub.f32 %v26, %v105
  %v112 = vsub.f32 %v27, %v106
  %v113 = vsub.f32 %v28, %v107
  %v114 = vsub.f32 %v29, %v108
  %v115 = vmul.f32 %v109, %v109
  %v116 = vmul.f32 %v110, %v110
  %v117 = vmul.f32 %v111, %v111
  %v118 = vmul.f32 %v112, %v112
  %v119 = vmul.f32 %v113, %v113
  %v120 = vmul.f32 %v114, %v114
  %v121 = vsel %vm83, %v115, 0.0
  %122 = vadd.xlane.f32.xlu0 %v121
  %v123 = vpop.xlane.xlu0 %122
  %v124 = vsel %vm83, %v116, 0.0
  %125 = vadd.xlane.f32.xlu0 %v124
  %v126 = vpop.xlane.xlu0 %125
  %v127 = vsel %vm83, %v117, 0.0
  %128 = vadd.xlane.f32.xlu0 %v127
  %v129 = vpop.xlane.xlu0 %128
  %v130 = vsel %vm83, %v118, 0.0
  %131 = vadd.xlane.f32.xlu0 %v130
  %v132 = vpop.xlane.xlu0 %131
  %v133 = vsel %vm83, %v119, 0.0
  %134 = vadd.xlane.f32.xlu0 %v133
  %v135 = vpop.xlane.xlu0 %134
  %v136 = vsel %vm83, %v120, 0.0
  %137 = vadd.xlane.f32.xlu0 %v136
  %v138 = vpop.xlane.xlu0 %137
  %v139 = vmul.f32 %v123, %v102
  %v140 = vmul.f32 %v126, %v102
  %v141 = vmul.f32 %v129, %v102
  %v142 = vmul.f32 %v132, %v102
  %v143 = vmul.f32 %v135, %v102
  %v144 = vmul.f32 %v138, %v102
  %v145 = vadd.f32 %v139, 1e-12
  %v146 = vadd.f32 %v140, 1e-12
  %v147 = vadd.f32 %v141, 1e-12
  %v148 = vadd.f32 %v142, 1e-12
  %v149 = vadd.f32 %v143, 1e-12
  %v150 = vadd.f32 %v144, 1e-12
  %v151 = vrsqrt.pop %v145
  %v152 = vrsqrt.pop %v146
  %v153 = vrsqrt.pop %v147
  %v154 = vrsqrt.pop %v148
  %v155 = vrsqrt.pop %v149
  %v156 = vrsqrt.pop %v150
  %v157 = vmul.f32 %v109, %v151
  %v158 = vmul.f32 %v110, %v152
  %v159 = vmul.f32 %v111, %v153
  %v160 = vmul.f32 %v112, %v154
  %v161 = vmul.f32 %v113, %v155
  %v162 = vmul.f32 %v114, %v156
  %v163 = vlaneseq
  %v164 = vshrl.u32 %v163, 7
  %v165 = vsub.s32 0, %v164
  %v166 = vrot.slane %v54, %v165
  %v167 = vmul.f32 %v157, %v166
  %v168 = vmul.f32 %v158, %v166
  %v169 = vmul.f32 %v159, %v166
  %v170 = vmul.f32 %v160, %v166
  %v171 = vmul.f32 %v161, %v166
  %v172 = vmul.f32 %v162, %v166
  %v173 = vlaneseq
  %v174 = vshrl.u32 %v173, 7
  %v175 = vsub.s32 0, %v174
  %v176 = vrot.slane %v55, %v175
  %v177 = vadd.f32 %v167, %v176
  %v178 = vadd.f32 %v168, %v176
  %v179 = vadd.f32 %v169, %v176
  %v180 = vadd.f32 %v170, %v176
  %v181 = vadd.f32 %v171, %v176
  %v182 = vadd.f32 %v172, %v176
  %v183 = vld [vmem:[%s2] sm:$0xff]
  %v184 = vld [vmem:[%s2 + $0x8] sm:$0xff]
  %v185 = vld [vmem:[%s2 + $0x10] sm:$0xff]
  %v186 = vld [vmem:[%s2 + $0x18] sm:$0xff]
  %v187 = vld [vmem:[%s3] sm:$0xf]
  %v188 = vld [vmem:[%s3 + $0x4] sm:$0xf]
  %v189 = vld [vmem:[%s3 + $0x8] sm:$0xf]
  %v190 = vld [vmem:[%s3 + $0xc] sm:$0xf]
  %v191 = vld [vmem:[%s3 + $0x10] sm:$0xf]
  %v192 = vld [vmem:[%s3 + $0x14] sm:$0xf]
  %v193 = vld [vmem:[%s3 + $0x18] sm:$0xf]
  %v194 = vld [vmem:[%s3 + $0x1c] sm:$0xf]
  %v195 = vld [vmem:[%s3 + $0x20] sm:$0xf]
  %v196 = vld [vmem:[%s3 + $0x24] sm:$0xf]
  %v197 = vld [vmem:[%s3 + $0x28] sm:$0xf]
  %v198 = vld [vmem:[%s3 + $0x2c] sm:$0xf]
  %v199 = vld [vmem:[%s3 + $0x30] sm:$0xf]
  %v200 = vld [vmem:[%s3 + $0x34] sm:$0xf]
  %v201 = vld [vmem:[%s3 + $0x38] sm:$0xf]
  %v202 = vld [vmem:[%s3 + $0x3c] sm:$0xf]
  %v203 = vld [vmem:[%s4] sm:$0xff]
  %v204 = vpack.c.bf16 %v178, %v177
  %v205 = vpack.c.bf16 %v180, %v179
  %v206 = vpack.c.bf16 %v182, %v181
  %v207 = vlaneseq
  %v208 = vshrl.u32 %v207, 7
  %v209 = vsub.s32 0, %v208
  %v210 = vrot.slane %v203, %v209
  %v215 = vunpack.c.l.b16 %v183
  %v216 = vunpack.c.l.b16 %v184
  %v217 = vunpack.c.l.b16 %v185
  %v218 = vunpack.c.l.b16 %v186
  %v219 = vpack.c.b16 %v216, %v215
  %v220 = vpack.c.b16 %v218, %v217
  %v224 = vsel %vm83, %v204, 0
  %v227 = vsel %vm83, %v205, 0
  %v230 = vsel %vm83, %v206, 0
  %232 = vmatprep.subr.bf16.mxu0 0
  %233 = vmatpush1.bf16.msra.mxu0 %v219
  %234 = vmatprep.subr.bf16.mxu0 0
  %235 = vmatpush1.bf16.msra.mxu0 %v220
  %236 = vmatprep.subr.bf16.mxu0 0
  %237 = vmatpush1.bf16.msra.mxu0 0
  %238 = vmatprep.subr.bf16.mxu0 0
  %239 = vmatpush1.bf16.msra.mxu0 0
  %240 = vmatprep.subr.bf16.mxu0 0
  %241 = vmatpush1.bf16.msra.mxu0 0
  %242 = vmatprep.subr.bf16.mxu0 0
  %243 = vmatpush1.bf16.msra.mxu0 0
  %244 = vmatprep.subr.bf16.mxu0 0
  %245 = vmatpush1.bf16.msra.mxu0 0
  %246 = vmatprep.subr.bf16.mxu0 0
  %247 = vmatpush1.bf16.msra.mxu0 0
  %248 = vmatprep.subr.bf16.mxu0 0
  %249 = vmatpush1.bf16.msra.mxu0 0
  %250 = vmatprep.subr.bf16.mxu0 0
  %251 = vmatpush1.bf16.msra.mxu0 0
  %252 = vmatprep.subr.bf16.mxu0 0
  %253 = vmatpush1.bf16.msra.mxu0 0
  %254 = vmatprep.subr.bf16.mxu0 0
  %255 = vmatpush1.bf16.msra.mxu0 0
  %256 = vmatprep.subr.bf16.mxu0 0
  %257 = vmatpush1.bf16.msra.mxu0 0
  %258 = vmatprep.subr.bf16.mxu0 0
  %259 = vmatpush1.bf16.msra.mxu0 0
  %260 = vmatprep.subr.bf16.mxu0 0
  %261 = vmatpush1.bf16.msra.mxu0 0
  %262 = vmatprep.subr.bf16.mxu0 0
  %263 = vmatpush1.bf16.msra.mxu0 0
  %264 = vmatprep.mubr.bf16.mxu0 0
  %265 = vmatmul.mubr.bf16.gmra.mrb[0].mxu0 %v224
  %v266 = vpop.f32.mrb[0].mxu0
  %v267 = vadd.f32 %v210, %v266
  %v268 = vpop.f32.mrb[0].mxu0
  %v269 = vpop.f32.mrb[0].mxu0
  %v270 = vadd.f32 %v210, %v269
  %v271 = vpop.f32.mrb[0].mxu0
  %272 = vmatprep.mubr.bf16.mxu0 0
  %273 = vmatmul.mubr.bf16.gmra.mrb[0].mxu0 %v227
  %v274 = vpop.f32.mrb[0].mxu0
  %v275 = vadd.f32 %v210, %v274
  %v276 = vpop.f32.mrb[0].mxu0
  %v277 = vpop.f32.mrb[0].mxu0
  %v278 = vadd.f32 %v210, %v277
  %v279 = vpop.f32.mrb[0].mxu0
  %280 = vmatprep.mubr.bf16.mxu0 0
  %281 = vmatmul.mubr.bf16.gmra.mrb[0].mxu0 %v230
  %v282 = vpop.f32.mrb[0].mxu0
  %v283 = vadd.f32 %v210, %v282
  %v284 = vpop.f32.mrb[0].mxu0
  %v285 = vpop.f32.mrb[0].mxu0
  %v286 = vadd.f32 %v210, %v285
  %v287 = vpop.f32.mrb[0].mxu0
  %288 = vdwg.mxu0
  %v289 = vmul.f32 %v267, %v30
  %v290 = vmul.f32 %v270, %v31
  %v291 = vmul.f32 %v275, %v32
  %v292 = vmul.f32 %v278, %v33
  %v293 = vmul.f32 %v283, %v34
  %v294 = vmul.f32 %v286, %v35
  %v295 = vmul.f32 %v267, %v36
  %v296 = vmul.f32 %v270, %v37
  %v297 = vmul.f32 %v275, %v38
  %v298 = vmul.f32 %v278, %v39
  %v299 = vmul.f32 %v283, %v40
  %v300 = vmul.f32 %v286, %v41
  %v301 = vmul.f32 %v267, %v42
  %v302 = vmul.f32 %v270, %v43
  %v303 = vmul.f32 %v275, %v44
  %v304 = vmul.f32 %v278, %v45
  %v305 = vmul.f32 %v283, %v46
  %v306 = vmul.f32 %v286, %v47
  %v307 = vmul.f32 %v267, %v48
  %v308 = vmul.f32 %v270, %v49
  %v309 = vmul.f32 %v275, %v50
  %v310 = vmul.f32 %v278, %v51
  %v311 = vmul.f32 %v283, %v52
  %v312 = vmul.f32 %v286, %v53
  %v313 = vpack.c.bf16 %v290, %v289
  %v314 = vpack.c.bf16 %v292, %v291
  %v315 = vpack.c.bf16 %v294, %v293
  %v316 = vpack.c.bf16 %v296, %v295
  %v317 = vpack.c.bf16 %v298, %v297
  %v318 = vpack.c.bf16 %v300, %v299
  %v319 = vpack.c.bf16 %v302, %v301
  %v320 = vpack.c.bf16 %v304, %v303
  %v321 = vpack.c.bf16 %v306, %v305
  %v322 = vpack.c.bf16 %v308, %v307
  %v323 = vpack.c.bf16 %v310, %v309
  %v324 = vpack.c.bf16 %v312, %v311
  %v325 = vpack.c.bf16 %v270, %v267
  %v326 = vpack.c.bf16 %v278, %v275
  %v327 = vpack.c.bf16 %v286, %v283
  %331 = vrot.lane.b32.xlu0 %v325, 96
  %v332 = vpop.permute.xlu0 %331
  %333 = vrot.lane.b32.xlu0 %v326, 96
  %v334 = vpop.permute.xlu0 %333
  %335 = vrot.lane.b32.xlu0 %v327, 96
  %v336 = vpop.permute.xlu0 %335
  %v338 = vsel %vm83, %v313, 0
  %v341 = vsel %vm83, %v314, 0
  %v344 = vsel %vm83, %v315, 0
  %v347 = vsel %vm83, %v316, 0
  %v350 = vsel %vm83, %v317, 0
  %v353 = vsel %vm83, %v318, 0
  %v356 = vsel %vm83, %v319, 0
  %v359 = vsel %vm83, %v320, 0
  %v362 = vsel %vm83, %v321, 0
  %v365 = vsel %vm83, %v322, 0
  %v368 = vsel %vm83, %v323, 0
  %v371 = vsel %vm83, %v324, 0
  %v374 = vsel %vm83, %v332, 0
  %v377 = vsel %vm83, %v334, 0
  %v380 = vsel %vm83, %v336, 0
  %382 = vmatprep.subr.bf16.mxu0 0
  %383 = vmatpush1.bf16.xpose.msra.mxu0 %v374
  %384 = vmatprep.subr.bf16.mxu0 0
  %385 = vmatpush1.bf16.xpose.msra.mxu0 %v377
  %386 = vmatprep.subr.bf16.mxu0 0
  %387 = vmatpush1.bf16.xpose.msra.mxu0 %v380
  %388 = vmatprep.subr.bf16.mxu0 0
  %389 = vmatpush1.bf16.xpose.msra.mxu0 0
  %390 = vmatprep.subr.bf16.mxu0 0
  %391 = vmatpush1.bf16.xpose.msra.mxu0 0
  %392 = vmatprep.subr.bf16.mxu0 0
  %393 = vmatpush1.bf16.xpose.msra.mxu0 0
  %394 = vmatprep.subr.bf16.mxu0 0
  %395 = vmatpush1.bf16.xpose.msra.mxu0 0
  %396 = vmatprep.subr.bf16.mxu0 0
  %397 = vmatpush1.bf16.xpose.msra.mxu0 0
  %398 = vmatprep.subr.bf16.mxu0 0
  %399 = vmatpush1.bf16.xpose.msra.mxu0 0
  %400 = vmatprep.subr.bf16.mxu0 0
  %401 = vmatpush1.bf16.xpose.msra.mxu0 0
  %402 = vmatprep.subr.bf16.mxu0 0
  %403 = vmatpush1.bf16.xpose.msra.mxu0 0
  %404 = vmatprep.subr.bf16.mxu0 0
  %405 = vmatpush1.bf16.xpose.msra.mxu0 0
  %406 = vmatprep.subr.bf16.mxu0 0
  %407 = vmatpush1.bf16.xpose.msra.mxu0 0
  %408 = vmatprep.subr.bf16.mxu0 0
  %409 = vmatpush1.bf16.xpose.msra.mxu0 0
  %410 = vmatprep.subr.bf16.mxu0 0
  %411 = vmatpush1.bf16.xpose.msra.mxu0 0
  %412 = vmatprep.subr.bf16.mxu0 0
  %413 = vmatpush1.bf16.xpose.msra.mxu0 0
  %414 = vmatprep.mubr.bf16.mxu0 0
  %415 = vmatmul.mubr.bf16.gmra.mrb[0].mxu0 %v338
  %v416 = vpop.f32.mrb[0].mxu0
  %v417 = vadd.f32 %v56, %v416
  %v418 = vpop.f32.mrb[0].mxu0
  %v419 = vpop.f32.mrb[0].mxu0
  %v420 = vadd.f32 %v57, %v419
  %v421 = vpop.f32.mrb[0].mxu0
  %422 = vmatprep.mubr.bf16.mxu0 0
  %423 = vmatmul.mubr.bf16.gmra.mrb[0].mxu0 %v341
  %v424 = vpop.f32.mrb[0].mxu0
  %v425 = vadd.f32 %v58, %v424
  %v426 = vpop.f32.mrb[0].mxu0
  %v427 = vpop.f32.mrb[0].mxu0
  %v428 = vadd.f32 %v59, %v427
  %v429 = vpop.f32.mrb[0].mxu0
  %430 = vmatprep.mubr.bf16.mxu0 0
  %431 = vmatmul.mubr.bf16.gmra.mrb[0].mxu0 %v344
  %v432 = vpop.f32.mrb[0].mxu0
  %v433 = vadd.f32 %v60, %v432
  %v434 = vpop.f32.mrb[0].mxu0
  %v435 = vpop.f32.mrb[0].mxu0
  %v436 = vadd.f32 %v61, %v435
  %v437 = vpop.f32.mrb[0].mxu0
  %438 = vmatprep.mubr.bf16.mxu0 0
  %439 = vmatmul.mubr.bf16.gmra.mrb[0].mxu0 %v347
  %v440 = vpop.f32.mrb[0].mxu0
  %v441 = vadd.f32 %v62, %v440
  %v442 = vpop.f32.mrb[0].mxu0
  %v443 = vpop.f32.mrb[0].mxu0
  %v444 = vadd.f32 %v63, %v443
  %v445 = vpop.f32.mrb[0].mxu0
  %446 = vmatprep.mubr.bf16.mxu0 0
  %447 = vmatmul.mubr.bf16.gmra.mrb[0].mxu0 %v350
  %v448 = vpop.f32.mrb[0].mxu0
  %v449 = vadd.f32 %v64, %v448
  %v450 = vpop.f32.mrb[0].mxu0
  %v451 = vpop.f32.mrb[0].mxu0
  %v452 = vadd.f32 %v65, %v451
  %v453 = vpop.f32.mrb[0].mxu0
  %454 = vmatprep.mubr.bf16.mxu0 0
  %455 = vmatmul.mubr.bf16.gmra.mrb[0].mxu0 %v353
  %v456 = vpop.f32.mrb[0].mxu0
  %v457 = vadd.f32 %v66, %v456
  %v458 = vpop.f32.mrb[0].mxu0
  %v459 = vpop.f32.mrb[0].mxu0
  %v460 = vadd.f32 %v67, %v459
  %v461 = vpop.f32.mrb[0].mxu0
  %462 = vmatprep.mubr.bf16.mxu0 0
  %463 = vmatmul.mubr.bf16.gmra.mrb[0].mxu0 %v356
  %v464 = vpop.f32.mrb[0].mxu0
  %v465 = vadd.f32 %v68, %v464
  %v466 = vpop.f32.mrb[0].mxu0
  %v467 = vpop.f32.mrb[0].mxu0
  %v468 = vadd.f32 %v69, %v467
  %v469 = vpop.f32.mrb[0].mxu0
  %470 = vmatprep.mubr.bf16.mxu0 0
  %471 = vmatmul.mubr.bf16.gmra.mrb[0].mxu0 %v359
  %v472 = vpop.f32.mrb[0].mxu0
  %v473 = vadd.f32 %v70, %v472
  %v474 = vpop.f32.mrb[0].mxu0
  %v475 = vpop.f32.mrb[0].mxu0
  %v476 = vadd.f32 %v71, %v475
  %v477 = vpop.f32.mrb[0].mxu0
  %478 = vmatprep.mubr.bf16.mxu0 0
  %479 = vmatmul.mubr.bf16.gmra.mrb[0].mxu0 %v362
  %v480 = vpop.f32.mrb[0].mxu0
  %v481 = vadd.f32 %v72, %v480
  %v482 = vpop.f32.mrb[0].mxu0
  %v483 = vpop.f32.mrb[0].mxu0
  %v484 = vadd.f32 %v73, %v483
  %v485 = vpop.f32.mrb[0].mxu0
  %486 = vmatprep.mubr.bf16.mxu0 0
  %487 = vmatmul.mubr.bf16.gmra.mrb[0].mxu0 %v365
  %v488 = vpop.f32.mrb[0].mxu0
  %v489 = vadd.f32 %v74, %v488
  %v490 = vpop.f32.mrb[0].mxu0
  %v491 = vpop.f32.mrb[0].mxu0
  %v492 = vadd.f32 %v75, %v491
  %v493 = vpop.f32.mrb[0].mxu0
  %494 = vmatprep.mubr.bf16.mxu0 0
  %495 = vmatmul.mubr.bf16.gmra.mrb[0].mxu0 %v368
  %v496 = vpop.f32.mrb[0].mxu0
  %v497 = vadd.f32 %v76, %v496
  %v498 = vpop.f32.mrb[0].mxu0
  %v499 = vpop.f32.mrb[0].mxu0
  %v500 = vadd.f32 %v77, %v499
  %v501 = vpop.f32.mrb[0].mxu0
  %502 = vmatprep.mubr.bf16.mxu0 0
  %503 = vmatmul.mubr.bf16.gmra.mrb[0].mxu0 %v371
  %v504 = vpop.f32.mrb[0].mxu0
  %v505 = vadd.f32 %v78, %v504
  %v506 = vpop.f32.mrb[0].mxu0
  %v507 = vpop.f32.mrb[0].mxu0
  %v508 = vadd.f32 %v79, %v507
  %v509 = vpop.f32.mrb[0].mxu0
  %510 = vdwg.mxu0
  %vm511 = vcmask 392192
  %v512 = vsel %vm511, %v417, -inf
  %513 = vmax.xlane.f32.xlu0 %v512
  %v514 = vpop.xlane.xlu0 %513
  %v515 = vsel %vm511, %v420, -inf
  %516 = vmax.xlane.f32.xlu0 %v515
  %v517 = vpop.xlane.xlu0 %516
  %v518 = vsel %vm511, %v425, -inf
  %519 = vmax.xlane.f32.xlu0 %v518
  %v520 = vpop.xlane.xlu0 %519
  %v521 = vsel %vm511, %v428, -inf
  %522 = vmax.xlane.f32.xlu0 %v521
  %v523 = vpop.xlane.xlu0 %522
  %v524 = vsel %vm511, %v433, -inf
  %525 = vmax.xlane.f32.xlu0 %v524
  %v526 = vpop.xlane.xlu0 %525
  %v527 = vsel %vm511, %v436, -inf
  %528 = vmax.xlane.f32.xlu0 %v527
  %v529 = vpop.xlane.xlu0 %528
  %v530 = vsel %vm511, %v441, -inf
  %531 = vmax.xlane.f32.xlu0 %v530
  %v532 = vpop.xlane.xlu0 %531
  %v533 = vsel %vm511, %v444, -inf
  %534 = vmax.xlane.f32.xlu0 %v533
  %v535 = vpop.xlane.xlu0 %534
  %v536 = vsel %vm511, %v449, -inf
  %537 = vmax.xlane.f32.xlu0 %v536
  %v538 = vpop.xlane.xlu0 %537
  %v539 = vsel %vm511, %v452, -inf
  %540 = vmax.xlane.f32.xlu0 %v539
  %v541 = vpop.xlane.xlu0 %540
  %v542 = vsel %vm511, %v457, -inf
  %543 = vmax.xlane.f32.xlu0 %v542
  %v544 = vpop.xlane.xlu0 %543
  %v545 = vsel %vm511, %v460, -inf
  %546 = vmax.xlane.f32.xlu0 %v545
  %v547 = vpop.xlane.xlu0 %546
  %v548 = vsel %vm511, %v465, -inf
  %549 = vmax.xlane.f32.xlu0 %v548
  %v550 = vpop.xlane.xlu0 %549
  %v551 = vsel %vm511, %v468, -inf
  %552 = vmax.xlane.f32.xlu0 %v551
  %v553 = vpop.xlane.xlu0 %552
  %v554 = vsel %vm511, %v473, -inf
  %555 = vmax.xlane.f32.xlu0 %v554
  %v556 = vpop.xlane.xlu0 %555
  %v557 = vsel %vm511, %v476, -inf
  %558 = vmax.xlane.f32.xlu0 %v557
  %v559 = vpop.xlane.xlu0 %558
  %v560 = vsel %vm511, %v481, -inf
  %561 = vmax.xlane.f32.xlu0 %v560
  %v562 = vpop.xlane.xlu0 %561
  %v563 = vsel %vm511, %v484, -inf
  %564 = vmax.xlane.f32.xlu0 %v563
  %v565 = vpop.xlane.xlu0 %564
  %v566 = vsel %vm511, %v489, -inf
  %567 = vmax.xlane.f32.xlu0 %v566
  %v568 = vpop.xlane.xlu0 %567
  %v569 = vsel %vm511, %v492, -inf
  %570 = vmax.xlane.f32.xlu0 %v569
  %v571 = vpop.xlane.xlu0 %570
  %v572 = vsel %vm511, %v497, -inf
  %573 = vmax.xlane.f32.xlu0 %v572
  %v574 = vpop.xlane.xlu0 %573
  %v575 = vsel %vm511, %v500, -inf
  %576 = vmax.xlane.f32.xlu0 %v575
  %v577 = vpop.xlane.xlu0 %576
  %v578 = vsel %vm511, %v505, -inf
  %579 = vmax.xlane.f32.xlu0 %v578
  %v580 = vpop.xlane.xlu0 %579
  %v581 = vsel %vm511, %v508, -inf
  %582 = vmax.xlane.f32.xlu0 %v581
  %v583 = vpop.xlane.xlu0 %582
  %v584 = vsub.f32 %v417, %v514
  %v585 = vsub.f32 %v420, %v517
  %v586 = vsub.f32 %v425, %v520
  %v587 = vsub.f32 %v428, %v523
  %v588 = vsub.f32 %v433, %v526
  %v589 = vsub.f32 %v436, %v529
  %v590 = vsub.f32 %v441, %v532
  %v591 = vsub.f32 %v444, %v535
  %v592 = vsub.f32 %v449, %v538
  %v593 = vsub.f32 %v452, %v541
  %v594 = vsub.f32 %v457, %v544
  %v595 = vsub.f32 %v460, %v547
  %v596 = vsub.f32 %v465, %v550
  %v597 = vsub.f32 %v468, %v553
  %v598 = vsub.f32 %v473, %v556
  %v599 = vsub.f32 %v476, %v559
  %v600 = vsub.f32 %v481, %v562
  %v601 = vsub.f32 %v484, %v565
  %v602 = vsub.f32 %v489, %v568
  %v603 = vsub.f32 %v492, %v571
  %v604 = vsub.f32 %v497, %v574
  %v605 = vsub.f32 %v500, %v577
  %v606 = vsub.f32 %v505, %v580
  %v607 = vsub.f32 %v508, %v583
  %v608 = vmul.f32 %v584, 1.442695
  %v609 = vpow.pop %v608
  %v610 = vmul.f32 %v585, 1.442695
  %v611 = vpow.pop %v610
  %v612 = vmul.f32 %v586, 1.442695
  %v613 = vpow.pop %v612
  %v614 = vmul.f32 %v587, 1.442695
  %v615 = vpow.pop %v614
  %v616 = vmul.f32 %v588, 1.442695
  %v617 = vpow.pop %v616
  %v618 = vmul.f32 %v589, 1.442695
  %v619 = vpow.pop %v618
  %v620 = vmul.f32 %v590, 1.442695
  %v621 = vpow.pop %v620
  %v622 = vmul.f32 %v591, 1.442695
  %v623 = vpow.pop %v622
  %v624 = vmul.f32 %v592, 1.442695
  %v625 = vpow.pop %v624
  %v626 = vmul.f32 %v593, 1.442695
  %v627 = vpow.pop %v626
  %v628 = vmul.f32 %v594, 1.442695
  %v629 = vpow.pop %v628
  %v630 = vmul.f32 %v595, 1.442695
  %v631 = vpow.pop %v630
  %v632 = vmul.f32 %v596, 1.442695
  %v633 = vpow.pop %v632
  %v634 = vmul.f32 %v597, 1.442695
  %v635 = vpow.pop %v634
  %v636 = vmul.f32 %v598, 1.442695
  %v637 = vpow.pop %v636
  %v638 = vmul.f32 %v599, 1.442695
  %v639 = vpow.pop %v638
  %v640 = vmul.f32 %v600, 1.442695
  %v641 = vpow.pop %v640
  %v642 = vmul.f32 %v601, 1.442695
  %v643 = vpow.pop %v642
  %v644 = vmul.f32 %v602, 1.442695
  %v645 = vpow.pop %v644
  %v646 = vmul.f32 %v603, 1.442695
  %v647 = vpow.pop %v646
  %v648 = vmul.f32 %v604, 1.442695
  %v649 = vpow.pop %v648
  %v650 = vmul.f32 %v605, 1.442695
  %v651 = vpow.pop %v650
  %v652 = vmul.f32 %v606, 1.442695
  %v653 = vpow.pop %v652
  %v654 = vmul.f32 %v607, 1.442695
  %v655 = vpow.pop %v654
  %v656 = vsel %vm511, %v609, 0.0
  %657 = vadd.xlane.f32.xlu0 %v656
  %v658 = vpop.xlane.xlu0 %657
  %v659 = vsel %vm511, %v611, 0.0
  %660 = vadd.xlane.f32.xlu0 %v659
  %v661 = vpop.xlane.xlu0 %660
  %v662 = vsel %vm511, %v613, 0.0
  %663 = vadd.xlane.f32.xlu0 %v662
  %v664 = vpop.xlane.xlu0 %663
  %v665 = vsel %vm511, %v615, 0.0
  %666 = vadd.xlane.f32.xlu0 %v665
  %v667 = vpop.xlane.xlu0 %666
  %v668 = vsel %vm511, %v617, 0.0
  %669 = vadd.xlane.f32.xlu0 %v668
  %v670 = vpop.xlane.xlu0 %669
  %v671 = vsel %vm511, %v619, 0.0
  %672 = vadd.xlane.f32.xlu0 %v671
  %v673 = vpop.xlane.xlu0 %672
  %v674 = vsel %vm511, %v621, 0.0
  %675 = vadd.xlane.f32.xlu0 %v674
  %v676 = vpop.xlane.xlu0 %675
  %v677 = vsel %vm511, %v623, 0.0
  %678 = vadd.xlane.f32.xlu0 %v677
  %v679 = vpop.xlane.xlu0 %678
  %v680 = vsel %vm511, %v625, 0.0
  %681 = vadd.xlane.f32.xlu0 %v680
  %v682 = vpop.xlane.xlu0 %681
  %v683 = vsel %vm511, %v627, 0.0
  %684 = vadd.xlane.f32.xlu0 %v683
  %v685 = vpop.xlane.xlu0 %684
  %v686 = vsel %vm511, %v629, 0.0
  %687 = vadd.xlane.f32.xlu0 %v686
  %v688 = vpop.xlane.xlu0 %687
  %v689 = vsel %vm511, %v631, 0.0
  %690 = vadd.xlane.f32.xlu0 %v689
  %v691 = vpop.xlane.xlu0 %690
  %v692 = vsel %vm511, %v633, 0.0
  %693 = vadd.xlane.f32.xlu0 %v692
  %v694 = vpop.xlane.xlu0 %693
  %v695 = vsel %vm511, %v635, 0.0
  %696 = vadd.xlane.f32.xlu0 %v695
  %v697 = vpop.xlane.xlu0 %696
  %v698 = vsel %vm511, %v637, 0.0
  %699 = vadd.xlane.f32.xlu0 %v698
  %v700 = vpop.xlane.xlu0 %699
  %v701 = vsel %vm511, %v639, 0.0
  %702 = vadd.xlane.f32.xlu0 %v701
  %v703 = vpop.xlane.xlu0 %702
  %v704 = vsel %vm511, %v641, 0.0
  %705 = vadd.xlane.f32.xlu0 %v704
  %v706 = vpop.xlane.xlu0 %705
  %v707 = vsel %vm511, %v643, 0.0
  %708 = vadd.xlane.f32.xlu0 %v707
  %v709 = vpop.xlane.xlu0 %708
  %v710 = vsel %vm511, %v645, 0.0
  %711 = vadd.xlane.f32.xlu0 %v710
  %v712 = vpop.xlane.xlu0 %711
  %v713 = vsel %vm511, %v647, 0.0
  %714 = vadd.xlane.f32.xlu0 %v713
  %v715 = vpop.xlane.xlu0 %714
  %v716 = vsel %vm511, %v649, 0.0
  %717 = vadd.xlane.f32.xlu0 %v716
  %v718 = vpop.xlane.xlu0 %717
  %v719 = vsel %vm511, %v651, 0.0
  %720 = vadd.xlane.f32.xlu0 %v719
  %v721 = vpop.xlane.xlu0 %720
  %v722 = vsel %vm511, %v653, 0.0
  %723 = vadd.xlane.f32.xlu0 %v722
  %v724 = vpop.xlane.xlu0 %723
  %v725 = vsel %vm511, %v655, 0.0
  %726 = vadd.xlane.f32.xlu0 %v725
  %v727 = vpop.xlane.xlu0 %726
  %v728 = vrcp.pop %v658
  %v729 = vrcp.pop %v661
  %v730 = vrcp.pop %v664
  %v731 = vrcp.pop %v667
  %v732 = vrcp.pop %v670
  %v733 = vrcp.pop %v673
  %v734 = vrcp.pop %v676
  %v735 = vrcp.pop %v679
  %v736 = vrcp.pop %v682
  %v737 = vrcp.pop %v685
  %v738 = vrcp.pop %v688
  %v739 = vrcp.pop %v691
  %v740 = vrcp.pop %v694
  %v741 = vrcp.pop %v697
  %v742 = vrcp.pop %v700
  %v743 = vrcp.pop %v703
  %v744 = vrcp.pop %v706
  %v745 = vrcp.pop %v709
  %v746 = vrcp.pop %v712
  %v747 = vrcp.pop %v715
  %v748 = vrcp.pop %v718
  %v749 = vrcp.pop %v721
  %v750 = vrcp.pop %v724
  %v751 = vrcp.pop %v727
  %v752 = vmul.f32 %v609, %v728
  %v753 = vmul.f32 %v611, %v729
  %v754 = vmul.f32 %v613, %v730
  %v755 = vmul.f32 %v615, %v731
  %v756 = vmul.f32 %v617, %v732
  %v757 = vmul.f32 %v619, %v733
  %v758 = vmul.f32 %v621, %v734
  %v759 = vmul.f32 %v623, %v735
  %v760 = vmul.f32 %v625, %v736
  %v761 = vmul.f32 %v627, %v737
  %v762 = vmul.f32 %v629, %v738
  %v763 = vmul.f32 %v631, %v739
  %v764 = vmul.f32 %v633, %v740
  %v765 = vmul.f32 %v635, %v741
  %v766 = vmul.f32 %v637, %v742
  %v767 = vmul.f32 %v639, %v743
  %v768 = vmul.f32 %v641, %v744
  %v769 = vmul.f32 %v643, %v745
  %v770 = vmul.f32 %v645, %v746
  %v771 = vmul.f32 %v647, %v747
  %v772 = vmul.f32 %v649, %v748
  %v773 = vmul.f32 %v651, %v749
  %v774 = vmul.f32 %v653, %v750
  %v775 = vmul.f32 %v655, %v751
  %v776 = vpack.c.bf16 %v753, %v752
  %v777 = vpack.c.bf16 %v755, %v754
  %v778 = vpack.c.bf16 %v757, %v756
  %v779 = vpack.c.bf16 %v759, %v758
  %v780 = vpack.c.bf16 %v761, %v760
  %v781 = vpack.c.bf16 %v763, %v762
  %v782 = vpack.c.bf16 %v765, %v764
  %v783 = vpack.c.bf16 %v767, %v766
  %v784 = vpack.c.bf16 %v769, %v768
  %v785 = vpack.c.bf16 %v771, %v770
  %v786 = vpack.c.bf16 %v773, %v772
  %v787 = vpack.c.bf16 %v775, %v774
  %788 = vrot.lane.b32.xlu0 %v325, 64
  %v789 = vpop.permute.xlu0 %788
  %790 = vrot.lane.b32.xlu0 %v326, 64
  %v791 = vpop.permute.xlu0 %790
  %792 = vrot.lane.b32.xlu0 %v327, 64
  %v793 = vpop.permute.xlu0 %792
  %v798 = vsel %vm511, %v776, 0
  %v801 = vsel %vm511, %v777, 0
  %v804 = vsel %vm511, %v778, 0
  %v807 = vsel %vm511, %v779, 0
  %v810 = vsel %vm511, %v780, 0
  %v813 = vsel %vm511, %v781, 0
  %v816 = vsel %vm511, %v782, 0
  %v819 = vsel %vm511, %v783, 0
  %v822 = vsel %vm511, %v784, 0
  %v825 = vsel %vm511, %v785, 0
  %v828 = vsel %vm511, %v786, 0
  %v831 = vsel %vm511, %v787, 0
  %833 = vmatprep.subr.bf16.mxu0 0
  %834 = vmatpush1.bf16.msra.mxu0 %v789
  %835 = vmatprep.subr.bf16.mxu0 0
  %836 = vmatpush1.bf16.msra.mxu0 %v791
  %837 = vmatprep.subr.bf16.mxu0 0
  %838 = vmatpush1.bf16.msra.mxu0 %v793
  %839 = vmatprep.subr.bf16.mxu0 0
  %840 = vmatpush1.bf16.msra.mxu0 0
  %841 = vmatprep.subr.bf16.mxu0 0
  %842 = vmatpush1.bf16.msra.mxu0 0
  %843 = vmatprep.subr.bf16.mxu0 0
  %844 = vmatpush1.bf16.msra.mxu0 0
  %845 = vmatprep.subr.bf16.mxu0 0
  %846 = vmatpush1.bf16.msra.mxu0 0
  %847 = vmatprep.subr.bf16.mxu0 0
  %848 = vmatpush1.bf16.msra.mxu0 0
  %849 = vmatprep.subr.bf16.mxu0 0
  %850 = vmatpush1.bf16.msra.mxu0 0
  %851 = vmatprep.subr.bf16.mxu0 0
  %852 = vmatpush1.bf16.msra.mxu0 0
  %853 = vmatprep.subr.bf16.mxu0 0
  %854 = vmatpush1.bf16.msra.mxu0 0
  %855 = vmatprep.subr.bf16.mxu0 0
  %856 = vmatpush1.bf16.msra.mxu0 0
  %857 = vmatprep.subr.bf16.mxu0 0
  %858 = vmatpush1.bf16.msra.mxu0 0
  %859 = vmatprep.subr.bf16.mxu0 0
  %860 = vmatpush1.bf16.msra.mxu0 0
  %861 = vmatprep.subr.bf16.mxu0 0
  %862 = vmatpush1.bf16.msra.mxu0 0
  %863 = vmatprep.subr.bf16.mxu0 0
  %864 = vmatpush1.bf16.msra.mxu0 0
  %865 = vmatprep.mubr.bf16.mxu0 0
  %866 = vmatmul.mubr.bf16.gmra.mrb[0].mxu0 %v798
  %v867 = vpop.f32.mrb[0].mxu0
  %v868 = vadd.f32 0.0, %v867
  %v869 = vpop.f32.mrb[0].mxu0
  %v870 = vpop.f32.mrb[0].mxu0
  %v871 = vadd.f32 0.0, %v870
  %v872 = vpop.f32.mrb[0].mxu0
  %873 = vmatprep.mubr.bf16.mxu0 0
  %874 = vmatmul.mubr.bf16.gmra.mrb[0].mxu0 %v801
  %v875 = vpop.f32.mrb[0].mxu0
  %v876 = vadd.f32 0.0, %v875
  %v877 = vpop.f32.mrb[0].mxu0
  %v878 = vpop.f32.mrb[0].mxu0
  %v879 = vadd.f32 0.0, %v878
  %v880 = vpop.f32.mrb[0].mxu0
  %881 = vmatprep.mubr.bf16.mxu0 0
  %882 = vmatmul.mubr.bf16.gmra.mrb[0].mxu0 %v804
  %v883 = vpop.f32.mrb[0].mxu0
  %v884 = vadd.f32 0.0, %v883
  %v885 = vpop.f32.mrb[0].mxu0
  %v886 = vpop.f32.mrb[0].mxu0
  %v887 = vadd.f32 0.0, %v886
  %v888 = vpop.f32.mrb[0].mxu0
  %889 = vmatprep.mubr.bf16.mxu0 0
  %890 = vmatmul.mubr.bf16.gmra.mrb[0].mxu0 %v807
  %v891 = vpop.f32.mrb[0].mxu0
  %v892 = vadd.f32 0.0, %v891
  %v893 = vpop.f32.mrb[0].mxu0
  %v894 = vpop.f32.mrb[0].mxu0
  %v895 = vadd.f32 0.0, %v894
  %v896 = vpop.f32.mrb[0].mxu0
  %897 = vmatprep.mubr.bf16.mxu0 0
  %898 = vmatmul.mubr.bf16.gmra.mrb[0].mxu0 %v810
  %v899 = vpop.f32.mrb[0].mxu0
  %v900 = vadd.f32 0.0, %v899
  %v901 = vpop.f32.mrb[0].mxu0
  %v902 = vpop.f32.mrb[0].mxu0
  %v903 = vadd.f32 0.0, %v902
  %v904 = vpop.f32.mrb[0].mxu0
  %905 = vmatprep.mubr.bf16.mxu0 0
  %906 = vmatmul.mubr.bf16.gmra.mrb[0].mxu0 %v813
  %v907 = vpop.f32.mrb[0].mxu0
  %v908 = vadd.f32 0.0, %v907
  %v909 = vpop.f32.mrb[0].mxu0
  %v910 = vpop.f32.mrb[0].mxu0
  %v911 = vadd.f32 0.0, %v910
  %v912 = vpop.f32.mrb[0].mxu0
  %913 = vmatprep.mubr.bf16.mxu0 0
  %914 = vmatmul.mubr.bf16.gmra.mrb[0].mxu0 %v816
  %v915 = vpop.f32.mrb[0].mxu0
  %v916 = vadd.f32 0.0, %v915
  %v917 = vpop.f32.mrb[0].mxu0
  %v918 = vpop.f32.mrb[0].mxu0
  %v919 = vadd.f32 0.0, %v918
  %v920 = vpop.f32.mrb[0].mxu0
  %921 = vmatprep.mubr.bf16.mxu0 0
  %922 = vmatmul.mubr.bf16.gmra.mrb[0].mxu0 %v819
  %v923 = vpop.f32.mrb[0].mxu0
  %v924 = vadd.f32 0.0, %v923
  %v925 = vpop.f32.mrb[0].mxu0
  %v926 = vpop.f32.mrb[0].mxu0
  %v927 = vadd.f32 0.0, %v926
  %v928 = vpop.f32.mrb[0].mxu0
  %929 = vmatprep.mubr.bf16.mxu0 0
  %930 = vmatmul.mubr.bf16.gmra.mrb[0].mxu0 %v822
  %v931 = vpop.f32.mrb[0].mxu0
  %v932 = vadd.f32 0.0, %v931
  %v933 = vpop.f32.mrb[0].mxu0
  %v934 = vpop.f32.mrb[0].mxu0
  %v935 = vadd.f32 0.0, %v934
  %v936 = vpop.f32.mrb[0].mxu0
  %937 = vmatprep.mubr.bf16.mxu0 0
  %938 = vmatmul.mubr.bf16.gmra.mrb[0].mxu0 %v825
  %v939 = vpop.f32.mrb[0].mxu0
  %v940 = vadd.f32 0.0, %v939
  %v941 = vpop.f32.mrb[0].mxu0
  %v942 = vpop.f32.mrb[0].mxu0
  %v943 = vadd.f32 0.0, %v942
  %v944 = vpop.f32.mrb[0].mxu0
  %945 = vmatprep.mubr.bf16.mxu0 0
  %946 = vmatmul.mubr.bf16.gmra.mrb[0].mxu0 %v828
  %v947 = vpop.f32.mrb[0].mxu0
  %v948 = vadd.f32 0.0, %v947
  %v949 = vpop.f32.mrb[0].mxu0
  %v950 = vpop.f32.mrb[0].mxu0
  %v951 = vadd.f32 0.0, %v950
  %v952 = vpop.f32.mrb[0].mxu0
  %953 = vmatprep.mubr.bf16.mxu0 0
  %954 = vmatmul.mubr.bf16.gmra.mrb[0].mxu0 %v831
  %v955 = vpop.f32.mrb[0].mxu0
  %v956 = vadd.f32 0.0, %v955
  %v957 = vpop.f32.mrb[0].mxu0
  %v958 = vpop.f32.mrb[0].mxu0
  %v959 = vadd.f32 0.0, %v958
  %v960 = vpop.f32.mrb[0].mxu0
  %961 = vdwg.mxu0
  %v962 = vmul.f32 %v868, %v30
  %v963 = vmul.f32 %v871, %v31
  %v964 = vmul.f32 %v876, %v32
  %v965 = vmul.f32 %v879, %v33
  %v966 = vmul.f32 %v884, %v34
  %v967 = vmul.f32 %v887, %v35
  %v968 = vmul.f32 %v892, %v36
  %v969 = vmul.f32 %v895, %v37
  %v970 = vmul.f32 %v900, %v38
  %v971 = vmul.f32 %v903, %v39
  %v972 = vmul.f32 %v908, %v40
  %v973 = vmul.f32 %v911, %v41
  %v974 = vmul.f32 %v916, %v42
  %v975 = vmul.f32 %v919, %v43
  %v976 = vmul.f32 %v924, %v44
  %v977 = vmul.f32 %v927, %v45
  %v978 = vmul.f32 %v932, %v46
  %v979 = vmul.f32 %v935, %v47
  %v980 = vmul.f32 %v940, %v48
  %v981 = vmul.f32 %v943, %v49
  %v982 = vmul.f32 %v948, %v50
  %v983 = vmul.f32 %v951, %v51
  %v984 = vmul.f32 %v956, %v52
  %v985 = vmul.f32 %v959, %v53
  %v986 = vadd.f32 %v962, %v968
  %v987 = vadd.f32 %v963, %v969
  %v988 = vadd.f32 %v964, %v970
  %v989 = vadd.f32 %v965, %v971
  %v990 = vadd.f32 %v966, %v972
  %v991 = vadd.f32 %v967, %v973
  %v992 = vadd.f32 %v986, %v974
  %v993 = vadd.f32 %v987, %v975
  %v994 = vadd.f32 %v988, %v976
  %v995 = vadd.f32 %v989, %v977
  %v996 = vadd.f32 %v990, %v978
  %v997 = vadd.f32 %v991, %v979
  %v998 = vadd.f32 %v992, %v980
  %v999 = vadd.f32 %v993, %v981
  %v1000 = vadd.f32 %v994, %v982
  %v1001 = vadd.f32 %v995, %v983
  %v1002 = vadd.f32 %v996, %v984
  %v1003 = vadd.f32 %v997, %v985
  %v1004 = vpack.c.bf16 %v999, %v998
  %v1005 = vpack.c.bf16 %v1001, %v1000
  %v1006 = vpack.c.bf16 %v1003, %v1002
  %v1007 = vlaneseq
  %v1008 = vshrl.u32 %v1007, 7
  %v1009 = vsub.s32 1, %v1008
  %v1010 = vrot.slane %v203, %v1009
  %1011 = vrot.lane.b32.xlu0 %v219, 32
  %v1012 = vpop.permute.xlu0 %1011
  %1013 = vrot.lane.b32.xlu0 %v220, 32
  %v1014 = vpop.permute.xlu0 %1013
  %v1018 = vsel %vm83, %v1004, 0
  %v1021 = vsel %vm83, %v1005, 0
  %v1024 = vsel %vm83, %v1006, 0
  %1026 = vmatprep.subr.bf16.mxu0 0
  %1027 = vmatpush1.bf16.msra.mxu0 %v1012
  %1028 = vmatprep.subr.bf16.mxu0 0
  %1029 = vmatpush1.bf16.msra.mxu0 %v1014
  %1030 = vmatprep.subr.bf16.mxu0 0
  %1031 = vmatpush1.bf16.msra.mxu0 0
  %1032 = vmatprep.subr.bf16.mxu0 0
  %1033 = vmatpush1.bf16.msra.mxu0 0
  %1034 = vmatprep.subr.bf16.mxu0 0
  %1035 = vmatpush1.bf16.msra.mxu0 0
  %1036 = vmatprep.subr.bf16.mxu0 0
  %1037 = vmatpush1.bf16.msra.mxu0 0
  %1038 = vmatprep.subr.bf16.mxu0 0
  %1039 = vmatpush1.bf16.msra.mxu0 0
  %1040 = vmatprep.subr.bf16.mxu0 0
  %1041 = vmatpush1.bf16.msra.mxu0 0
  %1042 = vmatprep.subr.bf16.mxu0 0
  %1043 = vmatpush1.bf16.msra.mxu0 0
  %1044 = vmatprep.subr.bf16.mxu0 0
  %1045 = vmatpush1.bf16.msra.mxu0 0
  %1046 = vmatprep.subr.bf16.mxu0 0
  %1047 = vmatpush1.bf16.msra.mxu0 0
  %1048 = vmatprep.subr.bf16.mxu0 0
  %1049 = vmatpush1.bf16.msra.mxu0 0
  %1050 = vmatprep.subr.bf16.mxu0 0
  %1051 = vmatpush1.bf16.msra.mxu0 0
  %1052 = vmatprep.subr.bf16.mxu0 0
  %1053 = vmatpush1.bf16.msra.mxu0 0
  %1054 = vmatprep.subr.bf16.mxu0 0
  %1055 = vmatpush1.bf16.msra.mxu0 0
  %1056 = vmatprep.subr.bf16.mxu0 0
  %1057 = vmatpush1.bf16.msra.mxu0 0
  %1058 = vmatprep.mubr.bf16.mxu0 0
  %1059 = vmatmul.mubr.bf16.gmra.mrb[0].mxu0 %v1018
  %v1060 = vpop.f32.mrb[0].mxu0
  %v1061 = vadd.f32 %v1010, %v1060
  %v1062 = vpop.f32.mrb[0].mxu0
  %v1063 = vpop.f32.mrb[0].mxu0
  %v1064 = vadd.f32 %v1010, %v1063
  %v1065 = vpop.f32.mrb[0].mxu0
  %1066 = vmatprep.mubr.bf16.mxu0 0
  %1067 = vmatmul.mubr.bf16.gmra.mrb[0].mxu0 %v1021
  %v1068 = vpop.f32.mrb[0].mxu0
  %v1069 = vadd.f32 %v1010, %v1068
  %v1070 = vpop.f32.mrb[0].mxu0
  %v1071 = vpop.f32.mrb[0].mxu0
  %v1072 = vadd.f32 %v1010, %v1071
  %v1073 = vpop.f32.mrb[0].mxu0
  %1074 = vmatprep.mubr.bf16.mxu0 0
  %1075 = vmatmul.mubr.bf16.gmra.mrb[0].mxu0 %v1024
  %v1076 = vpop.f32.mrb[0].mxu0
  %v1077 = vadd.f32 %v1010, %v1076
  %v1078 = vpop.f32.mrb[0].mxu0
  %v1079 = vpop.f32.mrb[0].mxu0
  %v1080 = vadd.f32 %v1010, %v1079
  %v1081 = vpop.f32.mrb[0].mxu0
  %1082 = vdwg.mxu0
  %v1083 = vadd.f32 %v177, %v1061
  %v1084 = vadd.f32 %v178, %v1064
  %v1085 = vadd.f32 %v179, %v1069
  %v1086 = vadd.f32 %v180, %v1072
  %v1087 = vadd.f32 %v181, %v1077
  %v1088 = vadd.f32 %v182, %v1080
  %v1089 = vsel %vm83, %v1083, 0.0
  %1090 = vadd.xlane.f32.xlu0 %v1089
  %v1091 = vpop.xlane.xlu0 %1090
  %v1092 = vsel %vm83, %v1084, 0.0
  %1093 = vadd.xlane.f32.xlu0 %v1092
  %v1094 = vpop.xlane.xlu0 %1093
  %v1095 = vsel %vm83, %v1085, 0.0
  %1096 = vadd.xlane.f32.xlu0 %v1095
  %v1097 = vpop.xlane.xlu0 %1096
  %v1098 = vsel %vm83, %v1086, 0.0
  %1099 = vadd.xlane.f32.xlu0 %v1098
  %v1100 = vpop.xlane.xlu0 %1099
  %v1101 = vsel %vm83, %v1087, 0.0
  %1102 = vadd.xlane.f32.xlu0 %v1101
  %v1103 = vpop.xlane.xlu0 %1102
  %v1104 = vsel %vm83, %v1088, 0.0
  %1105 = vadd.xlane.f32.xlu0 %v1104
  %v1106 = vpop.xlane.xlu0 %1105
  %v1107 = vmul.f32 %v1091, %v102
  %v1108 = vmul.f32 %v1094, %v102
  %v1109 = vmul.f32 %v1097, %v102
  %v1110 = vmul.f32 %v1100, %v102
  %v1111 = vmul.f32 %v1103, %v102
  %v1112 = vmul.f32 %v1106, %v102
  %v1113 = vsub.f32 %v1083, %v1107
  %v1114 = vsub.f32 %v1084, %v1108
  %v1115 = vsub.f32 %v1085, %v1109
  %v1116 = vsub.f32 %v1086, %v1110
  %v1117 = vsub.f32 %v1087, %v1111
  %v1118 = vsub.f32 %v1088, %v1112
  %v1119 = vmul.f32 %v1113, %v1113
  %v1120 = vmul.f32 %v1114, %v1114
  %v1121 = vmul.f32 %v1115, %v1115
  %v1122 = vmul.f32 %v1116, %v1116
  %v1123 = vmul.f32 %v1117, %v1117
  %v1124 = vmul.f32 %v1118, %v1118
  %v1125 = vsel %vm83, %v1119, 0.0
  %1126 = vadd.xlane.f32.xlu0 %v1125
  %v1127 = vpop.xlane.xlu0 %1126
  %v1128 = vsel %vm83, %v1120, 0.0
  %1129 = vadd.xlane.f32.xlu0 %v1128
  %v1130 = vpop.xlane.xlu0 %1129
  %v1131 = vsel %vm83, %v1121, 0.0
  %1132 = vadd.xlane.f32.xlu0 %v1131
  %v1133 = vpop.xlane.xlu0 %1132
  %v1134 = vsel %vm83, %v1122, 0.0
  %1135 = vadd.xlane.f32.xlu0 %v1134
  %v1136 = vpop.xlane.xlu0 %1135
  %v1137 = vsel %vm83, %v1123, 0.0
  %1138 = vadd.xlane.f32.xlu0 %v1137
  %v1139 = vpop.xlane.xlu0 %1138
  %v1140 = vsel %vm83, %v1124, 0.0
  %1141 = vadd.xlane.f32.xlu0 %v1140
  %v1142 = vpop.xlane.xlu0 %1141
  %v1143 = vmul.f32 %v1127, %v102
  %v1144 = vmul.f32 %v1130, %v102
  %v1145 = vmul.f32 %v1133, %v102
  %v1146 = vmul.f32 %v1136, %v102
  %v1147 = vmul.f32 %v1139, %v102
  %v1148 = vmul.f32 %v1142, %v102
  %v1149 = vadd.f32 %v1143, 1e-12
  %v1150 = vadd.f32 %v1144, 1e-12
  %v1151 = vadd.f32 %v1145, 1e-12
  %v1152 = vadd.f32 %v1146, 1e-12
  %v1153 = vadd.f32 %v1147, 1e-12
  %v1154 = vadd.f32 %v1148, 1e-12
  %v1155 = vrsqrt.pop %v1149
  %v1156 = vrsqrt.pop %v1150
  %v1157 = vrsqrt.pop %v1151
  %v1158 = vrsqrt.pop %v1152
  %v1159 = vrsqrt.pop %v1153
  %v1160 = vrsqrt.pop %v1154
  %v1161 = vmul.f32 %v1113, %v1155
  %v1162 = vmul.f32 %v1114, %v1156
  %v1163 = vmul.f32 %v1115, %v1157
  %v1164 = vmul.f32 %v1116, %v1158
  %v1165 = vmul.f32 %v1117, %v1159
  %v1166 = vmul.f32 %v1118, %v1160
  %v1167 = vlaneseq
  %v1168 = vshrl.u32 %v1167, 7
  %v1169 = vsub.s32 2, %v1168
  %v1170 = vrot.slane %v203, %v1169
  %v1171 = vmul.f32 %v1161, %v1170
  %v1172 = vmul.f32 %v1162, %v1170
  %v1173 = vmul.f32 %v1163, %v1170
  %v1174 = vmul.f32 %v1164, %v1170
  %v1175 = vmul.f32 %v1165, %v1170
  %v1176 = vmul.f32 %v1166, %v1170
  %v1177 = vlaneseq
  %v1178 = vshrl.u32 %v1177, 7
  %v1179 = vsub.s32 3, %v1178
  %v1180 = vrot.slane %v203, %v1179
  %v1181 = vadd.f32 %v1171, %v1180
  %v1182 = vadd.f32 %v1172, %v1180
  %v1183 = vadd.f32 %v1173, %v1180
  %v1184 = vadd.f32 %v1174, %v1180
  %v1185 = vadd.f32 %v1175, %v1180
  %v1186 = vadd.f32 %v1176, %v1180
  %v1187 = vpack.c.bf16 %v1182, %v1181
  %v1188 = vpack.c.bf16 %v1184, %v1183
  %v1189 = vpack.c.bf16 %v1186, %v1185
  %v1190 = vlaneseq
  %v1191 = vshrl.u32 %v1190, 7
  %v1192 = vsub.s32 4, %v1191
  %v1193 = vrot.slane %v203, %v1192
  %v1194 = vunpack.c.h.b16 %v183
  %v1195 = vunpack.c.h.b16 %v184
  %v1196 = vunpack.c.h.b16 %v185
  %v1197 = vunpack.c.h.b16 %v186
  %v1198 = vpack.c.b16 %v1195, %v1194
  %v1199 = vpack.c.b16 %v1197, %v1196
  %v1203 = vsel %vm83, %v1187, 0
  %v1206 = vsel %vm83, %v1188, 0
  %v1209 = vsel %vm83, %v1189, 0
  %1211 = vmatprep.subr.bf16.mxu0 0
  %1212 = vmatpush1.bf16.msra.mxu0 %v1198
  %1213 = vmatprep.subr.bf16.mxu0 0
  %1214 = vmatpush1.bf16.msra.mxu0 %v1199
  %1215 = vmatprep.subr.bf16.mxu0 0
  %1216 = vmatpush1.bf16.msra.mxu0 0
  %1217 = vmatprep.subr.bf16.mxu0 0
  %1218 = vmatpush1.bf16.msra.mxu0 0
  %1219 = vmatprep.subr.bf16.mxu0 0
  %1220 = vmatpush1.bf16.msra.mxu0 0
  %1221 = vmatprep.subr.bf16.mxu0 0
  %1222 = vmatpush1.bf16.msra.mxu0 0
  %1223 = vmatprep.subr.bf16.mxu0 0
  %1224 = vmatpush1.bf16.msra.mxu0 0
  %1225 = vmatprep.subr.bf16.mxu0 0
  %1226 = vmatpush1.bf16.msra.mxu0 0
  %1227 = vmatprep.subr.bf16.mxu0 0
  %1228 = vmatpush1.bf16.msra.mxu0 0
  %1229 = vmatprep.subr.bf16.mxu0 0
  %1230 = vmatpush1.bf16.msra.mxu0 0
  %1231 = vmatprep.subr.bf16.mxu0 0
  %1232 = vmatpush1.bf16.msra.mxu0 0
  %1233 = vmatprep.subr.bf16.mxu0 0
  %1234 = vmatpush1.bf16.msra.mxu0 0
  %1235 = vmatprep.subr.bf16.mxu0 0
  %1236 = vmatpush1.bf16.msra.mxu0 0
  %1237 = vmatprep.subr.bf16.mxu0 0
  %1238 = vmatpush1.bf16.msra.mxu0 0
  %1239 = vmatprep.subr.bf16.mxu0 0
  %1240 = vmatpush1.bf16.msra.mxu0 0
  %1241 = vmatprep.subr.bf16.mxu0 0
  %1242 = vmatpush1.bf16.msra.mxu0 0
  %1243 = vmatprep.mubr.bf16.mxu0 0
  %1244 = vmatmul.mubr.bf16.gmra.mrb[0].mxu0 %v1203
  %v1245 = vpop.f32.mrb[0].mxu0
  %v1246 = vadd.f32 %v1193, %v1245
  %v1247 = vpop.f32.mrb[0].mxu0
  %v1248 = vpop.f32.mrb[0].mxu0
  %v1249 = vadd.f32 %v1193, %v1248
  %v1250 = vpop.f32.mrb[0].mxu0
  %1251 = vmatprep.mubr.bf16.mxu0 0
  %1252 = vmatmul.mubr.bf16.gmra.mrb[0].mxu0 %v1206
  %v1253 = vpop.f32.mrb[0].mxu0
  %v1254 = vadd.f32 %v1193, %v1253
  %v1255 = vpop.f32.mrb[0].mxu0
  %v1256 = vpop.f32.mrb[0].mxu0
  %v1257 = vadd.f32 %v1193, %v1256
  %v1258 = vpop.f32.mrb[0].mxu0
  %1259 = vmatprep.mubr.bf16.mxu0 0
  %1260 = vmatmul.mubr.bf16.gmra.mrb[0].mxu0 %v1209
  %v1261 = vpop.f32.mrb[0].mxu0
  %v1262 = vadd.f32 %v1193, %v1261
  %v1263 = vpop.f32.mrb[0].mxu0
  %v1264 = vpop.f32.mrb[0].mxu0
  %v1265 = vadd.f32 %v1193, %v1264
  %v1266 = vpop.f32.mrb[0].mxu0
  %1267 = vdwg.mxu0
  %v1268 = vmul.f32 %v1246, 0.5
  %v1269 = vmul.f32 %v1249, 0.5
  %v1270 = vmul.f32 %v1254, 0.5
  %v1271 = vmul.f32 %v1257, 0.5
  %v1272 = vmul.f32 %v1262, 0.5
  %v1273 = vmul.f32 %v1265, 0.5
  %v1274 = vmul.f32 %v1246, 0.044715
  %v1275 = vmul.f32 %v1249, 0.044715
  %v1276 = vmul.f32 %v1254, 0.044715
  %v1277 = vmul.f32 %v1257, 0.044715
  %v1278 = vmul.f32 %v1262, 0.044715
  %v1279 = vmul.f32 %v1265, 0.044715
  %v1280 = vmul.f32 %v1274, %v1246
  %v1281 = vmul.f32 %v1275, %v1249
  %v1282 = vmul.f32 %v1276, %v1254
  %v1283 = vmul.f32 %v1277, %v1257
  %v1284 = vmul.f32 %v1278, %v1262
  %v1285 = vmul.f32 %v1279, %v1265
  %v1286 = vmul.f32 %v1280, %v1246
  %v1287 = vmul.f32 %v1281, %v1249
  %v1288 = vmul.f32 %v1282, %v1254
  %v1289 = vmul.f32 %v1283, %v1257
  %v1290 = vmul.f32 %v1284, %v1262
  %v1291 = vmul.f32 %v1285, %v1265
  %v1292 = vadd.f32 %v1246, %v1286
  %v1293 = vadd.f32 %v1249, %v1287
  %v1294 = vadd.f32 %v1254, %v1288
  %v1295 = vadd.f32 %v1257, %v1289
  %v1296 = vadd.f32 %v1262, %v1290
  %v1297 = vadd.f32 %v1265, %v1291
  %v1298 = vmul.f32 %v1292, 0.7978846
  %v1299 = vmul.f32 %v1293, 0.7978846
  %v1300 = vmul.f32 %v1294, 0.7978846
  %v1301 = vmul.f32 %v1295, 0.7978846
  %v1302 = vmul.f32 %v1296, 0.7978846
  %v1303 = vmul.f32 %v1297, 0.7978846
  %v1304 = vtanh.pop %v1298
  %v1305 = vtanh.pop %v1299
  %v1306 = vtanh.pop %v1300
  %v1307 = vtanh.pop %v1301
  %v1308 = vtanh.pop %v1302
  %v1309 = vtanh.pop %v1303
  %v1310 = vadd.f32 %v1304, 1.0
  %v1311 = vadd.f32 %v1305, 1.0
  %v1312 = vadd.f32 %v1306, 1.0
  %v1313 = vadd.f32 %v1307, 1.0
  %v1314 = vadd.f32 %v1308, 1.0
  %v1315 = vadd.f32 %v1309, 1.0
  %v1316 = vmul.f32 %v1268, %v1310
  %v1317 = vmul.f32 %v1269, %v1311
  %v1318 = vmul.f32 %v1270, %v1312
  %v1319 = vmul.f32 %v1271, %v1313
  %v1320 = vmul.f32 %v1272, %v1314
  %v1321 = vmul.f32 %v1273, %v1315
  %v1322 = vpack.c.bf16 %v1317, %v1316
  %v1323 = vpack.c.bf16 %v1319, %v1318
  %v1324 = vpack.c.bf16 %v1321, %v1320
  %v1325 = vlaneseq
  %v1326 = vshrl.u32 %v1325, 7
  %v1327 = vsub.s32 5, %v1326
  %v1328 = vrot.slane %v203, %v1327
  %v1345 = vunpack.c.l.b16 %v187
  %v1346 = vunpack.c.l.b16 %v188
  %v1347 = vunpack.c.l.b16 %v189
  %v1348 = vunpack.c.l.b16 %v190
  %v1349 = vunpack.c.l.b16 %v191
  %v1350 = vunpack.c.l.b16 %v192
  %v1351 = vunpack.c.l.b16 %v193
  %v1352 = vunpack.c.l.b16 %v194
  %v1353 = vunpack.c.l.b16 %v195
  %v1354 = vunpack.c.l.b16 %v196
  %v1355 = vunpack.c.l.b16 %v197
  %v1356 = vunpack.c.l.b16 %v198
  %v1357 = vunpack.c.l.b16 %v199
  %v1358 = vunpack.c.l.b16 %v200
  %v1359 = vunpack.c.l.b16 %v201
  %v1360 = vunpack.c.l.b16 %v202
  %v1361 = vpack.c.b16 %v1346, %v1345
  %v1362 = vpack.c.b16 %v1348, %v1347
  %v1363 = vpack.c.b16 %v1350, %v1349
  %v1364 = vpack.c.b16 %v1352, %v1351
  %v1365 = vpack.c.b16 %v1354, %v1353
  %v1366 = vpack.c.b16 %v1356, %v1355
  %v1367 = vpack.c.b16 %v1358, %v1357
  %v1368 = vpack.c.b16 %v1360, %v1359
  %1377 = vmatprep.subr.bf16.mxu0 0
  %1378 = vmatpush1.bf16.msra.mxu0 %v1361
  %1379 = vmatprep.subr.bf16.mxu0 0
  %1380 = vmatpush1.bf16.msra.mxu0 %v1362
  %1381 = vmatprep.subr.bf16.mxu0 0
  %1382 = vmatpush1.bf16.msra.mxu0 %v1363
  %1383 = vmatprep.subr.bf16.mxu0 0
  %1384 = vmatpush1.bf16.msra.mxu0 %v1364
  %1385 = vmatprep.subr.bf16.mxu0 0
  %1386 = vmatpush1.bf16.msra.mxu0 %v1365
  %1387 = vmatprep.subr.bf16.mxu0 0
  %1388 = vmatpush1.bf16.msra.mxu0 %v1366
  %1389 = vmatprep.subr.bf16.mxu0 0
  %1390 = vmatpush1.bf16.msra.mxu0 %v1367
  %1391 = vmatprep.subr.bf16.mxu0 0
  %1392 = vmatpush1.bf16.msra.mxu0 %v1368
  %1393 = vmatprep.subr.bf16.mxu0 0
  %1394 = vmatpush1.bf16.msra.mxu0 0
  %1395 = vmatprep.subr.bf16.mxu0 0
  %1396 = vmatpush1.bf16.msra.mxu0 0
  %1397 = vmatprep.subr.bf16.mxu0 0
  %1398 = vmatpush1.bf16.msra.mxu0 0
  %1399 = vmatprep.subr.bf16.mxu0 0
  %1400 = vmatpush1.bf16.msra.mxu0 0
  %1401 = vmatprep.subr.bf16.mxu0 0
  %1402 = vmatpush1.bf16.msra.mxu0 0
  %1403 = vmatprep.subr.bf16.mxu0 0
  %1404 = vmatpush1.bf16.msra.mxu0 0
  %1405 = vmatprep.subr.bf16.mxu0 0
  %1406 = vmatpush1.bf16.msra.mxu0 0
  %1407 = vmatprep.subr.bf16.mxu0 0
  %1408 = vmatpush1.bf16.msra.mxu0 0
  %1409 = vmatprep.mubr.bf16.mxu0 0
  %1410 = vmatmul.mubr.bf16.gmra.mrb[0].mxu0 %v1322
  %v1411 = vpop.f32.mrb[0].mxu0
  %v1412 = vadd.f32 %v1328, %v1411
  %v1413 = vpop.f32.mrb[0].mxu0
  %v1414 = vpop.f32.mrb[0].mxu0
  %v1415 = vadd.f32 %v1328, %v1414
  %v1416 = vpop.f32.mrb[0].mxu0
  %1417 = vmatprep.mubr.bf16.mxu0 0
  %1418 = vmatmul.mubr.bf16.gmra.mrb[0].mxu0 %v1323
  %v1419 = vpop.f32.mrb[0].mxu0
  %v1420 = vadd.f32 %v1328, %v1419
  %v1421 = vpop.f32.mrb[0].mxu0
  %v1422 = vpop.f32.mrb[0].mxu0
  %v1423 = vadd.f32 %v1328, %v1422
  %v1424 = vpop.f32.mrb[0].mxu0
  %1425 = vmatprep.mubr.bf16.mxu0 0
  %1426 = vmatmul.mubr.bf16.gmra.mrb[0].mxu0 %v1324
  %v1427 = vpop.f32.mrb[0].mxu0
  %v1428 = vadd.f32 %v1328, %v1427
  %v1429 = vpop.f32.mrb[0].mxu0
  %v1430 = vpop.f32.mrb[0].mxu0
  %v1431 = vadd.f32 %v1328, %v1430
  %v1432 = vpop.f32.mrb[0].mxu0
  %1433 = vdwg.mxu0
  %v1434 = vadd.f32 %v1181, %v1412
  %v1435 = vadd.f32 %v1182, %v1415
  %v1436 = vadd.f32 %v1183, %v1420
  %v1437 = vadd.f32 %v1184, %v1423
  %v1438 = vadd.f32 %v1185, %v1428
  %v1439 = vadd.f32 %v1186, %v1431
  %v1440 = vsel %vm83, %v1434, 0.0
  %1441 = vadd.xlane.f32.xlu0 %v1440
  %v1442 = vpop.xlane.xlu0 %1441
  %v1443 = vsel %vm83, %v1435, 0.0
  %1444 = vadd.xlane.f32.xlu0 %v1443
  %v1445 = vpop.xlane.xlu0 %1444
  %v1446 = vsel %vm83, %v1436, 0.0
  %1447 = vadd.xlane.f32.xlu0 %v1446
  %v1448 = vpop.xlane.xlu0 %1447
  %v1449 = vsel %vm83, %v1437, 0.0
  %1450 = vadd.xlane.f32.xlu0 %v1449
  %v1451 = vpop.xlane.xlu0 %1450
  %v1452 = vsel %vm83, %v1438, 0.0
  %1453 = vadd.xlane.f32.xlu0 %v1452
  %v1454 = vpop.xlane.xlu0 %1453
  %v1455 = vsel %vm83, %v1439, 0.0
  %1456 = vadd.xlane.f32.xlu0 %v1455
  %v1457 = vpop.xlane.xlu0 %1456
  %v1458 = vmul.f32 %v1442, %v102
  %v1459 = vmul.f32 %v1445, %v102
  %v1460 = vmul.f32 %v1448, %v102
  %v1461 = vmul.f32 %v1451, %v102
  %v1462 = vmul.f32 %v1454, %v102
  %v1463 = vmul.f32 %v1457, %v102
  %v1464 = vsub.f32 %v1434, %v1458
  %v1465 = vsub.f32 %v1435, %v1459
  %v1466 = vsub.f32 %v1436, %v1460
  %v1467 = vsub.f32 %v1437, %v1461
  %v1468 = vsub.f32 %v1438, %v1462
  %v1469 = vsub.f32 %v1439, %v1463
  %v1470 = vmul.f32 %v1464, %v1464
  %v1471 = vmul.f32 %v1465, %v1465
  %v1472 = vmul.f32 %v1466, %v1466
  %v1473 = vmul.f32 %v1467, %v1467
  %v1474 = vmul.f32 %v1468, %v1468
  %v1475 = vmul.f32 %v1469, %v1469
  %v1476 = vsel %vm83, %v1470, 0.0
  %1477 = vadd.xlane.f32.xlu0 %v1476
  %v1478 = vpop.xlane.xlu0 %1477
  %v1479 = vsel %vm83, %v1471, 0.0
  %1480 = vadd.xlane.f32.xlu0 %v1479
  %v1481 = vpop.xlane.xlu0 %1480
  %v1482 = vsel %vm83, %v1472, 0.0
  %1483 = vadd.xlane.f32.xlu0 %v1482
  %v1484 = vpop.xlane.xlu0 %1483
  %v1485 = vsel %vm83, %v1473, 0.0
  %1486 = vadd.xlane.f32.xlu0 %v1485
  %v1487 = vpop.xlane.xlu0 %1486
  %v1488 = vsel %vm83, %v1474, 0.0
  %1489 = vadd.xlane.f32.xlu0 %v1488
  %v1490 = vpop.xlane.xlu0 %1489
  %v1491 = vsel %vm83, %v1475, 0.0
  %1492 = vadd.xlane.f32.xlu0 %v1491
  %v1493 = vpop.xlane.xlu0 %1492
  %v1494 = vmul.f32 %v1478, %v102
  %v1495 = vmul.f32 %v1481, %v102
  %v1496 = vmul.f32 %v1484, %v102
  %v1497 = vmul.f32 %v1487, %v102
  %v1498 = vmul.f32 %v1490, %v102
  %v1499 = vmul.f32 %v1493, %v102
  %v1500 = vadd.f32 %v1494, 1e-12
  %v1501 = vadd.f32 %v1495, 1e-12
  %v1502 = vadd.f32 %v1496, 1e-12
  %v1503 = vadd.f32 %v1497, 1e-12
  %v1504 = vadd.f32 %v1498, 1e-12
  %v1505 = vadd.f32 %v1499, 1e-12
  %v1506 = vrsqrt.pop %v1500
  %v1507 = vrsqrt.pop %v1501
  %v1508 = vrsqrt.pop %v1502
  %v1509 = vrsqrt.pop %v1503
  %v1510 = vrsqrt.pop %v1504
  %v1511 = vrsqrt.pop %v1505
  %v1512 = vmul.f32 %v1464, %v1506
  %v1513 = vmul.f32 %v1465, %v1507
  %v1514 = vmul.f32 %v1466, %v1508
  %v1515 = vmul.f32 %v1467, %v1509
  %v1516 = vmul.f32 %v1468, %v1510
  %v1517 = vmul.f32 %v1469, %v1511
  %v1518 = vlaneseq
  %v1519 = vshrl.u32 %v1518, 7
  %v1520 = vsub.s32 6, %v1519
  %v1521 = vrot.slane %v203, %v1520
  %v1522 = vmul.f32 %v1512, %v1521
  %v1523 = vmul.f32 %v1513, %v1521
  %v1524 = vmul.f32 %v1514, %v1521
  %v1525 = vmul.f32 %v1515, %v1521
  %v1526 = vmul.f32 %v1516, %v1521
  %v1527 = vmul.f32 %v1517, %v1521
  %v1528 = vlaneseq
  %v1529 = vshrl.u32 %v1528, 7
  %v1530 = vsub.s32 7, %v1529
  %v1531 = vrot.slane %v203, %v1530
  %v1532 = vadd.f32 %v1522, %v1531
  %v1533 = vadd.f32 %v1523, %v1531
  %v1534 = vadd.f32 %v1524, %v1531
  %v1535 = vadd.f32 %v1525, %v1531
  %v1536 = vadd.f32 %v1526, %v1531
  %v1537 = vadd.f32 %v1527, %v1531
  %s1538 = scalar_lea.vmem %s2, 32
  %v1539 = vld [vmem:[%s1538] sm:$0xff]
  %v1540 = vld [vmem:[%s1538 + $0x8] sm:$0xff]
  %v1541 = vld [vmem:[%s1538 + $0x10] sm:$0xff]
  %v1542 = vld [vmem:[%s1538 + $0x18] sm:$0xff]
  %s1543 = scalar_lea.vmem %s3, 64
  %v1544 = vld [vmem:[%s1543] sm:$0xf]
  %v1545 = vld [vmem:[%s1543 + $0x4] sm:$0xf]
  %v1546 = vld [vmem:[%s1543 + $0x8] sm:$0xf]
  %v1547 = vld [vmem:[%s1543 + $0xc] sm:$0xf]
  %v1548 = vld [vmem:[%s1543 + $0x10] sm:$0xf]
  %v1549 = vld [vmem:[%s1543 + $0x14] sm:$0xf]
  %v1550 = vld [vmem:[%s1543 + $0x18] sm:$0xf]
  %v1551 = vld [vmem:[%s1543 + $0x1c] sm:$0xf]
  %v1552 = vld [vmem:[%s1543 + $0x20] sm:$0xf]
  %v1553 = vld [vmem:[%s1543 + $0x24] sm:$0xf]
  %v1554 = vld [vmem:[%s1543 + $0x28] sm:$0xf]
  %v1555 = vld [vmem:[%s1543 + $0x2c] sm:$0xf]
  %v1556 = vld [vmem:[%s1543 + $0x30] sm:$0xf]
  %v1557 = vld [vmem:[%s1543 + $0x34] sm:$0xf]
  %v1558 = vld [vmem:[%s1543 + $0x38] sm:$0xf]
  %v1559 = vld [vmem:[%s1543 + $0x3c] sm:$0xf]
  %s1560 = scalar_lea.vmem %s4, 8
  %v1561 = vld [vmem:[%s1560] sm:$0xff]
  %v1562 = vpack.c.bf16 %v1533, %v1532
  %v1563 = vpack.c.bf16 %v1535, %v1534
  %v1564 = vpack.c.bf16 %v1537, %v1536
  %v1565 = vlaneseq
  %v1566 = vshrl.u32 %v1565, 7
  %v1567 = vsub.s32 0, %v1566
  %v1568 = vrot.slane %v1561, %v1567
  %v1573 = vunpack.c.l.b16 %v1539
  %v1574 = vunpack.c.l.b16 %v1540
  %v1575 = vunpack.c.l.b16 %v1541
  %v1576 = vunpack.c.l.b16 %v1542
  %v1577 = vpack.c.b16 %v1574, %v1573
  %v1578 = vpack.c.b16 %v1576, %v1575
  %v1582 = vsel %vm83, %v1562, 0
  %v1585 = vsel %vm83, %v1563, 0
  %v1588 = vsel %vm83, %v1564, 0
  %1590 = vmatprep.subr.bf16.mxu0 0
  %1591 = vmatpush1.bf16.msra.mxu0 %v1577
  %1592 = vmatprep.subr.bf16.mxu0 0
  %1593 = vmatpush1.bf16.msra.mxu0 %v1578
  %1594 = vmatprep.subr.bf16.mxu0 0
  %1595 = vmatpush1.bf16.msra.mxu0 0
  %1596 = vmatprep.subr.bf16.mxu0 0
  %1597 = vmatpush1.bf16.msra.mxu0 0
  %1598 = vmatprep.subr.bf16.mxu0 0
  %1599 = vmatpush1.bf16.msra.mxu0 0
  %1600 = vmatprep.subr.bf16.mxu0 0
  %1601 = vmatpush1.bf16.msra.mxu0 0
  %1602 = vmatprep.subr.bf16.mxu0 0
  %1603 = vmatpush1.bf16.msra.mxu0 0
  %1604 = vmatprep.subr.bf16.mxu0 0
  %1605 = vmatpush1.bf16.msra.mxu0 0
  %1606 = vmatprep.subr.bf16.mxu0 0
  %1607 = vmatpush1.bf16.msra.mxu0 0
  %1608 = vmatprep.subr.bf16.mxu0 0
  %1609 = vmatpush1.bf16.msra.mxu0 0
  %1610 = vmatprep.subr.bf16.mxu0 0
  %1611 = vmatpush1.bf16.msra.mxu0 0
  %1612 = vmatprep.subr.bf16.mxu0 0
  %1613 = vmatpush1.bf16.msra.mxu0 0
  %1614 = vmatprep.subr.bf16.mxu0 0
  %1615 = vmatpush1.bf16.msra.mxu0 0
  %1616 = vmatprep.subr.bf16.mxu0 0
  %1617 = vmatpush1.bf16.msra.mxu0 0
  %1618 = vmatprep.subr.bf16.mxu0 0
  %1619 = vmatpush1.bf16.msra.mxu0 0
  %1620 = vmatprep.subr.bf16.mxu0 0
  %1621 = vmatpush1.bf16.msra.mxu0 0
  %1622 = vmatprep.mubr.bf16.mxu0 0
  %1623 = vmatmul.mubr.bf16.gmra.mrb[0].mxu0 %v1582
  %v1624 = vpop.f32.mrb[0].mxu0
  %v1625 = vadd.f32 %v1568, %v1624
  %v1626 = vpop.f32.mrb[0].mxu0
  %v1627 = vpop.f32.mrb[0].mxu0
  %v1628 = vadd.f32 %v1568, %v1627
  %v1629 = vpop.f32.mrb[0].mxu0
  %1630 = vmatprep.mubr.bf16.mxu0 0
  %1631 = vmatmul.mubr.bf16.gmra.mrb[0].mxu0 %v1585
  %v1632 = vpop.f32.mrb[0].mxu0
  %v1633 = vadd.f32 %v1568, %v1632
  %v1634 = vpop.f32.mrb[0].mxu0
  %v1635 = vpop.f32.mrb[0].mxu0
  %v1636 = vadd.f32 %v1568, %v1635
  %v1637 = vpop.f32.mrb[0].mxu0
  %1638 = vmatprep.mubr.bf16.mxu0 0
  %1639 = vmatmul.mubr.bf16.gmra.mrb[0].mxu0 %v1588
  %v1640 = vpop.f32.mrb[0].mxu0
  %v1641 = vadd.f32 %v1568, %v1640
  %v1642 = vpop.f32.mrb[0].mxu0
  %v1643 = vpop.f32.mrb[0].mxu0
  %v1644 = vadd.f32 %v1568, %v1643
  %v1645 = vpop.f32.mrb[0].mxu0
  %1646 = vdwg.mxu0
  %v1647 = vmul.f32 %v1625, %v30
  %v1648 = vmul.f32 %v1628, %v31
  %v1649 = vmul.f32 %v1633, %v32
  %v1650 = vmul.f32 %v1636, %v33
  %v1651 = vmul.f32 %v1641, %v34
  %v1652 = vmul.f32 %v1644, %v35
  %v1653 = vmul.f32 %v1625, %v36
  %v1654 = vmul.f32 %v1628, %v37
  %v1655 = vmul.f32 %v1633, %v38
  %v1656 = vmul.f32 %v1636, %v39
  %v1657 = vmul.f32 %v1641, %v40
  %v1658 = vmul.f32 %v1644, %v41
  %v1659 = vmul.f32 %v1625, %v42
  %v1660 = vmul.f32 %v1628, %v43
  %v1661 = vmul.f32 %v1633, %v44
  %v1662 = vmul.f32 %v1636, %v45
  %v1663 = vmul.f32 %v1641, %v46
  %v1664 = vmul.f32 %v1644, %v47
  %v1665 = vmul.f32 %v1625, %v48
  %v1666 = vmul.f32 %v1628, %v49
  %v1667 = vmul.f32 %v1633, %v50
  %v1668 = vmul.f32 %v1636, %v51
  %v1669 = vmul.f32 %v1641, %v52
  %v1670 = vmul.f32 %v1644, %v53
  %v1671 = vpack.c.bf16 %v1648, %v1647
  %v1672 = vpack.c.bf16 %v1650, %v1649
  %v1673 = vpack.c.bf16 %v1652, %v1651
  %v1674 = vpack.c.bf16 %v1654, %v1653
  %v1675 = vpack.c.bf16 %v1656, %v1655
  %v1676 = vpack.c.bf16 %v1658, %v1657
  %v1677 = vpack.c.bf16 %v1660, %v1659
  %v1678 = vpack.c.bf16 %v1662, %v1661
  %v1679 = vpack.c.bf16 %v1664, %v1663
  %v1680 = vpack.c.bf16 %v1666, %v1665
  %v1681 = vpack.c.bf16 %v1668, %v1667
  %v1682 = vpack.c.bf16 %v1670, %v1669
  %v1683 = vpack.c.bf16 %v1628, %v1625
  %v1684 = vpack.c.bf16 %v1636, %v1633
  %v1685 = vpack.c.bf16 %v1644, %v1641
  %1689 = vrot.lane.b32.xlu0 %v1683, 96
  %v1690 = vpop.permute.xlu0 %1689
  %1691 = vrot.lane.b32.xlu0 %v1684, 96
  %v1692 = vpop.permute.xlu0 %1691
  %1693 = vrot.lane.b32.xlu0 %v1685, 96
  %v1694 = vpop.permute.xlu0 %1693
  %v1696 = vsel %vm83, %v1671, 0
  %v1699 = vsel %vm83, %v1672, 0
  %v1702 = vsel %vm83, %v1673, 0
  %v1705 = vsel %vm83, %v1674, 0
  %v1708 = vsel %vm83, %v1675, 0
  %v1711 = vsel %vm83, %v1676, 0
  %v1714 = vsel %vm83, %v1677, 0
  %v1717 = vsel %vm83, %v1678, 0
  %v1720 = vsel %vm83, %v1679, 0
  %v1723 = vsel %vm83, %v1680, 0
  %v1726 = vsel %vm83, %v1681, 0
  %v1729 = vsel %vm83, %v1682, 0
  %v1732 = vsel %vm83, %v1690, 0
  %v1735 = vsel %vm83, %v1692, 0
  %v1738 = vsel %vm83, %v1694, 0
  %1740 = vmatprep.subr.bf16.mxu0 0
  %1741 = vmatpush1.bf16.xpose.msra.mxu0 %v1732
  %1742 = vmatprep.subr.bf16.mxu0 0
  %1743 = vmatpush1.bf16.xpose.msra.mxu0 %v1735
  %1744 = vmatprep.subr.bf16.mxu0 0
  %1745 = vmatpush1.bf16.xpose.msra.mxu0 %v1738
  %1746 = vmatprep.subr.bf16.mxu0 0
  %1747 = vmatpush1.bf16.xpose.msra.mxu0 0
  %1748 = vmatprep.subr.bf16.mxu0 0
  %1749 = vmatpush1.bf16.xpose.msra.mxu0 0
  %1750 = vmatprep.subr.bf16.mxu0 0
  %1751 = vmatpush1.bf16.xpose.msra.mxu0 0
  %1752 = vmatprep.subr.bf16.mxu0 0
  %1753 = vmatpush1.bf16.xpose.msra.mxu0 0
  %1754 = vmatprep.subr.bf16.mxu0 0
  %1755 = vmatpush1.bf16.xpose.msra.mxu0 0
  %1756 = vmatprep.subr.bf16.mxu0 0
  %1757 = vmatpush1.bf16.xpose.msra.mxu0 0
  %1758 = vmatprep.subr.bf16.mxu0 0
  %1759 = vmatpush1.bf16.xpose.msra.mxu0 0
  %1760 = vmatprep.subr.bf16.mxu0 0
  %1761 = vmatpush1.bf16.xpose.msra.mxu0 0
  %1762 = vmatprep.subr.bf16.mxu0 0
  %1763 = vmatpush1.bf16.xpose.msra.mxu0 0
  %1764 = vmatprep.subr.bf16.mxu0 0
  %1765 = vmatpush1.bf16.xpose.msra.mxu0 0
  %1766 = vmatprep.subr.bf16.mxu0 0
  %1767 = vmatpush1.bf16.xpose.msra.mxu0 0
  %1768 = vmatprep.subr.bf16.mxu0 0
  %1769 = vmatpush1.bf16.xpose.msra.mxu0 0
  %1770 = vmatprep.subr.bf16.mxu0 0
  %1771 = vmatpush1.bf16.xpose.msra.mxu0 0
  %1772 = vmatprep.mubr.bf16.mxu0 0
  %1773 = vmatmul.mubr.bf16.gmra.mrb[0].mxu0 %v1696
  %v1774 = vpop.f32.mrb[0].mxu0
  %v1775 = vadd.f32 %v56, %v1774
  %v1776 = vpop.f32.mrb[0].mxu0
  %v1777 = vpop.f32.mrb[0].mxu0
  %v1778 = vadd.f32 %v57, %v1777
  %v1779 = vpop.f32.mrb[0].mxu0
  %1780 = vmatprep.mubr.bf16.mxu0 0
  %1781 = vmatmul.mubr.bf16.gmra.mrb[0].mxu0 %v1699
  %v1782 = vpop.f32.mrb[0].mxu0
  %v1783 = vadd.f32 %v58, %v1782
  %v1784 = vpop.f32.mrb[0].mxu0
  %v1785 = vpop.f32.mrb[0].mxu0
  %v1786 = vadd.f32 %v59, %v1785
  %v1787 = vpop.f32.mrb[0].mxu0
  %1788 = vmatprep.mubr.bf16.mxu0 0
  %1789 = vmatmul.mubr.bf16.gmra.mrb[0].mxu0 %v1702
  %v1790 = vpop.f32.mrb[0].mxu0
  %v1791 = vadd.f32 %v60, %v1790
  %v1792 = vpop.f32.mrb[0].mxu0
  %v1793 = vpop.f32.mrb[0].mxu0
  %v1794 = vadd.f32 %v61, %v1793
  %v1795 = vpop.f32.mrb[0].mxu0
  %1796 = vmatprep.mubr.bf16.mxu0 0
  %1797 = vmatmul.mubr.bf16.gmra.mrb[0].mxu0 %v1705
  %v1798 = vpop.f32.mrb[0].mxu0
  %v1799 = vadd.f32 %v62, %v1798
  %v1800 = vpop.f32.mrb[0].mxu0
  %v1801 = vpop.f32.mrb[0].mxu0
  %v1802 = vadd.f32 %v63, %v1801
  %v1803 = vpop.f32.mrb[0].mxu0
  %1804 = vmatprep.mubr.bf16.mxu0 0
  %1805 = vmatmul.mubr.bf16.gmra.mrb[0].mxu0 %v1708
  %v1806 = vpop.f32.mrb[0].mxu0
  %v1807 = vadd.f32 %v64, %v1806
  %v1808 = vpop.f32.mrb[0].mxu0
  %v1809 = vpop.f32.mrb[0].mxu0
  %v1810 = vadd.f32 %v65, %v1809
  %v1811 = vpop.f32.mrb[0].mxu0
  %1812 = vmatprep.mubr.bf16.mxu0 0
  %1813 = vmatmul.mubr.bf16.gmra.mrb[0].mxu0 %v1711
  %v1814 = vpop.f32.mrb[0].mxu0
  %v1815 = vadd.f32 %v66, %v1814
  %v1816 = vpop.f32.mrb[0].mxu0
  %v1817 = vpop.f32.mrb[0].mxu0
  %v1818 = vadd.f32 %v67, %v1817
  %v1819 = vpop.f32.mrb[0].mxu0
  %1820 = vmatprep.mubr.bf16.mxu0 0
  %1821 = vmatmul.mubr.bf16.gmra.mrb[0].mxu0 %v1714
  %v1822 = vpop.f32.mrb[0].mxu0
  %v1823 = vadd.f32 %v68, %v1822
  %v1824 = vpop.f32.mrb[0].mxu0
  %v1825 = vpop.f32.mrb[0].mxu0
  %v1826 = vadd.f32 %v69, %v1825
  %v1827 = vpop.f32.mrb[0].mxu0
  %1828 = vmatprep.mubr.bf16.mxu0 0
  %1829 = vmatmul.mubr.bf16.gmra.mrb[0].mxu0 %v1717
  %v1830 = vpop.f32.mrb[0].mxu0
  %v1831 = vadd.f32 %v70, %v1830
  %v1832 = vpop.f32.mrb[0].mxu0
  %v1833 = vpop.f32.mrb[0].mxu0
  %v1834 = vadd.f32 %v71, %v1833
  %v1835 = vpop.f32.mrb[0].mxu0
  %1836 = vmatprep.mubr.bf16.mxu0 0
  %1837 = vmatmul.mubr.bf16.gmra.mrb[0].mxu0 %v1720
  %v1838 = vpop.f32.mrb[0].mxu0
  %v1839 = vadd.f32 %v72, %v1838
  %v1840 = vpop.f32.mrb[0].mxu0
  %v1841 = vpop.f32.mrb[0].mxu0
  %v1842 = vadd.f32 %v73, %v1841
  %v1843 = vpop.f32.mrb[0].mxu0
  %1844 = vmatprep.mubr.bf16.mxu0 0
  %1845 = vmatmul.mubr.bf16.gmra.mrb[0].mxu0 %v1723
  %v1846 = vpop.f32.mrb[0].mxu0
  %v1847 = vadd.f32 %v74, %v1846
  %v1848 = vpop.f32.mrb[0].mxu0
  %v1849 = vpop.f32.mrb[0].mxu0
  %v1850 = vadd.f32 %v75, %v1849
  %v1851 = vpop.f32.mrb[0].mxu0
  %1852 = vmatprep.mubr.bf16.mxu0 0
  %1853 = vmatmul.mubr.bf16.gmra.mrb[0].mxu0 %v1726
  %v1854 = vpop.f32.mrb[0].mxu0
  %v1855 = vadd.f32 %v76, %v1854
  %v1856 = vpop.f32.mrb[0].mxu0
  %v1857 = vpop.f32.mrb[0].mxu0
  %v1858 = vadd.f32 %v77, %v1857
  %v1859 = vpop.f32.mrb[0].mxu0
  %1860 = vmatprep.mubr.bf16.mxu0 0
  %1861 = vmatmul.mubr.bf16.gmra.mrb[0].mxu0 %v1729
  %v1862 = vpop.f32.mrb[0].mxu0
  %v1863 = vadd.f32 %v78, %v1862
  %v1864 = vpop.f32.mrb[0].mxu0
  %v1865 = vpop.f32.mrb[0].mxu0
  %v1866 = vadd.f32 %v79, %v1865
  %v1867 = vpop.f32.mrb[0].mxu0
  %1868 = vdwg.mxu0
  %v1869 = vsel %vm511, %v1775, -inf
  %1870 = vmax.xlane.f32.xlu0 %v1869
  %v1871 = vpop.xlane.xlu0 %1870
  %v1872 = vsel %vm511, %v1778, -inf
  %1873 = vmax.xlane.f32.xlu0 %v1872
  %v1874 = vpop.xlane.xlu0 %1873
  %v1875 = vsel %vm511, %v1783, -inf
  %1876 = vmax.xlane.f32.xlu0 %v1875
  %v1877 = vpop.xlane.xlu0 %1876
  %v1878 = vsel %vm511, %v1786, -inf
  %1879 = vmax.xlane.f32.xlu0 %v1878
  %v1880 = vpop.xlane.xlu0 %1879
  %v1881 = vsel %vm511, %v1791, -inf
  %1882 = vmax.xlane.f32.xlu0 %v1881
  %v1883 = vpop.xlane.xlu0 %1882
  %v1884 = vsel %vm511, %v1794, -inf
  %1885 = vmax.xlane.f32.xlu0 %v1884
  %v1886 = vpop.xlane.xlu0 %1885
  %v1887 = vsel %vm511, %v1799, -inf
  %1888 = vmax.xlane.f32.xlu0 %v1887
  %v1889 = vpop.xlane.xlu0 %1888
  %v1890 = vsel %vm511, %v1802, -inf
  %1891 = vmax.xlane.f32.xlu0 %v1890
  %v1892 = vpop.xlane.xlu0 %1891
  %v1893 = vsel %vm511, %v1807, -inf
  %1894 = vmax.xlane.f32.xlu0 %v1893
  %v1895 = vpop.xlane.xlu0 %1894
  %v1896 = vsel %vm511, %v1810, -inf
  %1897 = vmax.xlane.f32.xlu0 %v1896
  %v1898 = vpop.xlane.xlu0 %1897
  %v1899 = vsel %vm511, %v1815, -inf
  %1900 = vmax.xlane.f32.xlu0 %v1899
  %v1901 = vpop.xlane.xlu0 %1900
  %v1902 = vsel %vm511, %v1818, -inf
  %1903 = vmax.xlane.f32.xlu0 %v1902
  %v1904 = vpop.xlane.xlu0 %1903
  %v1905 = vsel %vm511, %v1823, -inf
  %1906 = vmax.xlane.f32.xlu0 %v1905
  %v1907 = vpop.xlane.xlu0 %1906
  %v1908 = vsel %vm511, %v1826, -inf
  %1909 = vmax.xlane.f32.xlu0 %v1908
  %v1910 = vpop.xlane.xlu0 %1909
  %v1911 = vsel %vm511, %v1831, -inf
  %1912 = vmax.xlane.f32.xlu0 %v1911
  %v1913 = vpop.xlane.xlu0 %1912
  %v1914 = vsel %vm511, %v1834, -inf
  %1915 = vmax.xlane.f32.xlu0 %v1914
  %v1916 = vpop.xlane.xlu0 %1915
  %v1917 = vsel %vm511, %v1839, -inf
  %1918 = vmax.xlane.f32.xlu0 %v1917
  %v1919 = vpop.xlane.xlu0 %1918
  %v1920 = vsel %vm511, %v1842, -inf
  %1921 = vmax.xlane.f32.xlu0 %v1920
  %v1922 = vpop.xlane.xlu0 %1921
  %v1923 = vsel %vm511, %v1847, -inf
  %1924 = vmax.xlane.f32.xlu0 %v1923
  %v1925 = vpop.xlane.xlu0 %1924
  %v1926 = vsel %vm511, %v1850, -inf
  %1927 = vmax.xlane.f32.xlu0 %v1926
  %v1928 = vpop.xlane.xlu0 %1927
  %v1929 = vsel %vm511, %v1855, -inf
  %1930 = vmax.xlane.f32.xlu0 %v1929
  %v1931 = vpop.xlane.xlu0 %1930
  %v1932 = vsel %vm511, %v1858, -inf
  %1933 = vmax.xlane.f32.xlu0 %v1932
  %v1934 = vpop.xlane.xlu0 %1933
  %v1935 = vsel %vm511, %v1863, -inf
  %1936 = vmax.xlane.f32.xlu0 %v1935
  %v1937 = vpop.xlane.xlu0 %1936
  %v1938 = vsel %vm511, %v1866, -inf
  %1939 = vmax.xlane.f32.xlu0 %v1938
  %v1940 = vpop.xlane.xlu0 %1939
  %v1941 = vsub.f32 %v1775, %v1871
  %v1942 = vsub.f32 %v1778, %v1874
  %v1943 = vsub.f32 %v1783, %v1877
  %v1944 = vsub.f32 %v1786, %v1880
  %v1945 = vsub.f32 %v1791, %v1883
  %v1946 = vsub.f32 %v1794, %v1886
  %v1947 = vsub.f32 %v1799, %v1889
  %v1948 = vsub.f32 %v1802, %v1892
  %v1949 = vsub.f32 %v1807, %v1895
  %v1950 = vsub.f32 %v1810, %v1898
  %v1951 = vsub.f32 %v1815, %v1901
  %v1952 = vsub.f32 %v1818, %v1904
  %v1953 = vsub.f32 %v1823, %v1907
  %v1954 = vsub.f32 %v1826, %v1910
  %v1955 = vsub.f32 %v1831, %v1913
  %v1956 = vsub.f32 %v1834, %v1916
  %v1957 = vsub.f32 %v1839, %v1919
  %v1958 = vsub.f32 %v1842, %v1922
  %v1959 = vsub.f32 %v1847, %v1925
  %v1960 = vsub.f32 %v1850, %v1928
  %v1961 = vsub.f32 %v1855, %v1931
  %v1962 = vsub.f32 %v1858, %v1934
  %v1963 = vsub.f32 %v1863, %v1937
  %v1964 = vsub.f32 %v1866, %v1940
  %v1965 = vmul.f32 %v1941, 1.442695
  %v1966 = vpow.pop %v1965
  %v1967 = vmul.f32 %v1942, 1.442695
  %v1968 = vpow.pop %v1967
  %v1969 = vmul.f32 %v1943, 1.442695
  %v1970 = vpow.pop %v1969
  %v1971 = vmul.f32 %v1944, 1.442695
  %v1972 = vpow.pop %v1971
  %v1973 = vmul.f32 %v1945, 1.442695
  %v1974 = vpow.pop %v1973
  %v1975 = vmul.f32 %v1946, 1.442695
  %v1976 = vpow.pop %v1975
  %v1977 = vmul.f32 %v1947, 1.442695
  %v1978 = vpow.pop %v1977
  %v1979 = vmul.f32 %v1948, 1.442695
  %v1980 = vpow.pop %v1979
  %v1981 = vmul.f32 %v1949, 1.442695
  %v1982 = vpow.pop %v1981
  %v1983 = vmul.f32 %v1950, 1.442695
  %v1984 = vpow.pop %v1983
  %v1985 = vmul.f32 %v1951, 1.442695
  %v1986 = vpow.pop %v1985
  %v1987 = vmul.f32 %v1952, 1.442695
  %v1988 = vpow.pop %v1987
  %v1989 = vmul.f32 %v1953, 1.442695
  %v1990 = vpow.pop %v1989
  %v1991 = vmul.f32 %v1954, 1.442695
  %v1992 = vpow.pop %v1991
  %v1993 = vmul.f32 %v1955, 1.442695
  %v1994 = vpow.pop %v1993
  %v1995 = vmul.f32 %v1956, 1.442695
  %v1996 = vpow.pop %v1995
  %v1997 = vmul.f32 %v1957, 1.442695
  %v1998 = vpow.pop %v1997
  %v1999 = vmul.f32 %v1958, 1.442695
  %v2000 = vpow.pop %v1999
  %v2001 = vmul.f32 %v1959, 1.442695
  %v2002 = vpow.pop %v2001
  %v2003 = vmul.f32 %v1960, 1.442695
  %v2004 = vpow.pop %v2003
  %v2005 = vmul.f32 %v1961, 1.442695
  %v2006 = vpow.pop %v2005
  %v2007 = vmul.f32 %v1962, 1.442695
  %v2008 = vpow.pop %v2007
  %v2009 = vmul.f32 %v1963, 1.442695
  %v2010 = vpow.pop %v2009
  %v2011 = vmul.f32 %v1964, 1.442695
  %v2012 = vpow.pop %v2011
  %v2013 = vsel %vm511, %v1966, 0.0
  %2014 = vadd.xlane.f32.xlu0 %v2013
  %v2015 = vpop.xlane.xlu0 %2014
  %v2016 = vsel %vm511, %v1968, 0.0
  %2017 = vadd.xlane.f32.xlu0 %v2016
  %v2018 = vpop.xlane.xlu0 %2017
  %v2019 = vsel %vm511, %v1970, 0.0
  %2020 = vadd.xlane.f32.xlu0 %v2019
  %v2021 = vpop.xlane.xlu0 %2020
  %v2022 = vsel %vm511, %v1972, 0.0
  %2023 = vadd.xlane.f32.xlu0 %v2022
  %v2024 = vpop.xlane.xlu0 %2023
  %v2025 = vsel %vm511, %v1974, 0.0
  %2026 = vadd.xlane.f32.xlu0 %v2025
  %v2027 = vpop.xlane.xlu0 %2026
  %v2028 = vsel %vm511, %v1976, 0.0
  %2029 = vadd.xlane.f32.xlu0 %v2028
  %v2030 = vpop.xlane.xlu0 %2029
  %v2031 = vsel %vm511, %v1978, 0.0
  %2032 = vadd.xlane.f32.xlu0 %v2031
  %v2033 = vpop.xlane.xlu0 %2032
  %v2034 = vsel %vm511, %v1980, 0.0
  %2035 = vadd.xlane.f32.xlu0 %v2034
  %v2036 = vpop.xlane.xlu0 %2035
  %v2037 = vsel %vm511, %v1982, 0.0
  %2038 = vadd.xlane.f32.xlu0 %v2037
  %v2039 = vpop.xlane.xlu0 %2038
  %v2040 = vsel %vm511, %v1984, 0.0
  %2041 = vadd.xlane.f32.xlu0 %v2040
  %v2042 = vpop.xlane.xlu0 %2041
  %v2043 = vsel %vm511, %v1986, 0.0
  %2044 = vadd.xlane.f32.xlu0 %v2043
  %v2045 = vpop.xlane.xlu0 %2044
  %v2046 = vsel %vm511, %v1988, 0.0
  %2047 = vadd.xlane.f32.xlu0 %v2046
  %v2048 = vpop.xlane.xlu0 %2047
  %v2049 = vsel %vm511, %v1990, 0.0
  %2050 = vadd.xlane.f32.xlu0 %v2049
  %v2051 = vpop.xlane.xlu0 %2050
  %v2052 = vsel %vm511, %v1992, 0.0
  %2053 = vadd.xlane.f32.xlu0 %v2052
  %v2054 = vpop.xlane.xlu0 %2053
  %v2055 = vsel %vm511, %v1994, 0.0
  %2056 = vadd.xlane.f32.xlu0 %v2055
  %v2057 = vpop.xlane.xlu0 %2056
  %v2058 = vsel %vm511, %v1996, 0.0
  %2059 = vadd.xlane.f32.xlu0 %v2058
  %v2060 = vpop.xlane.xlu0 %2059
  %v2061 = vsel %vm511, %v1998, 0.0
  %2062 = vadd.xlane.f32.xlu0 %v2061
  %v2063 = vpop.xlane.xlu0 %2062
  %v2064 = vsel %vm511, %v2000, 0.0
  %2065 = vadd.xlane.f32.xlu0 %v2064
  %v2066 = vpop.xlane.xlu0 %2065
  %v2067 = vsel %vm511, %v2002, 0.0
  %2068 = vadd.xlane.f32.xlu0 %v2067
  %v2069 = vpop.xlane.xlu0 %2068
  %v2070 = vsel %vm511, %v2004, 0.0
  %2071 = vadd.xlane.f32.xlu0 %v2070
  %v2072 = vpop.xlane.xlu0 %2071
  %v2073 = vsel %vm511, %v2006, 0.0
  %2074 = vadd.xlane.f32.xlu0 %v2073
  %v2075 = vpop.xlane.xlu0 %2074
  %v2076 = vsel %vm511, %v2008, 0.0
  %2077 = vadd.xlane.f32.xlu0 %v2076
  %v2078 = vpop.xlane.xlu0 %2077
  %v2079 = vsel %vm511, %v2010, 0.0
  %2080 = vadd.xlane.f32.xlu0 %v2079
  %v2081 = vpop.xlane.xlu0 %2080
  %v2082 = vsel %vm511, %v2012, 0.0
  %2083 = vadd.xlane.f32.xlu0 %v2082
  %v2084 = vpop.xlane.xlu0 %2083
  %v2085 = vrcp.pop %v2015
  %v2086 = vrcp.pop %v2018
  %v2087 = vrcp.pop %v2021
  %v2088 = vrcp.pop %v2024
  %v2089 = vrcp.pop %v2027
  %v2090 = vrcp.pop %v2030
  %v2091 = vrcp.pop %v2033
  %v2092 = vrcp.pop %v2036
  %v2093 = vrcp.pop %v2039
  %v2094 = vrcp.pop %v2042
  %v2095 = vrcp.pop %v2045
  %v2096 = vrcp.pop %v2048
  %v2097 = vrcp.pop %v2051
  %v2098 = vrcp.pop %v2054
  %v2099 = vrcp.pop %v2057
  %v2100 = vrcp.pop %v2060
  %v2101 = vrcp.pop %v2063
  %v2102 = vrcp.pop %v2066
  %v2103 = vrcp.pop %v2069
  %v2104 = vrcp.pop %v2072
  %v2105 = vrcp.pop %v2075
  %v2106 = vrcp.pop %v2078
  %v2107 = vrcp.pop %v2081
  %v2108 = vrcp.pop %v2084
  %v2109 = vmul.f32 %v1966, %v2085
  %v2110 = vmul.f32 %v1968, %v2086
  %v2111 = vmul.f32 %v1970, %v2087
  %v2112 = vmul.f32 %v1972, %v2088
  %v2113 = vmul.f32 %v1974, %v2089
  %v2114 = vmul.f32 %v1976, %v2090
  %v2115 = vmul.f32 %v1978, %v2091
  %v2116 = vmul.f32 %v1980, %v2092
  %v2117 = vmul.f32 %v1982, %v2093
  %v2118 = vmul.f32 %v1984, %v2094
  %v2119 = vmul.f32 %v1986, %v2095
  %v2120 = vmul.f32 %v1988, %v2096
  %v2121 = vmul.f32 %v1990, %v2097
  %v2122 = vmul.f32 %v1992, %v2098
  %v2123 = vmul.f32 %v1994, %v2099
  %v2124 = vmul.f32 %v1996, %v2100
  %v2125 = vmul.f32 %v1998, %v2101
  %v2126 = vmul.f32 %v2000, %v2102
  %v2127 = vmul.f32 %v2002, %v2103
  %v2128 = vmul.f32 %v2004, %v2104
  %v2129 = vmul.f32 %v2006, %v2105
  %v2130 = vmul.f32 %v2008, %v2106
  %v2131 = vmul.f32 %v2010, %v2107
  %v2132 = vmul.f32 %v2012, %v2108
  %v2133 = vpack.c.bf16 %v2110, %v2109
  %v2134 = vpack.c.bf16 %v2112, %v2111
  %v2135 = vpack.c.bf16 %v2114, %v2113
  %v2136 = vpack.c.bf16 %v2116, %v2115
  %v2137 = vpack.c.bf16 %v2118, %v2117
  %v2138 = vpack.c.bf16 %v2120, %v2119
  %v2139 = vpack.c.bf16 %v2122, %v2121
  %v2140 = vpack.c.bf16 %v2124, %v2123
  %v2141 = vpack.c.bf16 %v2126, %v2125
  %v2142 = vpack.c.bf16 %v2128, %v2127
  %v2143 = vpack.c.bf16 %v2130, %v2129
  %v2144 = vpack.c.bf16 %v2132, %v2131
  %2145 = vrot.lane.b32.xlu0 %v1683, 64
  %v2146 = vpop.permute.xlu0 %2145
  %2147 = vrot.lane.b32.xlu0 %v1684, 64
  %v2148 = vpop.permute.xlu0 %2147
  %2149 = vrot.lane.b32.xlu0 %v1685, 64
  %v2150 = vpop.permute.xlu0 %2149
  %v2155 = vsel %vm511, %v2133, 0
  %v2158 = vsel %vm511, %v2134, 0
  %v2161 = vsel %vm511, %v2135, 0
  %v2164 = vsel %vm511, %v2136, 0
  %v2167 = vsel %vm511, %v2137, 0
  %v2170 = vsel %vm511, %v2138, 0
  %v2173 = vsel %vm511, %v2139, 0
  %v2176 = vsel %vm511, %v2140, 0
  %v2179 = vsel %vm511, %v2141, 0
  %v2182 = vsel %vm511, %v2142, 0
  %v2185 = vsel %vm511, %v2143, 0
  %v2188 = vsel %vm511, %v2144, 0
  %2190 = vmatprep.subr.bf16.mxu0 0
  %2191 = vmatpush1.bf16.msra.mxu0 %v2146
  %2192 = vmatprep.subr.bf16.mxu0 0
  %2193 = vmatpush1.bf16.msra.mxu0 %v2148
  %2194 = vmatprep.subr.bf16.mxu0 0
  %2195 = vmatpush1.bf16.msra.mxu0 %v2150
  %2196 = vmatprep.subr.bf16.mxu0 0
  %2197 = vmatpush1.bf16.msra.mxu0 0
  %2198 = vmatprep.subr.bf16.mxu0 0
  %2199 = vmatpush1.bf16.msra.mxu0 0
  %2200 = vmatprep.subr.bf16.mxu0 0
  %2201 = vmatpush1.bf16.msra.mxu0 0
  %2202 = vmatprep.subr.bf16.mxu0 0
  %2203 = vmatpush1.bf16.msra.mxu0 0
  %2204 = vmatprep.subr.bf16.mxu0 0
  %2205 = vmatpush1.bf16.msra.mxu0 0
  %2206 = vmatprep.subr.bf16.mxu0 0
  %2207 = vmatpush1.bf16.msra.mxu0 0
  %2208 = vmatprep.subr.bf16.mxu0 0
  %2209 = vmatpush1.bf16.msra.mxu0 0
  %2210 = vmatprep.subr.bf16.mxu0 0
  %2211 = vmatpush1.bf16.msra.mxu0 0
  %2212 = vmatprep.subr.bf16.mxu0 0
  %2213 = vmatpush1.bf16.msra.mxu0 0
  %2214 = vmatprep.subr.bf16.mxu0 0
  %2215 = vmatpush1.bf16.msra.mxu0 0
  %2216 = vmatprep.subr.bf16.mxu0 0
  %2217 = vmatpush1.bf16.msra.mxu0 0
  %2218 = vmatprep.subr.bf16.mxu0 0
  %2219 = vmatpush1.bf16.msra.mxu0 0
  %2220 = vmatprep.subr.bf16.mxu0 0
  %2221 = vmatpush1.bf16.msra.mxu0 0
  %2222 = vmatprep.mubr.bf16.mxu0 0
  %2223 = vmatmul.mubr.bf16.gmra.mrb[0].mxu0 %v2155
  %v2224 = vpop.f32.mrb[0].mxu0
  %v2225 = vadd.f32 0.0, %v2224
  %v2226 = vpop.f32.mrb[0].mxu0
  %v2227 = vpop.f32.mrb[0].mxu0
  %v2228 = vadd.f32 0.0, %v2227
  %v2229 = vpop.f32.mrb[0].mxu0
  %2230 = vmatprep.mubr.bf16.mxu0 0
  %2231 = vmatmul.mubr.bf16.gmra.mrb[0].mxu0 %v2158
  %v2232 = vpop.f32.mrb[0].mxu0
  %v2233 = vadd.f32 0.0, %v2232
  %v2234 = vpop.f32.mrb[0].mxu0
  %v2235 = vpop.f32.mrb[0].mxu0
  %v2236 = vadd.f32 0.0, %v2235
  %v2237 = vpop.f32.mrb[0].mxu0
  %2238 = vmatprep.mubr.bf16.mxu0 0
  %2239 = vmatmul.mubr.bf16.gmra.mrb[0].mxu0 %v2161
  %v2240 = vpop.f32.mrb[0].mxu0
  %v2241 = vadd.f32 0.0, %v2240
  %v2242 = vpop.f32.mrb[0].mxu0
  %v2243 = vpop.f32.mrb[0].mxu0
  %v2244 = vadd.f32 0.0, %v2243
  %v2245 = vpop.f32.mrb[0].mxu0
  %2246 = vmatprep.mubr.bf16.mxu0 0
  %2247 = vmatmul.mubr.bf16.gmra.mrb[0].mxu0 %v2164
  %v2248 = vpop.f32.mrb[0].mxu0
  %v2249 = vadd.f32 0.0, %v2248
  %v2250 = vpop.f32.mrb[0].mxu0
  %v2251 = vpop.f32.mrb[0].mxu0
  %v2252 = vadd.f32 0.0, %v2251
  %v2253 = vpop.f32.mrb[0].mxu0
  %2254 = vmatprep.mubr.bf16.mxu0 0
  %2255 = vmatmul.mubr.bf16.gmra.mrb[0].mxu0 %v2167
  %v2256 = vpop.f32.mrb[0].mxu0
  %v2257 = vadd.f32 0.0, %v2256
  %v2258 = vpop.f32.mrb[0].mxu0
  %v2259 = vpop.f32.mrb[0].mxu0
  %v2260 = vadd.f32 0.0, %v2259
  %v2261 = vpop.f32.mrb[0].mxu0
  %2262 = vmatprep.mubr.bf16.mxu0 0
  %2263 = vmatmul.mubr.bf16.gmra.mrb[0].mxu0 %v2170
  %v2264 = vpop.f32.mrb[0].mxu0
  %v2265 = vadd.f32 0.0, %v2264
  %v2266 = vpop.f32.mrb[0].mxu0
  %v2267 = vpop.f32.mrb[0].mxu0
  %v2268 = vadd.f32 0.0, %v2267
  %v2269 = vpop.f32.mrb[0].mxu0
  %2270 = vmatprep.mubr.bf16.mxu0 0
  %2271 = vmatmul.mubr.bf16.gmra.mrb[0].mxu0 %v2173
  %v2272 = vpop.f32.mrb[0].mxu0
  %v2273 = vadd.f32 0.0, %v2272
  %v2274 = vpop.f32.mrb[0].mxu0
  %v2275 = vpop.f32.mrb[0].mxu0
  %v2276 = vadd.f32 0.0, %v2275
  %v2277 = vpop.f32.mrb[0].mxu0
  %2278 = vmatprep.mubr.bf16.mxu0 0
  %2279 = vmatmul.mubr.bf16.gmra.mrb[0].mxu0 %v2176
  %v2280 = vpop.f32.mrb[0].mxu0
  %v2281 = vadd.f32 0.0, %v2280
  %v2282 = vpop.f32.mrb[0].mxu0
  %v2283 = vpop.f32.mrb[0].mxu0
  %v2284 = vadd.f32 0.0, %v2283
  %v2285 = vpop.f32.mrb[0].mxu0
  %2286 = vmatprep.mubr.bf16.mxu0 0
  %2287 = vmatmul.mubr.bf16.gmra.mrb[0].mxu0 %v2179
  %v2288 = vpop.f32.mrb[0].mxu0
  %v2289 = vadd.f32 0.0, %v2288
  %v2290 = vpop.f32.mrb[0].mxu0
  %v2291 = vpop.f32.mrb[0].mxu0
  %v2292 = vadd.f32 0.0, %v2291
  %v2293 = vpop.f32.mrb[0].mxu0
  %2294 = vmatprep.mubr.bf16.mxu0 0
  %2295 = vmatmul.mubr.bf16.gmra.mrb[0].mxu0 %v2182
  %v2296 = vpop.f32.mrb[0].mxu0
  %v2297 = vadd.f32 0.0, %v2296
  %v2298 = vpop.f32.mrb[0].mxu0
  %v2299 = vpop.f32.mrb[0].mxu0
  %v2300 = vadd.f32 0.0, %v2299
  %v2301 = vpop.f32.mrb[0].mxu0
  %2302 = vmatprep.mubr.bf16.mxu0 0
  %2303 = vmatmul.mubr.bf16.gmra.mrb[0].mxu0 %v2185
  %v2304 = vpop.f32.mrb[0].mxu0
  %v2305 = vadd.f32 0.0, %v2304
  %v2306 = vpop.f32.mrb[0].mxu0
  %v2307 = vpop.f32.mrb[0].mxu0
  %v2308 = vadd.f32 0.0, %v2307
  %v2309 = vpop.f32.mrb[0].mxu0
  %2310 = vmatprep.mubr.bf16.mxu0 0
  %2311 = vmatmul.mubr.bf16.gmra.mrb[0].mxu0 %v2188
  %v2312 = vpop.f32.mrb[0].mxu0
  %v2313 = vadd.f32 0.0, %v2312
  %v2314 = vpop.f32.mrb[0].mxu0
  %v2315 = vpop.f32.mrb[0].mxu0
  %v2316 = vadd.f32 0.0, %v2315
  %v2317 = vpop.f32.mrb[0].mxu0
  %2318 = vdwg.mxu0
  %v2319 = vmul.f32 %v2225, %v30
  %v2320 = vmul.f32 %v2228, %v31
  %v2321 = vmul.f32 %v2233, %v32
  %v2322 = vmul.f32 %v2236, %v33
  %v2323 = vmul.f32 %v2241, %v34
  %v2324 = vmul.f32 %v2244, %v35
  %v2325 = vmul.f32 %v2249, %v36
  %v2326 = vmul.f32 %v2252, %v37
  %v2327 = vmul.f32 %v2257, %v38
  %v2328 = vmul.f32 %v2260, %v39
  %v2329 = vmul.f32 %v2265, %v40
  %v2330 = vmul.f32 %v2268, %v41
  %v2331 = vmul.f32 %v2273, %v42
  %v2332 = vmul.f32 %v2276, %v43
  %v2333 = vmul.f32 %v2281, %v44
  %v2334 = vmul.f32 %v2284, %v45
  %v2335 = vmul.f32 %v2289, %v46
  %v2336 = vmul.f32 %v2292, %v47
  %v2337 = vmul.f32 %v2297, %v48
  %v2338 = vmul.f32 %v2300, %v49
  %v2339 = vmul.f32 %v2305, %v50
  %v2340 = vmul.f32 %v2308, %v51
  %v2341 = vmul.f32 %v2313, %v52
  %v2342 = vmul.f32 %v2316, %v53
  %v2343 = vadd.f32 %v2319, %v2325
  %v2344 = vadd.f32 %v2320, %v2326
  %v2345 = vadd.f32 %v2321, %v2327
  %v2346 = vadd.f32 %v2322, %v2328
  %v2347 = vadd.f32 %v2323, %v2329
  %v2348 = vadd.f32 %v2324, %v2330
  %v2349 = vadd.f32 %v2343, %v2331
  %v2350 = vadd.f32 %v2344, %v2332
  %v2351 = vadd.f32 %v2345, %v2333
  %v2352 = vadd.f32 %v2346, %v2334
  %v2353 = vadd.f32 %v2347, %v2335
  %v2354 = vadd.f32 %v2348, %v2336
  %v2355 = vadd.f32 %v2349, %v2337
  %v2356 = vadd.f32 %v2350, %v2338
  %v2357 = vadd.f32 %v2351, %v2339
  %v2358 = vadd.f32 %v2352, %v2340
  %v2359 = vadd.f32 %v2353, %v2341
  %v2360 = vadd.f32 %v2354, %v2342
  %v2361 = vpack.c.bf16 %v2356, %v2355
  %v2362 = vpack.c.bf16 %v2358, %v2357
  %v2363 = vpack.c.bf16 %v2360, %v2359
  %v2364 = vlaneseq
  %v2365 = vshrl.u32 %v2364, 7
  %v2366 = vsub.s32 1, %v2365
  %v2367 = vrot.slane %v1561, %v2366
  %2368 = vrot.lane.b32.xlu0 %v1577, 32
  %v2369 = vpop.permute.xlu0 %2368
  %2370 = vrot.lane.b32.xlu0 %v1578, 32
  %v2371 = vpop.permute.xlu0 %2370
  %v2375 = vsel %vm83, %v2361, 0
  %v2378 = vsel %vm83, %v2362, 0
  %v2381 = vsel %vm83, %v2363, 0
  %2383 = vmatprep.subr.bf16.mxu0 0
  %2384 = vmatpush1.bf16.msra.mxu0 %v2369
  %2385 = vmatprep.subr.bf16.mxu0 0
  %2386 = vmatpush1.bf16.msra.mxu0 %v2371
  %2387 = vmatprep.subr.bf16.mxu0 0
  %2388 = vmatpush1.bf16.msra.mxu0 0
  %2389 = vmatprep.subr.bf16.mxu0 0
  %2390 = vmatpush1.bf16.msra.mxu0 0
  %2391 = vmatprep.subr.bf16.mxu0 0
  %2392 = vmatpush1.bf16.msra.mxu0 0
  %2393 = vmatprep.subr.bf16.mxu0 0
  %2394 = vmatpush1.bf16.msra.mxu0 0
  %2395 = vmatprep.subr.bf16.mxu0 0
  %2396 = vmatpush1.bf16.msra.mxu0 0
  %2397 = vmatprep.subr.bf16.mxu0 0
  %2398 = vmatpush1.bf16.msra.mxu0 0
  %2399 = vmatprep.subr.bf16.mxu0 0
  %2400 = vmatpush1.bf16.msra.mxu0 0
  %2401 = vmatprep.subr.bf16.mxu0 0
  %2402 = vmatpush1.bf16.msra.mxu0 0
  %2403 = vmatprep.subr.bf16.mxu0 0
  %2404 = vmatpush1.bf16.msra.mxu0 0
  %2405 = vmatprep.subr.bf16.mxu0 0
  %2406 = vmatpush1.bf16.msra.mxu0 0
  %2407 = vmatprep.subr.bf16.mxu0 0
  %2408 = vmatpush1.bf16.msra.mxu0 0
  %2409 = vmatprep.subr.bf16.mxu0 0
  %2410 = vmatpush1.bf16.msra.mxu0 0
  %2411 = vmatprep.subr.bf16.mxu0 0
  %2412 = vmatpush1.bf16.msra.mxu0 0
  %2413 = vmatprep.subr.bf16.mxu0 0
  %2414 = vmatpush1.bf16.msra.mxu0 0
  %2415 = vmatprep.mubr.bf16.mxu0 0
  %2416 = vmatmul.mubr.bf16.gmra.mrb[0].mxu0 %v2375
  %v2417 = vpop.f32.mrb[0].mxu0
  %v2418 = vadd.f32 %v2367, %v2417
  %v2419 = vpop.f32.mrb[0].mxu0
  %v2420 = vpop.f32.mrb[0].mxu0
  %v2421 = vadd.f32 %v2367, %v2420
  %v2422 = vpop.f32.mrb[0].mxu0
  %2423 = vmatprep.mubr.bf16.mxu0 0
  %2424 = vmatmul.mubr.bf16.gmra.mrb[0].mxu0 %v2378
  %v2425 = vpop.f32.mrb[0].mxu0
  %v2426 = vadd.f32 %v2367, %v2425
  %v2427 = vpop.f32.mrb[0].mxu0
  %v2428 = vpop.f32.mrb[0].mxu0
  %v2429 = vadd.f32 %v2367, %v2428
  %v2430 = vpop.f32.mrb[0].mxu0
  %2431 = vmatprep.mubr.bf16.mxu0 0
  %2432 = vmatmul.mubr.bf16.gmra.mrb[0].mxu0 %v2381
  %v2433 = vpop.f32.mrb[0].mxu0
  %v2434 = vadd.f32 %v2367, %v2433
  %v2435 = vpop.f32.mrb[0].mxu0
  %v2436 = vpop.f32.mrb[0].mxu0
  %v2437 = vadd.f32 %v2367, %v2436
  %v2438 = vpop.f32.mrb[0].mxu0
  %2439 = vdwg.mxu0
  %v2440 = vadd.f32 %v1532, %v2418
  %v2441 = vadd.f32 %v1533, %v2421
  %v2442 = vadd.f32 %v1534, %v2426
  %v2443 = vadd.f32 %v1535, %v2429
  %v2444 = vadd.f32 %v1536, %v2434
  %v2445 = vadd.f32 %v1537, %v2437
  %v2446 = vsel %vm83, %v2440, 0.0
  %2447 = vadd.xlane.f32.xlu0 %v2446
  %v2448 = vpop.xlane.xlu0 %2447
  %v2449 = vsel %vm83, %v2441, 0.0
  %2450 = vadd.xlane.f32.xlu0 %v2449
  %v2451 = vpop.xlane.xlu0 %2450
  %v2452 = vsel %vm83, %v2442, 0.0
  %2453 = vadd.xlane.f32.xlu0 %v2452
  %v2454 = vpop.xlane.xlu0 %2453
  %v2455 = vsel %vm83, %v2443, 0.0
  %2456 = vadd.xlane.f32.xlu0 %v2455
  %v2457 = vpop.xlane.xlu0 %2456
  %v2458 = vsel %vm83, %v2444, 0.0
  %2459 = vadd.xlane.f32.xlu0 %v2458
  %v2460 = vpop.xlane.xlu0 %2459
  %v2461 = vsel %vm83, %v2445, 0.0
  %2462 = vadd.xlane.f32.xlu0 %v2461
  %v2463 = vpop.xlane.xlu0 %2462
  %v2464 = vmul.f32 %v2448, %v102
  %v2465 = vmul.f32 %v2451, %v102
  %v2466 = vmul.f32 %v2454, %v102
  %v2467 = vmul.f32 %v2457, %v102
  %v2468 = vmul.f32 %v2460, %v102
  %v2469 = vmul.f32 %v2463, %v102
  %v2470 = vsub.f32 %v2440, %v2464
  %v2471 = vsub.f32 %v2441, %v2465
  %v2472 = vsub.f32 %v2442, %v2466
  %v2473 = vsub.f32 %v2443, %v2467
  %v2474 = vsub.f32 %v2444, %v2468
  %v2475 = vsub.f32 %v2445, %v2469
  %v2476 = vmul.f32 %v2470, %v2470
  %v2477 = vmul.f32 %v2471, %v2471
  %v2478 = vmul.f32 %v2472, %v2472
  %v2479 = vmul.f32 %v2473, %v2473
  %v2480 = vmul.f32 %v2474, %v2474
  %v2481 = vmul.f32 %v2475, %v2475
  %v2482 = vsel %vm83, %v2476, 0.0
  %2483 = vadd.xlane.f32.xlu0 %v2482
  %v2484 = vpop.xlane.xlu0 %2483
  %v2485 = vsel %vm83, %v2477, 0.0
  %2486 = vadd.xlane.f32.xlu0 %v2485
  %v2487 = vpop.xlane.xlu0 %2486
  %v2488 = vsel %vm83, %v2478, 0.0
  %2489 = vadd.xlane.f32.xlu0 %v2488
  %v2490 = vpop.xlane.xlu0 %2489
  %v2491 = vsel %vm83, %v2479, 0.0
  %2492 = vadd.xlane.f32.xlu0 %v2491
  %v2493 = vpop.xlane.xlu0 %2492
  %v2494 = vsel %vm83, %v2480, 0.0
  %2495 = vadd.xlane.f32.xlu0 %v2494
  %v2496 = vpop.xlane.xlu0 %2495
  %v2497 = vsel %vm83, %v2481, 0.0
  %2498 = vadd.xlane.f32.xlu0 %v2497
  %v2499 = vpop.xlane.xlu0 %2498
  %v2500 = vmul.f32 %v2484, %v102
  %v2501 = vmul.f32 %v2487, %v102
  %v2502 = vmul.f32 %v2490, %v102
  %v2503 = vmul.f32 %v2493, %v102
  %v2504 = vmul.f32 %v2496, %v102
  %v2505 = vmul.f32 %v2499, %v102
  %v2506 = vadd.f32 %v2500, 1e-12
  %v2507 = vadd.f32 %v2501, 1e-12
  %v2508 = vadd.f32 %v2502, 1e-12
  %v2509 = vadd.f32 %v2503, 1e-12
  %v2510 = vadd.f32 %v2504, 1e-12
  %v2511 = vadd.f32 %v2505, 1e-12
  %v2512 = vrsqrt.pop %v2506
  %v2513 = vrsqrt.pop %v2507
  %v2514 = vrsqrt.pop %v2508
  %v2515 = vrsqrt.pop %v2509
  %v2516 = vrsqrt.pop %v2510
  %v2517 = vrsqrt.pop %v2511
  %v2518 = vmul.f32 %v2470, %v2512
  %v2519 = vmul.f32 %v2471, %v2513
  %v2520 = vmul.f32 %v2472, %v2514
  %v2521 = vmul.f32 %v2473, %v2515
  %v2522 = vmul.f32 %v2474, %v2516
  %v2523 = vmul.f32 %v2475, %v2517
  %v2524 = vlaneseq
  %v2525 = vshrl.u32 %v2524, 7
  %v2526 = vsub.s32 2, %v2525
  %v2527 = vrot.slane %v1561, %v2526
  %v2528 = vmul.f32 %v2518, %v2527
  %v2529 = vmul.f32 %v2519, %v2527
  %v2530 = vmul.f32 %v2520, %v2527
  %v2531 = vmul.f32 %v2521, %v2527
  %v2532 = vmul.f32 %v2522, %v2527
  %v2533 = vmul.f32 %v2523, %v2527
  %v2534 = vlaneseq
  %v2535 = vshrl.u32 %v2534, 7
  %v2536 = vsub.s32 3, %v2535
  %v2537 = vrot.slane %v1561, %v2536
  %v2538 = vadd.f32 %v2528, %v2537
  %v2539 = vadd.f32 %v2529, %v2537
  %v2540 = vadd.f32 %v2530, %v2537
  %v2541 = vadd.f32 %v2531, %v2537
  %v2542 = vadd.f32 %v2532, %v2537
  %v2543 = vadd.f32 %v2533, %v2537
  %v2544 = vpack.c.bf16 %v2539, %v2538
  %v2545 = vpack.c.bf16 %v2541, %v2540
  %v2546 = vpack.c.bf16 %v2543, %v2542
  %v2547 = vlaneseq
  %v2548 = vshrl.u32 %v2547, 7
  %v2549 = vsub.s32 4, %v2548
  %v2550 = vrot.slane %v1561, %v2549
  %v2551 = vunpack.c.h.b16 %v1539
  %v2552 = vunpack.c.h.b16 %v1540
  %v2553 = vunpack.c.h.b16 %v1541
  %v2554 = vunpack.c.h.b16 %v1542
  %v2555 = vpack.c.b16 %v2552, %v2551
  %v2556 = vpack.c.b16 %v2554, %v2553
  %v2560 = vsel %vm83, %v2544, 0
  %v2563 = vsel %vm83, %v2545, 0
  %v2566 = vsel %vm83, %v2546, 0
  %2568 = vmatprep.subr.bf16.mxu0 0
  %2569 = vmatpush1.bf16.msra.mxu0 %v2555
  %2570 = vmatprep.subr.bf16.mxu0 0
  %2571 = vmatpush1.bf16.msra.mxu0 %v2556
  %2572 = vmatprep.subr.bf16.mxu0 0
  %2573 = vmatpush1.bf16.msra.mxu0 0
  %2574 = vmatprep.subr.bf16.mxu0 0
  %2575 = vmatpush1.bf16.msra.mxu0 0
  %2576 = vmatprep.subr.bf16.mxu0 0
  %2577 = vmatpush1.bf16.msra.mxu0 0
  %2578 = vmatprep.subr.bf16.mxu0 0
  %2579 = vmatpush1.bf16.msra.mxu0 0
  %2580 = vmatprep.subr.bf16.mxu0 0
  %2581 = vmatpush1.bf16.msra.mxu0 0
  %2582 = vmatprep.subr.bf16.mxu0 0
  %2583 = vmatpush1.bf16.msra.mxu0 0
  %2584 = vmatprep.subr.bf16.mxu0 0
  %2585 = vmatpush1.bf16.msra.mxu0 0
  %2586 = vmatprep.subr.bf16.mxu0 0
  %2587 = vmatpush1.bf16.msra.mxu0 0
  %2588 = vmatprep.subr.bf16.mxu0 0
  %2589 = vmatpush1.bf16.msra.mxu0 0
  %2590 = vmatprep.subr.bf16.mxu0 0
  %2591 = vmatpush1.bf16.msra.mxu0 0
  %2592 = vmatprep.subr.bf16.mxu0 0
  %2593 = vmatpush1.bf16.msra.mxu0 0
  %2594 = vmatprep.subr.bf16.mxu0 0
  %2595 = vmatpush1.bf16.msra.mxu0 0
  %2596 = vmatprep.subr.bf16.mxu0 0
  %2597 = vmatpush1.bf16.msra.mxu0 0
  %2598 = vmatprep.subr.bf16.mxu0 0
  %2599 = vmatpush1.bf16.msra.mxu0 0
  %2600 = vmatprep.mubr.bf16.mxu0 0
  %2601 = vmatmul.mubr.bf16.gmra.mrb[0].mxu0 %v2560
  %v2602 = vpop.f32.mrb[0].mxu0
  %v2603 = vadd.f32 %v2550, %v2602
  %v2604 = vpop.f32.mrb[0].mxu0
  %v2605 = vpop.f32.mrb[0].mxu0
  %v2606 = vadd.f32 %v2550, %v2605
  %v2607 = vpop.f32.mrb[0].mxu0
  %2608 = vmatprep.mubr.bf16.mxu0 0
  %2609 = vmatmul.mubr.bf16.gmra.mrb[0].mxu0 %v2563
  %v2610 = vpop.f32.mrb[0].mxu0
  %v2611 = vadd.f32 %v2550, %v2610
  %v2612 = vpop.f32.mrb[0].mxu0
  %v2613 = vpop.f32.mrb[0].mxu0
  %v2614 = vadd.f32 %v2550, %v2613
  %v2615 = vpop.f32.mrb[0].mxu0
  %2616 = vmatprep.mubr.bf16.mxu0 0
  %2617 = vmatmul.mubr.bf16.gmra.mrb[0].mxu0 %v2566
  %v2618 = vpop.f32.mrb[0].mxu0
  %v2619 = vadd.f32 %v2550, %v2618
  %v2620 = vpop.f32.mrb[0].mxu0
  %v2621 = vpop.f32.mrb[0].mxu0
  %v2622 = vadd.f32 %v2550, %v2621
  %v2623 = vpop.f32.mrb[0].mxu0
  %2624 = vdwg.mxu0
  %v2625 = vmul.f32 %v2603, 0.5
  %v2626 = vmul.f32 %v2606, 0.5
  %v2627 = vmul.f32 %v2611, 0.5
  %v2628 = vmul.f32 %v2614, 0.5
  %v2629 = vmul.f32 %v2619, 0.5
  %v2630 = vmul.f32 %v2622, 0.5
  %v2631 = vmul.f32 %v2603, 0.044715
  %v2632 = vmul.f32 %v2606, 0.044715
  %v2633 = vmul.f32 %v2611, 0.044715
  %v2634 = vmul.f32 %v2614, 0.044715
  %v2635 = vmul.f32 %v2619, 0.044715
  %v2636 = vmul.f32 %v2622, 0.044715
  %v2637 = vmul.f32 %v2631, %v2603
  %v2638 = vmul.f32 %v2632, %v2606
  %v2639 = vmul.f32 %v2633, %v2611
  %v2640 = vmul.f32 %v2634, %v2614
  %v2641 = vmul.f32 %v2635, %v2619
  %v2642 = vmul.f32 %v2636, %v2622
  %v2643 = vmul.f32 %v2637, %v2603
  %v2644 = vmul.f32 %v2638, %v2606
  %v2645 = vmul.f32 %v2639, %v2611
  %v2646 = vmul.f32 %v2640, %v2614
  %v2647 = vmul.f32 %v2641, %v2619
  %v2648 = vmul.f32 %v2642, %v2622
  %v2649 = vadd.f32 %v2603, %v2643
  %v2650 = vadd.f32 %v2606, %v2644
  %v2651 = vadd.f32 %v2611, %v2645
  %v2652 = vadd.f32 %v2614, %v2646
  %v2653 = vadd.f32 %v2619, %v2647
  %v2654 = vadd.f32 %v2622, %v2648
  %v2655 = vmul.f32 %v2649, 0.7978846
  %v2656 = vmul.f32 %v2650, 0.7978846
  %v2657 = vmul.f32 %v2651, 0.7978846
  %v2658 = vmul.f32 %v2652, 0.7978846
  %v2659 = vmul.f32 %v2653, 0.7978846
  %v2660 = vmul.f32 %v2654, 0.7978846
  %v2661 = vtanh.pop %v2655
  %v2662 = vtanh.pop %v2656
  %v2663 = vtanh.pop %v2657
  %v2664 = vtanh.pop %v2658
  %v2665 = vtanh.pop %v2659
  %v2666 = vtanh.pop %v2660
  %v2667 = vadd.f32 %v2661, 1.0
  %v2668 = vadd.f32 %v2662, 1.0
  %v2669 = vadd.f32 %v2663, 1.0
  %v2670 = vadd.f32 %v2664, 1.0
  %v2671 = vadd.f32 %v2665, 1.0
  %v2672 = vadd.f32 %v2666, 1.0
  %v2673 = vmul.f32 %v2625, %v2667
  %v2674 = vmul.f32 %v2626, %v2668
  %v2675 = vmul.f32 %v2627, %v2669
  %v2676 = vmul.f32 %v2628, %v2670
  %v2677 = vmul.f32 %v2629, %v2671
  %v2678 = vmul.f32 %v2630, %v2672
  %v2679 = vpack.c.bf16 %v2674, %v2673
  %v2680 = vpack.c.bf16 %v2676, %v2675
  %v2681 = vpack.c.bf16 %v2678, %v2677
  %v2682 = vlaneseq
  %v2683 = vshrl.u32 %v2682, 7
  %v2684 = vsub.s32 5, %v2683
  %v2685 = vrot.slane %v1561, %v2684
  %v2702 = vunpack.c.l.b16 %v1544
  %v2703 = vunpack.c.l.b16 %v1545
  %v2704 = vunpack.c.l.b16 %v1546
  %v2705 = vunpack.c.l.b16 %v1547
  %v2706 = vunpack.c.l.b16 %v1548
  %v2707 = vunpack.c.l.b16 %v1549
  %v2708 = vunpack.c.l.b16 %v1550
  %v2709 = vunpack.c.l.b16 %v1551
  %v2710 = vunpack.c.l.b16 %v1552
  %v2711 = vunpack.c.l.b16 %v1553
  %v2712 = vunpack.c.l.b16 %v1554
  %v2713 = vunpack.c.l.b16 %v1555
  %v2714 = vunpack.c.l.b16 %v1556
  %v2715 = vunpack.c.l.b16 %v1557
  %v2716 = vunpack.c.l.b16 %v1558
  %v2717 = vunpack.c.l.b16 %v1559
  %v2718 = vpack.c.b16 %v2703, %v2702
  %v2719 = vpack.c.b16 %v2705, %v2704
  %v2720 = vpack.c.b16 %v2707, %v2706
  %v2721 = vpack.c.b16 %v2709, %v2708
  %v2722 = vpack.c.b16 %v2711, %v2710
  %v2723 = vpack.c.b16 %v2713, %v2712
  %v2724 = vpack.c.b16 %v2715, %v2714
  %v2725 = vpack.c.b16 %v2717, %v2716
  %2734 = vmatprep.subr.bf16.mxu0 0
  %2735 = vmatpush1.bf16.msra.mxu0 %v2718
  %2736 = vmatprep.subr.bf16.mxu0 0
  %2737 = vmatpush1.bf16.msra.mxu0 %v2719
  %2738 = vmatprep.subr.bf16.mxu0 0
  %2739 = vmatpush1.bf16.msra.mxu0 %v2720
  %2740 = vmatprep.subr.bf16.mxu0 0
  %2741 = vmatpush1.bf16.msra.mxu0 %v2721
  %2742 = vmatprep.subr.bf16.mxu0 0
  %2743 = vmatpush1.bf16.msra.mxu0 %v2722
  %2744 = vmatprep.subr.bf16.mxu0 0
  %2745 = vmatpush1.bf16.msra.mxu0 %v2723
  %2746 = vmatprep.subr.bf16.mxu0 0
  %2747 = vmatpush1.bf16.msra.mxu0 %v2724
  %2748 = vmatprep.subr.bf16.mxu0 0
  %2749 = vmatpush1.bf16.msra.mxu0 %v2725
  %2750 = vmatprep.subr.bf16.mxu0 0
  %2751 = vmatpush1.bf16.msra.mxu0 0
  %2752 = vmatprep.subr.bf16.mxu0 0
  %2753 = vmatpush1.bf16.msra.mxu0 0
  %2754 = vmatprep.subr.bf16.mxu0 0
  %2755 = vmatpush1.bf16.msra.mxu0 0
  %2756 = vmatprep.subr.bf16.mxu0 0
  %2757 = vmatpush1.bf16.msra.mxu0 0
  %2758 = vmatprep.subr.bf16.mxu0 0
  %2759 = vmatpush1.bf16.msra.mxu0 0
  %2760 = vmatprep.subr.bf16.mxu0 0
  %2761 = vmatpush1.bf16.msra.mxu0 0
  %2762 = vmatprep.subr.bf16.mxu0 0
  %2763 = vmatpush1.bf16.msra.mxu0 0
  %2764 = vmatprep.subr.bf16.mxu0 0
  %2765 = vmatpush1.bf16.msra.mxu0 0
  %2766 = vmatprep.mubr.bf16.mxu0 0
  %2767 = vmatmul.mubr.bf16.gmra.mrb[0].mxu0 %v2679
  %v2768 = vpop.f32.mrb[0].mxu0
  %v2769 = vadd.f32 %v2685, %v2768
  %v2770 = vpop.f32.mrb[0].mxu0
  %v2771 = vpop.f32.mrb[0].mxu0
  %v2772 = vadd.f32 %v2685, %v2771
  %v2773 = vpop.f32.mrb[0].mxu0
  %2774 = vmatprep.mubr.bf16.mxu0 0
  %2775 = vmatmul.mubr.bf16.gmra.mrb[0].mxu0 %v2680
  %v2776 = vpop.f32.mrb[0].mxu0
  %v2777 = vadd.f32 %v2685, %v2776
  %v2778 = vpop.f32.mrb[0].mxu0
  %v2779 = vpop.f32.mrb[0].mxu0
  %v2780 = vadd.f32 %v2685, %v2779
  %v2781 = vpop.f32.mrb[0].mxu0
  %2782 = vmatprep.mubr.bf16.mxu0 0
  %2783 = vmatmul.mubr.bf16.gmra.mrb[0].mxu0 %v2681
  %v2784 = vpop.f32.mrb[0].mxu0
  %v2785 = vadd.f32 %v2685, %v2784
  %v2786 = vpop.f32.mrb[0].mxu0
  %v2787 = vpop.f32.mrb[0].mxu0
  %v2788 = vadd.f32 %v2685, %v2787
  %v2789 = vpop.f32.mrb[0].mxu0
  %2790 = vdwg.mxu0
  %v2791 = vadd.f32 %v2538, %v2769
  %v2792 = vadd.f32 %v2539, %v2772
  %v2793 = vadd.f32 %v2540, %v2777
  %v2794 = vadd.f32 %v2541, %v2780
  %v2795 = vadd.f32 %v2542, %v2785
  %v2796 = vadd.f32 %v2543, %v2788
  %v2797 = vsel %vm83, %v2791, 0.0
  %2798 = vadd.xlane.f32.xlu0 %v2797
  %v2799 = vpop.xlane.xlu0 %2798
  %v2800 = vsel %vm83, %v2792, 0.0
  %2801 = vadd.xlane.f32.xlu0 %v2800
  %v2802 = vpop.xlane.xlu0 %2801
  %v2803 = vsel %vm83, %v2793, 0.0
  %2804 = vadd.xlane.f32.xlu0 %v2803
  %v2805 = vpop.xlane.xlu0 %2804
  %v2806 = vsel %vm83, %v2794, 0.0
  %2807 = vadd.xlane.f32.xlu0 %v2806
  %v2808 = vpop.xlane.xlu0 %2807
  %v2809 = vsel %vm83, %v2795, 0.0
  %2810 = vadd.xlane.f32.xlu0 %v2809
  %v2811 = vpop.xlane.xlu0 %2810
  %v2812 = vsel %vm83, %v2796, 0.0
  %2813 = vadd.xlane.f32.xlu0 %v2812
  %v2814 = vpop.xlane.xlu0 %2813
  %v2815 = vmul.f32 %v2799, %v102
  %v2816 = vmul.f32 %v2802, %v102
  %v2817 = vmul.f32 %v2805, %v102
  %v2818 = vmul.f32 %v2808, %v102
  %v2819 = vmul.f32 %v2811, %v102
  %v2820 = vmul.f32 %v2814, %v102
  %v2821 = vsub.f32 %v2791, %v2815
  %v2822 = vsub.f32 %v2792, %v2816
  %v2823 = vsub.f32 %v2793, %v2817
  %v2824 = vsub.f32 %v2794, %v2818
  %v2825 = vsub.f32 %v2795, %v2819
  %v2826 = vsub.f32 %v2796, %v2820
  %v2827 = vmul.f32 %v2821, %v2821
  %v2828 = vmul.f32 %v2822, %v2822
  %v2829 = vmul.f32 %v2823, %v2823
  %v2830 = vmul.f32 %v2824, %v2824
  %v2831 = vmul.f32 %v2825, %v2825
  %v2832 = vmul.f32 %v2826, %v2826
  %v2833 = vsel %vm83, %v2827, 0.0
  %2834 = vadd.xlane.f32.xlu0 %v2833
  %v2835 = vpop.xlane.xlu0 %2834
  %v2836 = vsel %vm83, %v2828, 0.0
  %2837 = vadd.xlane.f32.xlu0 %v2836
  %v2838 = vpop.xlane.xlu0 %2837
  %v2839 = vsel %vm83, %v2829, 0.0
  %2840 = vadd.xlane.f32.xlu0 %v2839
  %v2841 = vpop.xlane.xlu0 %2840
  %v2842 = vsel %vm83, %v2830, 0.0
  %2843 = vadd.xlane.f32.xlu0 %v2842
  %v2844 = vpop.xlane.xlu0 %2843
  %v2845 = vsel %vm83, %v2831, 0.0
  %2846 = vadd.xlane.f32.xlu0 %v2845
  %v2847 = vpop.xlane.xlu0 %2846
  %v2848 = vsel %vm83, %v2832, 0.0
  %2849 = vadd.xlane.f32.xlu0 %v2848
  %v2850 = vpop.xlane.xlu0 %2849
  %v2851 = vmul.f32 %v2835, %v102
  %v2852 = vmul.f32 %v2838, %v102
  %v2853 = vmul.f32 %v2841, %v102
  %v2854 = vmul.f32 %v2844, %v102
  %v2855 = vmul.f32 %v2847, %v102
  %v2856 = vmul.f32 %v2850, %v102
  %v2857 = vadd.f32 %v2851, 1e-12
  %v2858 = vadd.f32 %v2852, 1e-12
  %v2859 = vadd.f32 %v2853, 1e-12
  %v2860 = vadd.f32 %v2854, 1e-12
  %v2861 = vadd.f32 %v2855, 1e-12
  %v2862 = vadd.f32 %v2856, 1e-12
  %v2863 = vrsqrt.pop %v2857
  %v2864 = vrsqrt.pop %v2858
  %v2865 = vrsqrt.pop %v2859
  %v2866 = vrsqrt.pop %v2860
  %v2867 = vrsqrt.pop %v2861
  %v2868 = vrsqrt.pop %v2862
  %v2869 = vmul.f32 %v2821, %v2863
  %v2870 = vmul.f32 %v2822, %v2864
  %v2871 = vmul.f32 %v2823, %v2865
  %v2872 = vmul.f32 %v2824, %v2866
  %v2873 = vmul.f32 %v2825, %v2867
  %v2874 = vmul.f32 %v2826, %v2868
  %v2875 = vlaneseq
  %v2876 = vshrl.u32 %v2875, 7
  %v2877 = vsub.s32 6, %v2876
  %v2878 = vrot.slane %v1561, %v2877
  %v2879 = vmul.f32 %v2869, %v2878
  %v2880 = vmul.f32 %v2870, %v2878
  %v2881 = vmul.f32 %v2871, %v2878
  %v2882 = vmul.f32 %v2872, %v2878
  %v2883 = vmul.f32 %v2873, %v2878
  %v2884 = vmul.f32 %v2874, %v2878
  %v2885 = vlaneseq
  %v2886 = vshrl.u32 %v2885, 7
  %v2887 = vsub.s32 7, %v2886
  %v2888 = vrot.slane %v1561, %v2887
  %v2889 = vadd.f32 %v2879, %v2888
  %v2890 = vadd.f32 %v2880, %v2888
  %v2891 = vadd.f32 %v2881, %v2888
  %v2892 = vadd.f32 %v2882, %v2888
  %v2893 = vadd.f32 %v2883, %v2888
  %v2894 = vadd.f32 %v2884, %v2888
  %v2896 = vsel %vm511, %v80, 0
  %v2899 = vsel %vm511, %v81, 0
  %2901 = vmatprep.subr.mxu0 0.0
  %2902 = vmatpush1.msra.mxu0 %v2889
  %2903 = vmatprep.subr.mxu0 0.0
  %2904 = vmatpush1.msra.mxu0 %v2890
  %2905 = vmatprep.subr.mxu0 0.0
  %2906 = vmatpush1.msra.mxu0 %v2891
  %2907 = vmatprep.subr.mxu0 0.0
  %2908 = vmatpush1.msra.mxu0 %v2892
  %2909 = vmatprep.subr.mxu0 0.0
  %2910 = vmatpush1.msra.mxu0 %v2893
  %2911 = vmatprep.subr.mxu0 0.0
  %2912 = vmatpush1.msra.mxu0 %v2894
  %2913 = vmatprep.subr.mxu0 0.0
  %2914 = vmatpush1.msra.mxu0 0.0
  %2915 = vmatprep.subr.mxu0 0.0
  %2916 = vmatpush1.msra.mxu0 0.0
  %2917 = vmatprep.subr.mxu0 0.0
  %2918 = vmatpush1.msra.mxu0 0.0
  %2919 = vmatprep.subr.mxu0 0.0
  %2920 = vmatpush1.msra.mxu0 0.0
  %2921 = vmatprep.subr.mxu0 0.0
  %2922 = vmatpush1.msra.mxu0 0.0
  %2923 = vmatprep.subr.mxu0 0.0
  %2924 = vmatpush1.msra.mxu0 0.0
  %2925 = vmatprep.subr.mxu0 0.0
  %2926 = vmatpush1.msra.mxu0 0.0
  %2927 = vmatprep.subr.mxu0 0.0
  %2928 = vmatpush1.msra.mxu0 0.0
  %2929 = vmatprep.subr.mxu0 0.0
  %2930 = vmatpush1.msra.mxu0 0.0
  %2931 = vmatprep.subr.mxu0 0.0
  %2932 = vmatpush1.msra.mxu0 0.0
  %2933 = vmatprep.subr.mxu0 0.0
  %2934 = vmatpush1.msra.mxu0 0.0
  %2935 = vmatprep.subr.mxu0 0.0
  %2936 = vmatpush1.msra.mxu0 0.0
  %2937 = vmatprep.subr.mxu0 0.0
  %2938 = vmatpush1.msra.mxu0 0.0
  %2939 = vmatprep.subr.mxu0 0.0
  %2940 = vmatpush1.msra.mxu0 0.0
  %2941 = vmatprep.subr.mxu0 0.0
  %2942 = vmatpush1.msra.mxu0 0.0
  %2943 = vmatprep.subr.mxu0 0.0
  %2944 = vmatpush1.msra.mxu0 0.0
  %2945 = vmatprep.subr.mxu0 0.0
  %2946 = vmatpush1.msra.mxu0 0.0
  %2947 = vmatprep.subr.mxu0 0.0
  %2948 = vmatpush1.msra.mxu0 0.0
  %2949 = vmatprep.subr.mxu0 0.0
  %2950 = vmatpush1.msra.mxu0 0.0
  %2951 = vmatprep.subr.mxu0 0.0
  %2952 = vmatpush1.msra.mxu0 0.0
  %2953 = vmatprep.subr.mxu0 0.0
  %2954 = vmatpush1.msra.mxu0 0.0
  %2955 = vmatprep.subr.mxu0 0.0
  %2956 = vmatpush1.msra.mxu0 0.0
  %2957 = vmatprep.subr.mxu0 0.0
  %2958 = vmatpush1.msra.mxu0 0.0
  %2959 = vmatprep.subr.mxu0 0.0
  %2960 = vmatpush1.msra.mxu0 0.0
  %2961 = vmatprep.subr.mxu0 0.0
  %2962 = vmatpush1.msra.mxu0 0.0
  %2963 = vmatprep.subr.mxu0 0.0
  %2964 = vmatpush1.msra.mxu0 0.0
  %2965 = vmatprep.mubr.f32.mxu0 0.0
  %2966 = vmatmul.mubr.f32.gmra.mrb[0].mxu0 %v2896
  %v2967 = vpop.f32.mrb[0].mxu0
  %v2968 = vadd.f32 0.0, %v2967
  %v2969 = vpop.f32.mrb[0].mxu0
  %2970 = vmatprep.mubr.f32.mxu0 0.0
  %2971 = vmatmul.mubr.f32.gmra.mrb[0].mxu0 %v2899
  %v2972 = vpop.f32.mrb[0].mxu0
  %v2973 = vadd.f32 0.0, %v2972
  %v2974 = vpop.f32.mrb[0].mxu0
  %2975 = vdwg.mxu0
  %v2976 = vld [vmem:[%s5] sm:$0xff]
  %v2977 = vld [vmem:[%s5 + $0x8] sm:$0xff]
  %v2978 = vld [vmem:[%s5 + $0x10] sm:$0xff]
  %v2979 = vld [vmem:[%s5 + $0x18] sm:$0xff]
  %v2980 = vld [vmem:[%s5 + $0x20] sm:$0x1]
  %v2982 = vsel %vm83, %v2968, 0
  %v2985 = vsel %vm83, %v2973, 0
  %2987 = vmatprep.subr.mxu0 0.0
  %2988 = vmatpush1.msra.mxu0 %v2976
  %2989 = vmatprep.subr.mxu0 0.0
  %2990 = vmatpush1.msra.mxu0 %v2977
  %2991 = vmatprep.subr.mxu0 0.0
  %2992 = vmatpush1.msra.mxu0 %v2978
  %2993 = vmatprep.subr.mxu0 0.0
  %2994 = vmatpush1.msra.mxu0 %v2979
  %2995 = vmatprep.subr.mxu0 0.0
  %2996 = vmatpush1.msra.mxu0 0.0
  %2997 = vmatprep.subr.mxu0 0.0
  %2998 = vmatpush1.msra.mxu0 0.0
  %2999 = vmatprep.subr.mxu0 0.0
  %3000 = vmatpush1.msra.mxu0 0.0
  %3001 = vmatprep.subr.mxu0 0.0
  %3002 = vmatpush1.msra.mxu0 0.0
  %3003 = vmatprep.subr.mxu0 0.0
  %3004 = vmatpush1.msra.mxu0 0.0
  %3005 = vmatprep.subr.mxu0 0.0
  %3006 = vmatpush1.msra.mxu0 0.0
  %3007 = vmatprep.subr.mxu0 0.0
  %3008 = vmatpush1.msra.mxu0 0.0
  %3009 = vmatprep.subr.mxu0 0.0
  %3010 = vmatpush1.msra.mxu0 0.0
  %3011 = vmatprep.subr.mxu0 0.0
  %3012 = vmatpush1.msra.mxu0 0.0
  %3013 = vmatprep.subr.mxu0 0.0
  %3014 = vmatpush1.msra.mxu0 0.0
  %3015 = vmatprep.subr.mxu0 0.0
  %3016 = vmatpush1.msra.mxu0 0.0
  %3017 = vmatprep.subr.mxu0 0.0
  %3018 = vmatpush1.msra.mxu0 0.0
  %3019 = vmatprep.subr.mxu0 0.0
  %3020 = vmatpush1.msra.mxu0 0.0
  %3021 = vmatprep.subr.mxu0 0.0
  %3022 = vmatpush1.msra.mxu0 0.0
  %3023 = vmatprep.subr.mxu0 0.0
  %3024 = vmatpush1.msra.mxu0 0.0
  %3025 = vmatprep.subr.mxu0 0.0
  %3026 = vmatpush1.msra.mxu0 0.0
  %3027 = vmatprep.subr.mxu0 0.0
  %3028 = vmatpush1.msra.mxu0 0.0
  %3029 = vmatprep.subr.mxu0 0.0
  %3030 = vmatpush1.msra.mxu0 0.0
  %3031 = vmatprep.subr.mxu0 0.0
  %3032 = vmatpush1.msra.mxu0 0.0
  %3033 = vmatprep.subr.mxu0 0.0
  %3034 = vmatpush1.msra.mxu0 0.0
  %3035 = vmatprep.subr.mxu0 0.0
  %3036 = vmatpush1.msra.mxu0 0.0
  %3037 = vmatprep.subr.mxu0 0.0
  %3038 = vmatpush1.msra.mxu0 0.0
  %3039 = vmatprep.subr.mxu0 0.0
  %3040 = vmatpush1.msra.mxu0 0.0
  %3041 = vmatprep.subr.mxu0 0.0
  %3042 = vmatpush1.msra.mxu0 0.0
  %3043 = vmatprep.subr.mxu0 0.0
  %3044 = vmatpush1.msra.mxu0 0.0
  %3045 = vmatprep.subr.mxu0 0.0
  %3046 = vmatpush1.msra.mxu0 0.0
  %3047 = vmatprep.subr.mxu0 0.0
  %3048 = vmatpush1.msra.mxu0 0.0
  %3049 = vmatprep.subr.mxu0 0.0
  %3050 = vmatpush1.msra.mxu0 0.0
  %3051 = vmatprep.mubr.f32.mxu0 0.0
  %3052 = vmatmul.mubr.f32.gmra.mrb[0].mxu0 %v2982
  %v3053 = vpop.f32.mrb[0].mxu0
  %v3054 = vadd.f32 0.0, %v3053
  %v3055 = vpop.f32.mrb[0].mxu0
  %3056 = vmatprep.mubr.f32.mxu0 0.0
  %3057 = vmatmul.mubr.f32.gmra.mrb[0].mxu0 %v2985
  %v3058 = vpop.f32.mrb[0].mxu0
  %v3059 = vadd.f32 0.0, %v3058
  %v3060 = vpop.f32.mrb[0].mxu0
  %3061 = vdwg.mxu0
  %3063 = vrot.lane.b32.xlu0 %v3059, 126
  %v3064 = vpop.permute.xlu0 %3063
  %v3066 = vadd.f32 %v3054, %v3064
  %v3067 = vlaneseq
  %v3068 = vshrl.u32 %v3067, 7
  %v3069 = vsub.s32 0, %v3068
  %v3070 = vrot.slane %v2980, %v3069
  %v3071 = vadd.f32 %v3066, %v3070
  %vm3072 = vcmask 15360
  %v3073 = vsel %vm3072, %v3071, -inf
  %3074 = vmax.xlane.f32.xlu0 %v3073
  %v3075 = vpop.xlane.xlu0 %3074
  %v3076 = vsub.f32 %v3071, %v3075
  %v3077 = vmul.f32 %v3076, 1.442695
  %v3078 = vpow.pop %v3077
  %v3079 = vsel %vm3072, %v3078, 0.0
  %3080 = vadd.xlane.f32.xlu0 %v3079
  %v3081 = vpop.xlane.xlu0 %3080
  %v3082 = vlog2.pop %v3081
  %v3083 = vmul.f32 %v3082, 0.6931472
  %v3084 = vadd.f32 %v3075, %v3083
  %v3085 = vsub.f32 %v3071, %v3084
  %vm3086 = vcmp.eq.f32.partialorder %v82, 1.0
  %v3087 = vsel %vm3086, 1, 0
  %v3088 = vcvt.s32.f32 %v3087
  %vm3089 = vcmp.eq.f32.partialorder %v82, 0.0
  %v3090 = vsel %vm3089, 1, 0
  %v3091 = vcvt.s32.f32 %v3090
  %3093 = vrot.lane.b32.xlu0 %v3085, 127
  %v3094 = vpop.permute.xlu0 %3093
  %v3096 = vsel %vm3086, %v3094, %v3085
  %vm3097 = vcmask 7168
  %v3098 = vsel %vm3097, %v3088, 0.0
  %3099 = vadd.xlane.f32.xlu0 %v3098
  %v3100 = vpop.xlane.xlu0 %3099
  %v3101 = vrot.slane %v3100, 4
  %v3102 = vadd.f32 %v3100, %v3101
  %v3103 = vrot.slane %v3102, 2
  %v3104 = vadd.f32 %v3102, %v3103
  %v3105 = vrot.slane %v3104, 1
  %v3106 = vadd.f32 %v3104, %v3105
  %s3107 = vtos %v3106
  %v3108 = vstv %s3107
  %v3109 = vmax.f32 %v3108, 1.0
  %v3110 = vsel %vm3097, %v3091, 0.0
  %3111 = vadd.xlane.f32.xlu0 %v3110
  %v3112 = vpop.xlane.xlu0 %3111
  %v3113 = vrot.slane %v3112, 4
  %v3114 = vadd.f32 %v3112, %v3113
  %v3115 = vrot.slane %v3114, 2
  %v3116 = vadd.f32 %v3114, %v3115
  %v3117 = vrot.slane %v3116, 1
  %v3118 = vadd.f32 %v3116, %v3117
  %s3119 = vtos %v3118
  %v3120 = vstv %s3119
  %v3121 = vmax.f32 %v3120, 1.0
  %v3122 = vmul.f32 %v3096, %v3088
  %v3123 = vsel %vm3097, %v3122, 0.0
  %3124 = vadd.xlane.f32.xlu0 %v3123
  %v3125 = vpop.xlane.xlu0 %3124
  %v3126 = vrot.slane %v3125, 4
  %v3127 = vadd.f32 %v3125, %v3126
  %v3128 = vrot.slane %v3127, 2
  %v3129 = vadd.f32 %v3127, %v3128
  %v3130 = vrot.slane %v3129, 1
  %v3131 = vadd.f32 %v3129, %v3130
  %s3132 = vtos %v3131
  %v3133 = vstv %s3132
  %v3134 = vrcp.pop %v3109
  %v3135 = vmul.f32 %v3133, %v3134
  %v3136 = vsub.f32 0.0, %v3135
  %v3137 = vmul.f32 %v3096, %v3091
  %v3138 = vsel %vm3097, %v3137, 0.0
  %3139 = vadd.xlane.f32.xlu0 %v3138
  %v3140 = vpop.xlane.xlu0 %3139
  %v3141 = vrot.slane %v3140, 4
  %v3142 = vadd.f32 %v3140, %v3141
  %v3143 = vrot.slane %v3142, 2
  %v3144 = vadd.f32 %v3142, %v3143
  %v3145 = vrot.slane %v3144, 1
  %v3146 = vadd.f32 %v3144, %v3145
  %s3147 = vtos %v3146
  %v3148 = vstv %s3147
  %v3149 = vrcp.pop %v3121
  %v3150 = vmul.f32 %v3148, %v3149
  %v3151 = vsub.f32 %v3136, %v3150
  %v3152 = vmul.f32 %v3151, 0.5
  %3153 = vrot.lane.b32.xlu0 %v3085, 1
  %v3154 = vpop.permute.xlu0 %3153
  %vm3156 = vcmp.gt.f32.partialorder %v3085, %v3154
  %v3157 = vsel %vm3156, 1.0, 0.0
  %3159 = vrot.lane.b32.xlu0 %v82, 1
  %v3160 = vpop.permute.xlu0 %3159
  %vm3162 = vcmp.eq.f32.partialorder %v3157, %v3160
  %v3163 = vsel %vm3162, 1, 0
  %v3164 = vcvt.s32.f32 %v3163
  %3166 = vrot.lane.b32.xlu0 %v3164, 127
  %v3167 = vpop.permute.xlu0 %3166
  %v3169 = vsel %vm3097, %v3167, 0.0
  %3170 = vadd.xlane.f32.xlu0 %v3169
  %v3171 = vpop.xlane.xlu0 %3170
  %v3172 = vrot.slane %v3171, 4
  %v3173 = vadd.f32 %v3171, %v3172
  %v3174 = vrot.slane %v3173, 2
  %v3175 = vadd.f32 %v3173, %v3174
  %v3176 = vrot.slane %v3175, 1
  %v3177 = vadd.f32 %v3175, %v3176
  %s3178 = vtos %v3177
  %v3179 = vstv %s3178
  %v3180 = vmul.f32 %v3179, 0.16666667
  %vm3181 = vcmask 0
  %3182 = vst.msk [vmem:[%s6] sm:$0x1] %vm3181, %v3152
  %vm3183 = vcmask 8200
  %3184 = vst.msk [vmem:[%s6] sm:$0x1] %vm3183, %v3180
  // Predicated region
  $region26: #{kgbert_down_triplecls_forward.1} parent=0 // pred_check
    _
  $region27: #{kgbert_down_triplecls_forward.1} parent=0 // pred_check_branch
    %3186 = sbr.rel (0) target = $region29
  $region28: #{kgbert_down_triplecls_forward.1} parent=0 // pred_region
    _
  $region29: #{kgbert_down_triplecls_forward.1} parent=0 // pred_fallthru
    _
  // Predicated region
  $region30: #{kgbert_down_triplecls_forward.1} parent=0 // pred_check
    _
  $region31: #{kgbert_down_triplecls_forward.1} parent=0 // pred_check_branch
    %3188 = sbr.rel (0) target = $region33
  $region32: #{kgbert_down_triplecls_forward.1} parent=0 // pred_region
    _
  $region33: #{kgbert_down_triplecls_forward.1} parent=0 // pred_fallthru
    _

</llo_original>
